<compile_context>
chip_gen: v6e
topology: v6e:2x2x1
jax: 0.10.0
libtpu: 0.0.40
codegen_flags: <defaults>
</compile_context>

<pallas_src>
import functools

import jax
import jax.numpy as jnp
from jax.experimental import pallas as pl
from jax.experimental.pallas import tpu as pltpu


def block_kernel(
    x_ref,                  # (N, C)   f32   full sequence row for this batch element
    g1_ref, b1_ref,         # (1, C)   f32   LayerNorm1 gamma / beta
    wq_ref, bq_ref,         # (C, C) bf16, (1, C) f32   query projection
    wk_ref, bk_ref,         # (C, C) bf16, (1, C) f32   key projection
    wv_ref, bv_ref,         # (C, C) bf16, (1, C) f32   value projection
    wo_ref, bo_ref,         # (C, C) bf16, (1, C) f32   output projection
    g2_ref, b2_ref,         # (1, C)   f32   LayerNorm2 gamma / beta
    w1_ref, bf1_ref,        # (C, M) bf16, (1, M) f32   fc1
    w2_ref, bf2_ref,        # (M, C) bf16, (1, C) f32   fc2
    o_ref,                  # (TN, C)  output tile
    k_sc, v_sc,             # (H, N, Dh) bf16 VMEM scratch, persists across q tiles
    *,
    heads: int,
    block_q: int,
    eps: float = 1e-5,
):
    cdt = jnp.bfloat16
    N, C = x_ref.shape
    TN = block_q
    Dh = C // heads
    scale = Dh ** -0.5
    qi = pl.program_id(1)

    def layernorm(z_f32, g_ref, b_ref):
        mu = jnp.mean(z_f32, axis=-1, keepdims=True)
        var = jnp.mean(jnp.square(z_f32 - mu), axis=-1, keepdims=True)
        return (z_f32 - mu) * jax.lax.rsqrt(var + eps) * g_ref[0] + b_ref[0]

    # ---- K / V: computed once per batch row (first query tile only) with
    #      dense C-wide matmuls, kept resident in VMEM scratch for all tiles.
    @pl.when(qi == 0)
    def _():
        xn_full = layernorm(x_ref[...].astype(jnp.float32),
                            g1_ref, b1_ref).astype(cdt)                 # (N, C)
        k_full = jnp.dot(xn_full, wk_ref[...],
                         preferred_element_type=jnp.float32) + bk_ref[0]  # (N, C)
        v_full = jnp.dot(xn_full, wv_ref[...],
                         preferred_element_type=jnp.float32) + bv_ref[0]  # (N, C)
        k_full = k_full.astype(cdt)
        v_full = v_full.astype(cdt)
        for h in range(heads):                         # static lane slices -> head split
            k_sc[h] = k_full[:, h * Dh:(h + 1) * Dh]
            v_sc[h] = v_full[:, h * Dh:(h + 1) * Dh]

    # ---- query tile (also the residual, kept in f32) ----
    row0 = pl.multiple_of(qi * TN, TN)
    xq = x_ref[pl.ds(row0, TN), :].astype(jnp.float32)                   # (TN, C)
    xnq = layernorm(xq, g1_ref, b1_ref).astype(cdt)

    # dense, lane-wide Q projection (output width = C), then split heads
    q_full = jnp.dot(xnq, wq_ref[...],
                     preferred_element_type=jnp.float32) + bq_ref[0]      # (TN, C)
    q_full = (q_full * scale).astype(cdt)
    q = jnp.stack([q_full[:, h * Dh:(h + 1) * Dh] for h in range(heads)],
                  axis=0)                                                 # (H, TN, Dh)

    # ---- head-batched attention (dense scores; fine for moderate N) ----
    # TODO(synk): for large N on v7x (64 MiB VMEM) switch to a flash-style
    # online-softmax loop over K/V tiles instead of the dense (H, TN, N) score.
    s = jnp.einsum('hqd,hkd->hqk', q, k_sc[...],
                   preferred_element_type=jnp.float32)                    # (H, TN, N)
    s = s - jnp.max(s, axis=-1, keepdims=True)
    p = jnp.exp(s)
    p = p * pl.reciprocal(jnp.sum(p, axis=-1, keepdims=True), approx=True)
    attn = jnp.einsum('hqk,hkd->hqd', p.astype(cdt), v_sc[...],
                      preferred_element_type=jnp.float32)                  # (H, TN, Dh)

    # ---- merge heads (lane concat) and one dense C-wide output projection ----
    y = jnp.concatenate([attn[h] for h in range(heads)], axis=-1)          # (TN, C)
    y = jnp.dot(y.astype(cdt), wo_ref[...],
                preferred_element_type=jnp.float32) + bo_ref[0]

    x1 = xq + y                                                            # residual 1 (f32)

    # ---- LayerNorm2 + MLP (fc1 -> tanh GELU (EUP) -> fc2) + residual ----
    xn2 = layernorm(x1, g2_ref, b2_ref).astype(cdt)
    h1 = jnp.dot(xn2, w1_ref[...],
                 preferred_element_type=jnp.float32) + bf1_ref[0]
    h1 = jax.nn.gelu(h1, approximate=True).astype(cdt)
    h2 = jnp.dot(h1, w2_ref[...],
                 preferred_element_type=jnp.float32) + bf2_ref[0]

    o_ref[...] = (x1 + h2).astype(o_ref.dtype)


def block_forward(x, params, *, heads, q_block=128, eps=1e-5):
    """x: (B, N, C) float32.  params: dict of weights (see init_params)."""
    B, N, C = x.shape
    assert C % heads == 0
    Dh = C // heads
    M = params["w1"].shape[1]

    # Query-tile size: multiple of 8 (sublane) that divides N, capped at q_block.
    # (v6e/v5e: q_block up to 256 is fine with 128 MiB VMEM; v7x prefers 128.)
    TN = min(q_block, N)
    if N % TN != 0 or (TN != N and TN % 8 != 0):
        TN = N
    nq = N // TN

    cdt = jnp.bfloat16
    f32 = jnp.float32

    # Split the fused qkv weight into three dense C-wide projections; heads are
    # split after the matmuls (never with Dh-wide matmuls).
    wqkv, bqkv = params["wqkv"], params["bqkv"]
    wq, wk, wv = (wqkv[:, :C].astype(cdt), wqkv[:, C:2 * C].astype(cdt),
                  wqkv[:, 2 * C:].astype(cdt))
    bq, bk, bv = (bqkv[:, :C].astype(f32), bqkv[:, C:2 * C].astype(f32),
                  bqkv[:, 2 * C:].astype(f32))

    kernel = functools.partial(block_kernel, heads=heads, block_q=TN, eps=eps)

    def rep(shape):  # grid-invariant, full-extent operand (not re-fetched)
        nd = len(shape)
        return pl.BlockSpec(shape, lambda b, qi: (0,) * nd)

    in_specs = [
        pl.BlockSpec((pl.Squeezed(), N, C), lambda b, qi: (b, 0, 0)),   # x (full row)
        rep((1, C)), rep((1, C)),                                       # ln1
        rep((C, C)), rep((1, C)),                                       # wq / bq
        rep((C, C)), rep((1, C)),                                       # wk / bk
        rep((C, C)), rep((1, C)),                                       # wv / bv
        rep((C, C)), rep((1, C)),                                       # wo / bo
        rep((1, C)), rep((1, C)),                                       # ln2
        rep((C, M)), rep((1, M)),                                       # fc1
        rep((M, C)), rep((1, C)),                                       # fc2
    ]
    # TODO(synk): on v7x add pipeline_mode=pl.Buffered(1) to the weight specs
    # (single-buffer grid-invariant weights) to halve their VMEM footprint.

    return pl.pallas_call(
        kernel,
        out_shape=jax.ShapeDtypeStruct((B, N, C), x.dtype),
        grid_spec=pltpu.PrefetchScalarGridSpec(
            num_scalar_prefetch=0,
            grid=(B, nq),
            in_specs=in_specs,
            out_specs=pl.BlockSpec((pl.Squeezed(), TN, C),
                                   lambda b, qi: (b, qi, 0)),
            scratch_shapes=[pltpu.VMEM((heads, N, Dh), cdt),   # K, persists over qi
                            pltpu.VMEM((heads, N, Dh), cdt)],  # V, persists over qi
        ),
        compiler_params=pltpu.CompilerParams(
            # Batch axis shards across TensorCores (megacore); the query-tile
            # axis is sequential because K/V scratch persists across it.
            dimension_semantics=("parallel", "arbitrary"),
            vmem_limit_bytes=48 * 1024 * 1024,
        ),
    )(
        x.astype(f32),
        params["ln1_g"].astype(f32), params["ln1_b"].astype(f32),
        wq, bq, wk, bk, wv, bv,
        params["wproj"].astype(cdt), params["bproj"].astype(f32),
        params["ln2_g"].astype(f32), params["ln2_b"].astype(f32),
        params["w1"].astype(cdt), params["b1"].astype(f32),
        params["w2"].astype(cdt), params["b2"].astype(f32),
    )


def init_params(key, dim, mlp_dim):
    """Deterministic synthetic parameters (trunc-normal-ish: normal * 0.02)."""
    ks = jax.random.split(key, 8)
    n = lambda k, shape: (0.02 * jax.random.normal(k, shape)).astype(jnp.float32)
    return {
        "ln1_g": jnp.ones((1, dim), jnp.float32),
        "ln1_b": jnp.zeros((1, dim), jnp.float32),
        # Linear weights stored pre-transposed: y = x @ W + b
        "wqkv": n(ks[0], (dim, 3 * dim)),
        "bqkv": n(ks[1], (1, 3 * dim)),
        "wproj": n(ks[2], (dim, dim)),
        "bproj": n(ks[3], (1, dim)),
        "ln2_g": jnp.ones((1, dim), jnp.float32),
        "ln2_b": jnp.zeros((1, dim), jnp.float32),
        "w1": n(ks[4], (dim, mlp_dim)),
        "b1": n(ks[5], (1, mlp_dim)),
        "w2": n(ks[6], (mlp_dim, dim)),
        "b2": n(ks[7], (1, dim)),
    }


def block_ref(x, p, *, heads):
    """Pure-JAX f32 reference mirroring the PyTorch forward (eval mode)."""
    B, N, C = x.shape
    Dh = C // heads

    def ln(z, g, b):
        mu = jnp.mean(z, -1, keepdims=True)
        var = jnp.mean((z - mu) ** 2, -1, keepdims=True)
        return (z - mu) / jnp.sqrt(var + 1e-5) * g + b

    xn = ln(x, p["ln1_g"][0], p["ln1_b"][0])
    qkv = xn @ p["wqkv"] + p["bqkv"][0]
    qkv = qkv.reshape(B, N, 3, heads, Dh).transpose(2, 0, 3, 1, 4)
    q, k, v = qkv[0], qkv[1], qkv[2]
    attn = jax.nn.softmax((q @ jnp.swapaxes(k, -2, -1)) * Dh ** -0.5, axis=-1)
    y = (attn @ v).transpose(0, 2, 1, 3).reshape(B, N, C)
    y = y @ p["wproj"] + p["bproj"][0]
    x = x + y
    h = ln(x, p["ln2_g"][0], p["ln2_b"][0]) @ p["w1"] + p["b1"][0]
    h = jax.nn.gelu(h, approximate=False) @ p["w2"] + p["b2"][0]
    return x + h


if __name__ == "__main__":
    # Small but lane-aligned shapes (C, M multiples of 128; two query tiles so
    # the persistent-K/V path with qi > 0 is exercised).
    B, N, C = 2, 128, 128
    heads, mlp_dim = 4, 256

    key = jax.random.PRNGKey(0)
    kx, kp = jax.random.split(key)
    x = jax.random.normal(kx, (B, N, C), dtype=jnp.float32)
    params = init_params(kp, C, mlp_dim)

    out = block_forward(x, params, heads=heads, q_block=64)  # grid = (2, 2)
    out = jax.block_until_ready(out)

    ref = block_ref(x, params, heads=heads)
    out_f32 = out.astype(jnp.float32)
    assert out.shape == (B, N, C)
    # bf16 matmul operands + tanh GELU + approx reciprocal => relaxed tolerance
    # vs. the exact-erf f32 reference.
    err = float(jnp.max(jnp.abs(out_f32 - ref)))
    assert jnp.allclose(out_f32, ref, atol=5e-2, rtol=5e-2), err

    print("KERNEL_OK")
</pallas_src>

<mosaic_0001>
module attributes {stable_mosaic.version = 11 : i64} {
  func.func @block_kernel(%arg0: i32, %arg1: i32, %arg2: memref<1x128x128xf32, #tpu.memory_space<vmem>>, %arg3: memref<1x128xf32, #tpu.memory_space<vmem>>, %arg4: memref<1x128xf32, #tpu.memory_space<vmem>>, %arg5: memref<128x128xbf16, #tpu.memory_space<vmem>>, %arg6: memref<1x128xf32, #tpu.memory_space<vmem>>, %arg7: memref<128x128xbf16, #tpu.memory_space<vmem>>, %arg8: memref<1x128xf32, #tpu.memory_space<vmem>>, %arg9: memref<128x128xbf16, #tpu.memory_space<vmem>>, %arg10: memref<1x128xf32, #tpu.memory_space<vmem>>, %arg11: memref<128x128xbf16, #tpu.memory_space<vmem>>, %arg12: memref<1x128xf32, #tpu.memory_space<vmem>>, %arg13: memref<1x128xf32, #tpu.memory_space<vmem>>, %arg14: memref<1x128xf32, #tpu.memory_space<vmem>>, %arg15: memref<128x256xbf16, #tpu.memory_space<vmem>>, %arg16: memref<1x256xf32, #tpu.memory_space<vmem>>, %arg17: memref<256x128xbf16, #tpu.memory_space<vmem>>, %arg18: memref<1x128xf32, #tpu.memory_space<vmem>>, %arg19: memref<1x64x128xf32, #tpu.memory_space<vmem>>, %arg20: memref<4x128x32xbf16, #tpu.memory_space<vmem>>, %arg21: memref<4x128x32xbf16, #tpu.memory_space<vmem>>) attributes {dimension_semantics = [#tpu.dimension_semantics<parallel>, #tpu.dimension_semantics<arbitrary>], iteration_bounds = array<i64: 2, 2>, scalar_prefetch = 0 : i64, scratch_operands = 2 : i64, tpu.core_type = #tpu.core_type<tc>, window_params = [{transform_indices = @transform_0, window_bounds = array<i64: 1, 128, 128>}, {pipeline_mode = #tpu.pipeline_mode<synchronous>, transform_indices = @transform_1, window_bounds = array<i64: 1, 128>}, {pipeline_mode = #tpu.pipeline_mode<synchronous>, transform_indices = @transform_2, window_bounds = array<i64: 1, 128>}, {pipeline_mode = #tpu.pipeline_mode<synchronous>, transform_indices = @transform_3, window_bounds = array<i64: 128, 128>}, {pipeline_mode = #tpu.pipeline_mode<synchronous>, transform_indices = @transform_4, window_bounds = array<i64: 1, 128>}, {pipeline_mode = #tpu.pipeline_mode<synchronous>, transform_indices = @transform_5, window_bounds = array<i64: 128, 128>}, {pipeline_mode = #tpu.pipeline_mode<synchronous>, transform_indices = @transform_6, window_bounds = array<i64: 1, 128>}, {pipeline_mode = #tpu.pipeline_mode<synchronous>, transform_indices = @transform_7, window_bounds = array<i64: 128, 128>}, {pipeline_mode = #tpu.pipeline_mode<synchronous>, transform_indices = @transform_8, window_bounds = array<i64: 1, 128>}, {pipeline_mode = #tpu.pipeline_mode<synchronous>, transform_indices = @transform_9, window_bounds = array<i64: 128, 128>}, {pipeline_mode = #tpu.pipeline_mode<synchronous>, transform_indices = @transform_10, window_bounds = array<i64: 1, 128>}, {pipeline_mode = #tpu.pipeline_mode<synchronous>, transform_indices = @transform_11, window_bounds = array<i64: 1, 128>}, {pipeline_mode = #tpu.pipeline_mode<synchronous>, transform_indices = @transform_12, window_bounds = array<i64: 1, 128>}, {pipeline_mode = #tpu.pipeline_mode<synchronous>, transform_indices = @transform_13, window_bounds = array<i64: 128, 256>}, {pipeline_mode = #tpu.pipeline_mode<synchronous>, transform_indices = @transform_14, window_bounds = array<i64: 1, 256>}, {pipeline_mode = #tpu.pipeline_mode<synchronous>, transform_indices = @transform_15, window_bounds = array<i64: 256, 128>}, {pipeline_mode = #tpu.pipeline_mode<synchronous>, transform_indices = @transform_16, window_bounds = array<i64: 1, 128>}, {transform_indices = @transform_17, window_bounds = array<i64: 1, 64, 128>}]} {
    %c0_i32 = arith.constant 0 : i32
    %0 = arith.cmpi eq, %arg1, %c0_i32 : i32
    %1 = arith.extui %0 : i1 to i32
    %c0_i32_0 = arith.constant 0 : i32
    %2 = arith.cmpi ne, %1, %c0_i32_0 : i32
    scf.if %2 {
      %c0_57 = arith.constant 0 : index
      %c0_58 = arith.constant 0 : index
      %c0_59 = arith.constant 0 : index
      %150 = vector.load %arg2[%c0_57, %c0_58, %c0_59] : memref<1x128x128xf32, #tpu.memory_space<vmem>>, vector<1x128x128xf32>
      %151 = vector.shape_cast %150 : vector<1x128x128xf32> to vector<128x128xf32>
      %cst_60 = arith.constant dense<0.000000e+00> : vector<128xf32>
      %152 = vector.multi_reduction <add>, %151, %cst_60 [1] : vector<128x128xf32> to vector<128xf32>
      %153 = vector.shape_cast %152 : vector<128xf32> to vector<128x1xf32>
      %cst_61 = arith.constant 1.280000e+02 : f32
      %154 = vector.broadcast %cst_61 : f32 to vector<128x1xf32>
      %155 = arith.divf %153, %154 : vector<128x1xf32>
      %156 = vector.broadcast %155 : vector<128x1xf32> to vector<128x128xf32>
      %157 = arith.subf %151, %156 : vector<128x128xf32>
      %158 = arith.mulf %157, %157 : vector<128x128xf32>
      %cst_62 = arith.constant dense<0.000000e+00> : vector<128xf32>
      %159 = vector.multi_reduction <add>, %158, %cst_62 [1] : vector<128x128xf32> to vector<128xf32>
      %160 = vector.shape_cast %159 : vector<128xf32> to vector<128x1xf32>
      %cst_63 = arith.constant 1.280000e+02 : f32
      %161 = vector.broadcast %cst_63 : f32 to vector<128x1xf32>
      %162 = arith.divf %160, %161 : vector<128x1xf32>
      %163 = vector.broadcast %155 : vector<128x1xf32> to vector<128x128xf32>
      %164 = arith.subf %151, %163 : vector<128x128xf32>
      %cst_64 = arith.constant 9.99999974E-6 : f32
      %165 = vector.broadcast %cst_64 : f32 to vector<128x1xf32>
      %166 = arith.addf %162, %165 : vector<128x1xf32>
      %167 = math.rsqrt %166 : vector<128x1xf32>
      %168 = vector.broadcast %167 : vector<128x1xf32> to vector<128x128xf32>
      %169 = arith.mulf %164, %168 : vector<128x128xf32>
      %c0_65 = arith.constant 0 : index
      %c0_66 = arith.constant 0 : index
      %170 = vector.load %arg3[%c0_65, %c0_66] : memref<1x128xf32, #tpu.memory_space<vmem>>, vector<1x128xf32>
      %171 = vector.shape_cast %170 : vector<1x128xf32> to vector<128xf32>
      %172 = vector.shape_cast %171 : vector<128xf32> to vector<1x128xf32>
      %173 = vector.broadcast %172 : vector<1x128xf32> to vector<128x128xf32>
      %174 = arith.mulf %169, %173 : vector<128x128xf32>
      %c0_67 = arith.constant 0 : index
      %c0_68 = arith.constant 0 : index
      %175 = vector.load %arg4[%c0_67, %c0_68] : memref<1x128xf32, #tpu.memory_space<vmem>>, vector<1x128xf32>
      %176 = vector.shape_cast %175 : vector<1x128xf32> to vector<128xf32>
      %177 = vector.shape_cast %176 : vector<128xf32> to vector<1x128xf32>
      %178 = vector.broadcast %177 : vector<1x128xf32> to vector<128x128xf32>
      %179 = arith.addf %174, %178 : vector<128x128xf32>
      %180 = arith.truncf %179 : vector<128x128xf32> to vector<128x128xbf16>
      %c0_69 = arith.constant 0 : index
      %c0_70 = arith.constant 0 : index
      %181 = vector.load %arg7[%c0_69, %c0_70] : memref<128x128xbf16, #tpu.memory_space<vmem>>, vector<128x128xbf16>
      %cst_71 = arith.constant dense<0.000000e+00> : vector<128x128xf32>
      %182 = tpu.matmul %180, %181, %cst_71 {dimension_numbers = #tpu.dot_dimension_numbers<[1], [0], [0], [1], [0, 0, 1, 1], [], []>} : vector<128x128xbf16>, vector<128x128xbf16>, vector<128x128xf32> -> vector<128x128xf32>
      %c0_72 = arith.constant 0 : index
      %c0_73 = arith.constant 0 : index
      %183 = vector.load %arg8[%c0_72, %c0_73] : memref<1x128xf32, #tpu.memory_space<vmem>>, vector<1x128xf32>
      %184 = vector.shape_cast %183 : vector<1x128xf32> to vector<128xf32>
      %185 = vector.shape_cast %184 : vector<128xf32> to vector<1x128xf32>
      %186 = vector.broadcast %185 : vector<1x128xf32> to vector<128x128xf32>
      %187 = arith.addf %182, %186 : vector<128x128xf32>
      %c0_74 = arith.constant 0 : index
      %c0_75 = arith.constant 0 : index
      %188 = vector.load %arg9[%c0_74, %c0_75] : memref<128x128xbf16, #tpu.memory_space<vmem>>, vector<128x128xbf16>
      %cst_76 = arith.constant dense<0.000000e+00> : vector<128x128xf32>
      %189 = tpu.matmul %180, %188, %cst_76 {dimension_numbers = #tpu.dot_dimension_numbers<[1], [0], [0], [1], [0, 0, 1, 1], [], []>} : vector<128x128xbf16>, vector<128x128xbf16>, vector<128x128xf32> -> vector<128x128xf32>
      %c0_77 = arith.constant 0 : index
      %c0_78 = arith.constant 0 : index
      %190 = vector.load %arg10[%c0_77, %c0_78] : memref<1x128xf32, #tpu.memory_space<vmem>>, vector<1x128xf32>
      %191 = vector.shape_cast %190 : vector<1x128xf32> to vector<128xf32>
      %192 = vector.shape_cast %191 : vector<128xf32> to vector<1x128xf32>
      %193 = vector.broadcast %192 : vector<1x128xf32> to vector<128x128xf32>
      %194 = arith.addf %189, %193 : vector<128x128xf32>
      %195 = arith.truncf %187 : vector<128x128xf32> to vector<128x128xbf16>
      %196 = arith.truncf %194 : vector<128x128xf32> to vector<128x128xbf16>
      %197 = vector.extract_strided_slice %195 {offsets = [0, 0], sizes = [128, 32], strides = [1, 1]} : vector<128x128xbf16> to vector<128x32xbf16>
      %c0_79 = arith.constant 0 : index
      %c0_80 = arith.constant 0 : index
      %c0_81 = arith.constant 0 : index
      %198 = vector.load %arg20[%c0_79, %c0_80, %c0_81] : memref<4x128x32xbf16, #tpu.memory_space<vmem>>, vector<1x128x32xbf16>
      %199 = vector.shape_cast %198 : vector<1x128x32xbf16> to vector<128x32xbf16>
      %200 = vector.shape_cast %197 : vector<128x32xbf16> to vector<1x128x32xbf16>
      tpu.vector_store %arg20[%c0_79, %c0_80, %c0_81], %200 {strides = array<i32>} : memref<4x128x32xbf16, #tpu.memory_space<vmem>>, vector<1x128x32xbf16>,
      %201 = vector.extract_strided_slice %196 {offsets = [0, 0], sizes = [128, 32], strides = [1, 1]} : vector<128x128xbf16> to vector<128x32xbf16>
      %c0_82 = arith.constant 0 : index
      %c0_83 = arith.constant 0 : index
      %c0_84 = arith.constant 0 : index
      %202 = vector.load %arg21[%c0_82, %c0_83, %c0_84] : memref<4x128x32xbf16, #tpu.memory_space<vmem>>, vector<1x128x32xbf16>
      %203 = vector.shape_cast %202 : vector<1x128x32xbf16> to vector<128x32xbf16>
      %204 = vector.shape_cast %201 : vector<128x32xbf16> to vector<1x128x32xbf16>
      tpu.vector_store %arg21[%c0_82, %c0_83, %c0_84], %204 {strides = array<i32>} : memref<4x128x32xbf16, #tpu.memory_space<vmem>>, vector<1x128x32xbf16>,
      %205 = vector.extract_strided_slice %195 {offsets = [0, 32], sizes = [128, 32], strides = [1, 1]} : vector<128x128xbf16> to vector<128x32xbf16>
      %c1 = arith.constant 1 : index
      %c0_85 = arith.constant 0 : index
      %c0_86 = arith.constant 0 : index
      %206 = vector.load %arg20[%c1, %c0_85, %c0_86] : memref<4x128x32xbf16, #tpu.memory_space<vmem>>, vector<1x128x32xbf16>
      %207 = vector.shape_cast %206 : vector<1x128x32xbf16> to vector<128x32xbf16>
      %208 = vector.shape_cast %205 : vector<128x32xbf16> to vector<1x128x32xbf16>
      tpu.vector_store %arg20[%c1, %c0_85, %c0_86], %208 {strides = array<i32>} : memref<4x128x32xbf16, #tpu.memory_space<vmem>>, vector<1x128x32xbf16>,
      %209 = vector.extract_strided_slice %196 {offsets = [0, 32], sizes = [128, 32], strides = [1, 1]} : vector<128x128xbf16> to vector<128x32xbf16>
      %c1_87 = arith.constant 1 : index
      %c0_88 = arith.constant 0 : index
      %c0_89 = arith.constant 0 : index
      %210 = vector.load %arg21[%c1_87, %c0_88, %c0_89] : memref<4x128x32xbf16, #tpu.memory_space<vmem>>, vector<1x128x32xbf16>
      %211 = vector.shape_cast %210 : vector<1x128x32xbf16> to vector<128x32xbf16>
      %212 = vector.shape_cast %209 : vector<128x32xbf16> to vector<1x128x32xbf16>
      tpu.vector_store %arg21[%c1_87, %c0_88, %c0_89], %212 {strides = array<i32>} : memref<4x128x32xbf16, #tpu.memory_space<vmem>>, vector<1x128x32xbf16>,
      %213 = vector.extract_strided_slice %195 {offsets = [0, 64], sizes = [128, 32], strides = [1, 1]} : vector<128x128xbf16> to vector<128x32xbf16>
      %c2 = arith.constant 2 : index
      %c0_90 = arith.constant 0 : index
      %c0_91 = arith.constant 0 : index
      %214 = vector.load %arg20[%c2, %c0_90, %c0_91] : memref<4x128x32xbf16, #tpu.memory_space<vmem>>, vector<1x128x32xbf16>
      %215 = vector.shape_cast %214 : vector<1x128x32xbf16> to vector<128x32xbf16>
      %216 = vector.shape_cast %213 : vector<128x32xbf16> to vector<1x128x32xbf16>
      tpu.vector_store %arg20[%c2, %c0_90, %c0_91], %216 {strides = array<i32>} : memref<4x128x32xbf16, #tpu.memory_space<vmem>>, vector<1x128x32xbf16>,
      %217 = vector.extract_strided_slice %196 {offsets = [0, 64], sizes = [128, 32], strides = [1, 1]} : vector<128x128xbf16> to vector<128x32xbf16>
      %c2_92 = arith.constant 2 : index
      %c0_93 = arith.constant 0 : index
      %c0_94 = arith.constant 0 : index
      %218 = vector.load %arg21[%c2_92, %c0_93, %c0_94] : memref<4x128x32xbf16, #tpu.memory_space<vmem>>, vector<1x128x32xbf16>
      %219 = vector.shape_cast %218 : vector<1x128x32xbf16> to vector<128x32xbf16>
      %220 = vector.shape_cast %217 : vector<128x32xbf16> to vector<1x128x32xbf16>
      tpu.vector_store %arg21[%c2_92, %c0_93, %c0_94], %220 {strides = array<i32>} : memref<4x128x32xbf16, #tpu.memory_space<vmem>>, vector<1x128x32xbf16>,
      %221 = vector.extract_strided_slice %195 {offsets = [0, 96], sizes = [128, 32], strides = [1, 1]} : vector<128x128xbf16> to vector<128x32xbf16>
      %c3 = arith.constant 3 : index
      %c0_95 = arith.constant 0 : index
      %c0_96 = arith.constant 0 : index
      %222 = vector.load %arg20[%c3, %c0_95, %c0_96] : memref<4x128x32xbf16, #tpu.memory_space<vmem>>, vector<1x128x32xbf16>
      %223 = vector.shape_cast %222 : vector<1x128x32xbf16> to vector<128x32xbf16>
      %224 = vector.shape_cast %221 : vector<128x32xbf16> to vector<1x128x32xbf16>
      tpu.vector_store %arg20[%c3, %c0_95, %c0_96], %224 {strides = array<i32>} : memref<4x128x32xbf16, #tpu.memory_space<vmem>>, vector<1x128x32xbf16>,
      %225 = vector.extract_strided_slice %196 {offsets = [0, 96], sizes = [128, 32], strides = [1, 1]} : vector<128x128xbf16> to vector<128x32xbf16>
      %c3_97 = arith.constant 3 : index
      %c0_98 = arith.constant 0 : index
      %c0_99 = arith.constant 0 : index
      %226 = vector.load %arg21[%c3_97, %c0_98, %c0_99] : memref<4x128x32xbf16, #tpu.memory_space<vmem>>, vector<1x128x32xbf16>
      %227 = vector.shape_cast %226 : vector<1x128x32xbf16> to vector<128x32xbf16>
      %228 = vector.shape_cast %225 : vector<128x32xbf16> to vector<1x128x32xbf16>
      tpu.vector_store %arg21[%c3_97, %c0_98, %c0_99], %228 {strides = array<i32>} : memref<4x128x32xbf16, #tpu.memory_space<vmem>>, vector<1x128x32xbf16>,
    } else {
    }
    %c64_i32 = arith.constant 64 : i32
    %3 = arith.muli %arg1, %c64_i32 : i32
    %4 = tpu.assume_multiple %3, 64 : i32
    %c0 = arith.constant 0 : index
    %5 = arith.index_cast %4 : i32 to index
    %c0_1 = arith.constant 0 : index
    %6 = vector.load %arg2[%c0, %5, %c0_1] : memref<1x128x128xf32, #tpu.memory_space<vmem>>, vector<1x64x128xf32>
    %7 = vector.shape_cast %6 : vector<1x64x128xf32> to vector<64x128xf32>
    %cst = arith.constant dense<0.000000e+00> : vector<64xf32>
    %8 = vector.multi_reduction <add>, %7, %cst [1] : vector<64x128xf32> to vector<64xf32>
    %9 = vector.shape_cast %8 : vector<64xf32> to vector<64x1xf32>
    %cst_2 = arith.constant 1.280000e+02 : f32
    %10 = vector.broadcast %cst_2 : f32 to vector<64x1xf32>
    %11 = arith.divf %9, %10 : vector<64x1xf32>
    %12 = vector.broadcast %11 : vector<64x1xf32> to vector<64x128xf32>
    %13 = arith.subf %7, %12 : vector<64x128xf32>
    %14 = arith.mulf %13, %13 : vector<64x128xf32>
    %cst_3 = arith.constant dense<0.000000e+00> : vector<64xf32>
    %15 = vector.multi_reduction <add>, %14, %cst_3 [1] : vector<64x128xf32> to vector<64xf32>
    %16 = vector.shape_cast %15 : vector<64xf32> to vector<64x1xf32>
    %cst_4 = arith.constant 1.280000e+02 : f32
    %17 = vector.broadcast %cst_4 : f32 to vector<64x1xf32>
    %18 = arith.divf %16, %17 : vector<64x1xf32>
    %19 = vector.broadcast %11 : vector<64x1xf32> to vector<64x128xf32>
    %20 = arith.subf %7, %19 : vector<64x128xf32>
    %cst_5 = arith.constant 9.99999974E-6 : f32
    %21 = vector.broadcast %cst_5 : f32 to vector<64x1xf32>
    %22 = arith.addf %18, %21 : vector<64x1xf32>
    %23 = math.rsqrt %22 : vector<64x1xf32>
    %24 = vector.broadcast %23 : vector<64x1xf32> to vector<64x128xf32>
    %25 = arith.mulf %20, %24 : vector<64x128xf32>
    %c0_6 = arith.constant 0 : index
    %c0_7 = arith.constant 0 : index
    %26 = vector.load %arg3[%c0_6, %c0_7] : memref<1x128xf32, #tpu.memory_space<vmem>>, vector<1x128xf32>
    %27 = vector.shape_cast %26 : vector<1x128xf32> to vector<128xf32>
    %28 = vector.shape_cast %27 : vector<128xf32> to vector<1x128xf32>
    %29 = vector.broadcast %28 : vector<1x128xf32> to vector<64x128xf32>
    %30 = arith.mulf %25, %29 : vector<64x128xf32>
    %c0_8 = arith.constant 0 : index
    %c0_9 = arith.constant 0 : index
    %31 = vector.load %arg4[%c0_8, %c0_9] : memref<1x128xf32, #tpu.memory_space<vmem>>, vector<1x128xf32>
    %32 = vector.shape_cast %31 : vector<1x128xf32> to vector<128xf32>
    %33 = vector.shape_cast %32 : vector<128xf32> to vector<1x128xf32>
    %34 = vector.broadcast %33 : vector<1x128xf32> to vector<64x128xf32>
    %35 = arith.addf %30, %34 : vector<64x128xf32>
    %36 = arith.truncf %35 : vector<64x128xf32> to vector<64x128xbf16>
    %c0_10 = arith.constant 0 : index
    %c0_11 = arith.constant 0 : index
    %37 = vector.load %arg5[%c0_10, %c0_11] : memref<128x128xbf16, #tpu.memory_space<vmem>>, vector<128x128xbf16>
    %cst_12 = arith.constant dense<0.000000e+00> : vector<64x128xf32>
    %38 = tpu.matmul %36, %37, %cst_12 {dimension_numbers = #tpu.dot_dimension_numbers<[1], [0], [0], [1], [0, 0, 1, 1], [], []>} : vector<64x128xbf16>, vector<128x128xbf16>, vector<64x128xf32> -> vector<64x128xf32>
    %c0_13 = arith.constant 0 : index
    %c0_14 = arith.constant 0 : index
    %39 = vector.load %arg6[%c0_13, %c0_14] : memref<1x128xf32, #tpu.memory_space<vmem>>, vector<1x128xf32>
    %40 = vector.shape_cast %39 : vector<1x128xf32> to vector<128xf32>
    %41 = vector.shape_cast %40 : vector<128xf32> to vector<1x128xf32>
    %42 = vector.broadcast %41 : vector<1x128xf32> to vector<64x128xf32>
    %43 = arith.addf %38, %42 : vector<64x128xf32>
    %cst_15 = arith.constant 0.176776692 : f32
    %44 = vector.broadcast %cst_15 : f32 to vector<64x128xf32>
    %45 = arith.mulf %43, %44 : vector<64x128xf32>
    %46 = arith.truncf %45 : vector<64x128xf32> to vector<64x128xbf16>
    %47 = vector.extract_strided_slice %46 {offsets = [0, 0], sizes = [64, 32], strides = [1, 1]} : vector<64x128xbf16> to vector<64x32xbf16>
    %48 = vector.extract_strided_slice %46 {offsets = [0, 32], sizes = [64, 32], strides = [1, 1]} : vector<64x128xbf16> to vector<64x32xbf16>
    %49 = vector.extract_strided_slice %46 {offsets = [0, 64], sizes = [64, 32], strides = [1, 1]} : vector<64x128xbf16> to vector<64x32xbf16>
    %50 = vector.extract_strided_slice %46 {offsets = [0, 96], sizes = [64, 32], strides = [1, 1]} : vector<64x128xbf16> to vector<64x32xbf16>
    %51 = vector.shape_cast %47 : vector<64x32xbf16> to vector<1x64x32xbf16>
    %52 = vector.shape_cast %48 : vector<64x32xbf16> to vector<1x64x32xbf16>
    %53 = vector.shape_cast %49 : vector<64x32xbf16> to vector<1x64x32xbf16>
    %54 = vector.shape_cast %50 : vector<64x32xbf16> to vector<1x64x32xbf16>
    %55 = tpu.concatenate %51, %52, %53, %54 in 0 : vector<1x64x32xbf16>, vector<1x64x32xbf16>, vector<1x64x32xbf16>, vector<1x64x32xbf16> -> vector<4x64x32xbf16>
    %c0_16 = arith.constant 0 : index
    %c0_17 = arith.constant 0 : index
    %c0_18 = arith.constant 0 : index
    %56 = vector.load %arg20[%c0_16, %c0_17, %c0_18] : memref<4x128x32xbf16, #tpu.memory_space<vmem>>, vector<4x128x32xbf16>
    "tpu.trace_start"() <{level = 10 : i32, message = "hqd,hkd->hqk"}> : () -> ()
    %cst_19 = arith.constant dense<0.000000e+00> : vector<4x64x128xf32>
    %57 = tpu.matmul %55, %56, %cst_19 {dimension_numbers = #tpu.dot_dimension_numbers<[2], [2], [1], [1], [0, 0, 0, 1, 1, 1], [0], [0]>} : vector<4x64x32xbf16>, vector<4x128x32xbf16>, vector<4x64x128xf32> -> vector<4x64x128xf32>
    "tpu.trace_stop"() : () -> ()
    %cst_20 = arith.constant dense<0xFF800000> : vector<4x64xf32>
    %58 = vector.multi_reduction <maximumf>, %57, %cst_20 [2] : vector<4x64x128xf32> to vector<4x64xf32>
    %59 = vector.shape_cast %58 : vector<4x64xf32> to vector<4x64x1xf32>
    %60 = vector.broadcast %59 : vector<4x64x1xf32> to vector<4x64x128xf32>
    %61 = arith.subf %57, %60 : vector<4x64x128xf32>
    %62 = math.exp %61 : vector<4x64x128xf32>
    %cst_21 = arith.constant dense<0.000000e+00> : vector<4x64xf32>
    %63 = vector.multi_reduction <add>, %62, %cst_21 [2] : vector<4x64x128xf32> to vector<4x64xf32>
    %64 = vector.shape_cast %63 : vector<4x64xf32> to vector<4x64x1xf32>
    %65 = tpu.reciprocal %64 {approx = true} : vector<4x64x1xf32> -> vector<4x64x1xf32>
    %66 = vector.broadcast %65 : vector<4x64x1xf32> to vector<4x64x128xf32>
    %67 = arith.mulf %62, %66 : vector<4x64x128xf32>
    %68 = arith.truncf %67 : vector<4x64x128xf32> to vector<4x64x128xbf16>
    %c0_22 = arith.constant 0 : index
    %c0_23 = arith.constant 0 : index
    %c0_24 = arith.constant 0 : index
    %69 = vector.load %arg21[%c0_22, %c0_23, %c0_24] : memref<4x128x32xbf16, #tpu.memory_space<vmem>>, vector<4x128x32xbf16>
    "tpu.trace_start"() <{level = 10 : i32, message = "hqk,hkd->hqd"}> : () -> ()
    %cst_25 = arith.constant dense<0.000000e+00> : vector<4x64x32xf32>
    %70 = tpu.matmul %68, %69, %cst_25 {dimension_numbers = #tpu.dot_dimension_numbers<[2], [1], [1], [2], [0, 0, 0, 1, 1, 2], [0], [0]>} : vector<4x64x128xbf16>, vector<4x128x32xbf16>, vector<4x64x32xf32> -> vector<4x64x32xf32>
    "tpu.trace_stop"() : () -> ()
    %71 = vector.extract_strided_slice %70 {offsets = [0, 0, 0], sizes = [1, 64, 32], strides = [1, 1, 1]} : vector<4x64x32xf32> to vector<1x64x32xf32>
    %72 = vector.shape_cast %71 : vector<1x64x32xf32> to vector<64x32xf32>
    %73 = vector.extract_strided_slice %70 {offsets = [1, 0, 0], sizes = [1, 64, 32], strides = [1, 1, 1]} : vector<4x64x32xf32> to vector<1x64x32xf32>
    %74 = vector.shape_cast %73 : vector<1x64x32xf32> to vector<64x32xf32>
    %75 = vector.extract_strided_slice %70 {offsets = [2, 0, 0], sizes = [1, 64, 32], strides = [1, 1, 1]} : vector<4x64x32xf32> to vector<1x64x32xf32>
    %76 = vector.shape_cast %75 : vector<1x64x32xf32> to vector<64x32xf32>
    %77 = vector.extract_strided_slice %70 {offsets = [3, 0, 0], sizes = [1, 64, 32], strides = [1, 1, 1]} : vector<4x64x32xf32> to vector<1x64x32xf32>
    %78 = vector.shape_cast %77 : vector<1x64x32xf32> to vector<64x32xf32>
    %79 = tpu.concatenate %72, %74, %76, %78 in 1 : vector<64x32xf32>, vector<64x32xf32>, vector<64x32xf32>, vector<64x32xf32> -> vector<64x128xf32>
    %80 = arith.truncf %79 : vector<64x128xf32> to vector<64x128xbf16>
    %c0_26 = arith.constant 0 : index
    %c0_27 = arith.constant 0 : index
    %81 = vector.load %arg11[%c0_26, %c0_27] : memref<128x128xbf16, #tpu.memory_space<vmem>>, vector<128x128xbf16>
    %cst_28 = arith.constant dense<0.000000e+00> : vector<64x128xf32>
    %82 = tpu.matmul %80, %81, %cst_28 {dimension_numbers = #tpu.dot_dimension_numbers<[1], [0], [0], [1], [0, 0, 1, 1], [], []>} : vector<64x128xbf16>, vector<128x128xbf16>, vector<64x128xf32> -> vector<64x128xf32>
    %c0_29 = arith.constant 0 : index
    %c0_30 = arith.constant 0 : index
    %83 = vector.load %arg12[%c0_29, %c0_30] : memref<1x128xf32, #tpu.memory_space<vmem>>, vector<1x128xf32>
    %84 = vector.shape_cast %83 : vector<1x128xf32> to vector<128xf32>
    %85 = vector.shape_cast %84 : vector<128xf32> to vector<1x128xf32>
    %86 = vector.broadcast %85 : vector<1x128xf32> to vector<64x128xf32>
    %87 = arith.addf %82, %86 : vector<64x128xf32>
    %88 = arith.addf %7, %87 : vector<64x128xf32>
    %cst_31 = arith.constant dense<0.000000e+00> : vector<64xf32>
    %89 = vector.multi_reduction <add>, %88, %cst_31 [1] : vector<64x128xf32> to vector<64xf32>
    %90 = vector.shape_cast %89 : vector<64xf32> to vector<64x1xf32>
    %cst_32 = arith.constant 1.280000e+02 : f32
    %91 = vector.broadcast %cst_32 : f32 to vector<64x1xf32>
    %92 = arith.divf %90, %91 : vector<64x1xf32>
    %93 = vector.broadcast %92 : vector<64x1xf32> to vector<64x128xf32>
    %94 = arith.subf %88, %93 : vector<64x128xf32>
    %95 = arith.mulf %94, %94 : vector<64x128xf32>
    %cst_33 = arith.constant dense<0.000000e+00> : vector<64xf32>
    %96 = vector.multi_reduction <add>, %95, %cst_33 [1] : vector<64x128xf32> to vector<64xf32>
    %97 = vector.shape_cast %96 : vector<64xf32> to vector<64x1xf32>
    %cst_34 = arith.constant 1.280000e+02 : f32
    %98 = vector.broadcast %cst_34 : f32 to vector<64x1xf32>
    %99 = arith.divf %97, %98 : vector<64x1xf32>
    %100 = vector.broadcast %92 : vector<64x1xf32> to vector<64x128xf32>
    %101 = arith.subf %88, %100 : vector<64x128xf32>
    %cst_35 = arith.constant 9.99999974E-6 : f32
    %102 = vector.broadcast %cst_35 : f32 to vector<64x1xf32>
    %103 = arith.addf %99, %102 : vector<64x1xf32>
    %104 = math.rsqrt %103 : vector<64x1xf32>
    %105 = vector.broadcast %104 : vector<64x1xf32> to vector<64x128xf32>
    %106 = arith.mulf %101, %105 : vector<64x128xf32>
    %c0_36 = arith.constant 0 : index
    %c0_37 = arith.constant 0 : index
    %107 = vector.load %arg13[%c0_36, %c0_37] : memref<1x128xf32, #tpu.memory_space<vmem>>, vector<1x128xf32>
    %108 = vector.shape_cast %107 : vector<1x128xf32> to vector<128xf32>
    %109 = vector.shape_cast %108 : vector<128xf32> to vector<1x128xf32>
    %110 = vector.broadcast %109 : vector<1x128xf32> to vector<64x128xf32>
    %111 = arith.mulf %106, %110 : vector<64x128xf32>
    %c0_38 = arith.constant 0 : index
    %c0_39 = arith.constant 0 : index
    %112 = vector.load %arg14[%c0_38, %c0_39] : memref<1x128xf32, #tpu.memory_space<vmem>>, vector<1x128xf32>
    %113 = vector.shape_cast %112 : vector<1x128xf32> to vector<128xf32>
    %114 = vector.shape_cast %113 : vector<128xf32> to vector<1x128xf32>
    %115 = vector.broadcast %114 : vector<1x128xf32> to vector<64x128xf32>
    %116 = arith.addf %111, %115 : vector<64x128xf32>
    %117 = arith.truncf %116 : vector<64x128xf32> to vector<64x128xbf16>
    %c0_40 = arith.constant 0 : index
    %c0_41 = arith.constant 0 : index
    %118 = vector.load %arg15[%c0_40, %c0_41] : memref<128x256xbf16, #tpu.memory_space<vmem>>, vector<128x256xbf16>
    %cst_42 = arith.constant dense<0.000000e+00> : vector<64x256xf32>
    %119 = tpu.matmul %117, %118, %cst_42 {dimension_numbers = #tpu.dot_dimension_numbers<[1], [0], [0], [1], [0, 0, 1, 1], [], []>} : vector<64x128xbf16>, vector<128x256xbf16>, vector<64x256xf32> -> vector<64x256xf32>
    %c0_43 = arith.constant 0 : index
    %c0_44 = arith.constant 0 : index
    %120 = vector.load %arg16[%c0_43, %c0_44] : memref<1x256xf32, #tpu.memory_space<vmem>>, vector<1x256xf32>
    %121 = vector.shape_cast %120 : vector<1x256xf32> to vector<256xf32>
    %122 = vector.shape_cast %121 : vector<256xf32> to vector<1x256xf32>
    %123 = vector.broadcast %122 : vector<1x256xf32> to vector<64x256xf32>
    %124 = arith.addf %119, %123 : vector<64x256xf32>
    %125 = arith.mulf %124, %124 : vector<64x256xf32>
    %126 = arith.mulf %124, %125 : vector<64x256xf32>
    %cst_45 = arith.constant 4.471500e-02 : f32
    %127 = vector.broadcast %cst_45 : f32 to vector<64x256xf32>
    %128 = arith.mulf %127, %126 : vector<64x256xf32>
    %129 = arith.addf %124, %128 : vector<64x256xf32>
    %cst_46 = arith.constant 0.797884583 : f32
    %130 = vector.broadcast %cst_46 : f32 to vector<64x256xf32>
    %131 = arith.mulf %130, %129 : vector<64x256xf32>
    %132 = math.tanh %131 : vector<64x256xf32>
    %cst_47 = arith.constant 1.000000e+00 : f32
    %133 = vector.broadcast %cst_47 : f32 to vector<64x256xf32>
    %134 = arith.addf %133, %132 : vector<64x256xf32>
    %cst_48 = arith.constant 5.000000e-01 : f32
    %135 = vector.broadcast %cst_48 : f32 to vector<64x256xf32>
    %136 = arith.mulf %135, %134 : vector<64x256xf32>
    %137 = arith.mulf %124, %136 : vector<64x256xf32>
    %138 = arith.truncf %137 : vector<64x256xf32> to vector<64x256xbf16>
    %c0_49 = arith.constant 0 : index
    %c0_50 = arith.constant 0 : index
    %139 = vector.load %arg17[%c0_49, %c0_50] : memref<256x128xbf16, #tpu.memory_space<vmem>>, vector<256x128xbf16>
    %cst_51 = arith.constant dense<0.000000e+00> : vector<64x128xf32>
    %140 = tpu.matmul %138, %139, %cst_51 {dimension_numbers = #tpu.dot_dimension_numbers<[1], [0], [0], [1], [0, 0, 1, 1], [], []>} : vector<64x256xbf16>, vector<256x128xbf16>, vector<64x128xf32> -> vector<64x128xf32>
    %c0_52 = arith.constant 0 : index
    %c0_53 = arith.constant 0 : index
    %141 = vector.load %arg18[%c0_52, %c0_53] : memref<1x128xf32, #tpu.memory_space<vmem>>, vector<1x128xf32>
    %142 = vector.shape_cast %141 : vector<1x128xf32> to vector<128xf32>
    %143 = vector.shape_cast %142 : vector<128xf32> to vector<1x128xf32>
    %144 = vector.broadcast %143 : vector<1x128xf32> to vector<64x128xf32>
    %145 = arith.addf %140, %144 : vector<64x128xf32>
    %146 = arith.addf %88, %145 : vector<64x128xf32>
    %c0_54 = arith.constant 0 : index
    %c0_55 = arith.constant 0 : index
    %c0_56 = arith.constant 0 : index
    %147 = vector.load %arg19[%c0_54, %c0_55, %c0_56] : memref<1x64x128xf32, #tpu.memory_space<vmem>>, vector<1x64x128xf32>
    %148 = vector.shape_cast %147 : vector<1x64x128xf32> to vector<64x128xf32>
    %149 = vector.shape_cast %146 : vector<64x128xf32> to vector<1x64x128xf32>
    tpu.vector_store %arg19[%c0_54, %c0_55, %c0_56], %149 {strides = array<i32>} : memref<1x64x128xf32, #tpu.memory_space<vmem>>, vector<1x64x128xf32>,
    return
  }
  func.func @transform_0(%arg0: i32, %arg1: i32) -> (i32, i32, i32) {
    %c0_i32 = arith.constant 0 : i32
    %c0_i32_0 = arith.constant 0 : i32
    %c0_i32_1 = arith.constant 0 : i32
    return %arg0, %c0_i32, %c0_i32_0 : i32, i32, i32
  }
  func.func @transform_1(%arg0: i32, %arg1: i32) -> (i32, i32) {
    %c0_i32 = arith.constant 0 : i32
    %c0_i32_0 = arith.constant 0 : i32
    %c0_i32_1 = arith.constant 0 : i32
    return %c0_i32, %c0_i32_0 : i32, i32
  }
  func.func @transform_2(%arg0: i32, %arg1: i32) -> (i32, i32) {
    %c0_i32 = arith.constant 0 : i32
    %c0_i32_0 = arith.constant 0 : i32
    %c0_i32_1 = arith.constant 0 : i32
    return %c0_i32, %c0_i32_0 : i32, i32
  }
  func.func @transform_3(%arg0: i32, %arg1: i32) -> (i32, i32) {
    %c0_i32 = arith.constant 0 : i32
    %c0_i32_0 = arith.constant 0 : i32
    %c0_i32_1 = arith.constant 0 : i32
    return %c0_i32, %c0_i32_0 : i32, i32
  }
  func.func @transform_4(%arg0: i32, %arg1: i32) -> (i32, i32) {
    %c0_i32 = arith.constant 0 : i32
    %c0_i32_0 = arith.constant 0 : i32
    %c0_i32_1 = arith.constant 0 : i32
    return %c0_i32, %c0_i32_0 : i32, i32
  }
  func.func @transform_5(%arg0: i32, %arg1: i32) -> (i32, i32) {
    %c0_i32 = arith.constant 0 : i32
    %c0_i32_0 = arith.constant 0 : i32
    %c0_i32_1 = arith.constant 0 : i32
    return %c0_i32, %c0_i32_0 : i32, i32
  }
  func.func @transform_6(%arg0: i32, %arg1: i32) -> (i32, i32) {
    %c0_i32 = arith.constant 0 : i32
    %c0_i32_0 = arith.constant 0 : i32
    %c0_i32_1 = arith.constant 0 : i32
    return %c0_i32, %c0_i32_0 : i32, i32
  }
  func.func @transform_7(%arg0: i32, %arg1: i32) -> (i32, i32) {
    %c0_i32 = arith.constant 0 : i32
    %c0_i32_0 = arith.constant 0 : i32
    %c0_i32_1 = arith.constant 0 : i32
    return %c0_i32, %c0_i32_0 : i32, i32
  }
  func.func @transform_8(%arg0: i32, %arg1: i32) -> (i32, i32) {
    %c0_i32 = arith.constant 0 : i32
    %c0_i32_0 = arith.constant 0 : i32
    %c0_i32_1 = arith.constant 0 : i32
    return %c0_i32, %c0_i32_0 : i32, i32
  }
  func.func @transform_9(%arg0: i32, %arg1: i32) -> (i32, i32) {
    %c0_i32 = arith.constant 0 : i32
    %c0_i32_0 = arith.constant 0 : i32
    %c0_i32_1 = arith.constant 0 : i32
    return %c0_i32, %c0_i32_0 : i32, i32
  }
  func.func @transform_10(%arg0: i32, %arg1: i32) -> (i32, i32) {
    %c0_i32 = arith.constant 0 : i32
    %c0_i32_0 = arith.constant 0 : i32
    %c0_i32_1 = arith.constant 0 : i32
    return %c0_i32, %c0_i32_0 : i32, i32
  }
  func.func @transform_11(%arg0: i32, %arg1: i32) -> (i32, i32) {
    %c0_i32 = arith.constant 0 : i32
    %c0_i32_0 = arith.constant 0 : i32
    %c0_i32_1 = arith.constant 0 : i32
    return %c0_i32, %c0_i32_0 : i32, i32
  }
  func.func @transform_12(%arg0: i32, %arg1: i32) -> (i32, i32) {
    %c0_i32 = arith.constant 0 : i32
    %c0_i32_0 = arith.constant 0 : i32
    %c0_i32_1 = arith.constant 0 : i32
    return %c0_i32, %c0_i32_0 : i32, i32
  }
  func.func @transform_13(%arg0: i32, %arg1: i32) -> (i32, i32) {
    %c0_i32 = arith.constant 0 : i32
    %c0_i32_0 = arith.constant 0 : i32
    %c0_i32_1 = arith.constant 0 : i32
    return %c0_i32, %c0_i32_0 : i32, i32
  }
  func.func @transform_14(%arg0: i32, %arg1: i32) -> (i32, i32) {
    %c0_i32 = arith.constant 0 : i32
    %c0_i32_0 = arith.constant 0 : i32
    %c0_i32_1 = arith.constant 0 : i32
    return %c0_i32, %c0_i32_0 : i32, i32
  }
  func.func @transform_15(%arg0: i32, %arg1: i32) -> (i32, i32) {
    %c0_i32 = arith.constant 0 : i32
    %c0_i32_0 = arith.constant 0 : i32
    %c0_i32_1 = arith.constant 0 : i32
    return %c0_i32, %c0_i32_0 : i32, i32
  }
  func.func @transform_16(%arg0: i32, %arg1: i32) -> (i32, i32) {
    %c0_i32 = arith.constant 0 : i32
    %c0_i32_0 = arith.constant 0 : i32
    %c0_i32_1 = arith.constant 0 : i32
    return %c0_i32, %c0_i32_0 : i32, i32
  }
  func.func @transform_17(%arg0: i32, %arg1: i32) -> (i32, i32, i32) {
    %c0_i32 = arith.constant 0 : i32
    %c0_i32_0 = arith.constant 0 : i32
    return %arg0, %arg1, %c0_i32 : i32, i32, i32
  }
}

</mosaic_0001>

<llo_original>
// kernel: tpu_custom_call.1
$region0: #{tpu_custom_call.1}
  #allocation0 [shape = 'u32[]', space=smem, size = 0x4, offset = 0x4, fixed_abs, tag = 'smem constant byte address 0x4 - core index']
  #allocation1 [shape = 'u32[144,128]{1,0:T(1,128)}', space=vmem, size = 0x12000, scoped, tag = 'internal scratch']
  #allocation2 [shape = 'bf16[4,128,32]{2,1,0:T(8,128)(2,1)}', space=vmem, size = 0x20000, scoped, tag = 'scratch operand']
  #allocation3 [shape = 'bf16[4,128,32]{2,1,0:T(8,128)(2,1)}', space=vmem, size = 0x20000, scoped, tag = 'scratch operand']
  %s0 = inlined_call_operand.hbm [shape: f32[2,128,128], index: 0, kind: input, shape index: {}]
  %s1 = inlined_call_operand.vmem [shape: f32[1,128], index: 1, kind: input, shape index: {}]
  %s2 = inlined_call_operand.hbm [shape: f32[1,128], index: 2, kind: input, shape index: {}]
  %s3 = inlined_call_operand.hbm [shape: bf16[128,128], index: 3, kind: input, shape index: {}]
  %s4 = inlined_call_operand.vmem [shape: f32[1,128], index: 4, kind: input, shape index: {}]
  %s5 = inlined_call_operand.hbm [shape: bf16[128,128], index: 5, kind: input, shape index: {}]
  %s6 = inlined_call_operand.vmem [shape: f32[1,128], index: 6, kind: input, shape index: {}]
  %s7 = inlined_call_operand.hbm [shape: bf16[128,128], index: 7, kind: input, shape index: {}]
  %s8 = inlined_call_operand.vmem [shape: f32[1,128], index: 8, kind: input, shape index: {}]
  %s9 = inlined_call_operand.hbm [shape: bf16[128,128], index: 9, kind: input, shape index: {}]
  %s10 = inlined_call_operand.vmem [shape: f32[1,128], index: 10, kind: input, shape index: {}]
  %s11 = inlined_call_operand.vmem [shape: f32[1,128], index: 11, kind: input, shape index: {}]
  %s12 = inlined_call_operand.vmem [shape: f32[1,128], index: 12, kind: input, shape index: {}]
  %s13 = inlined_call_operand.hbm [shape: bf16[128,256], index: 13, kind: input, shape index: {}]
  %s14 = inlined_call_operand.vmem [shape: f32[1,256], index: 14, kind: input, shape index: {}]
  %s15 = inlined_call_operand.hbm [shape: bf16[256,128], index: 15, kind: input, shape index: {}]
  %s16 = inlined_call_operand.vmem [shape: f32[1,128], index: 16, kind: input, shape index: {}]
  %s17 = inlined_call_operand.hbm [shape: f32[2,128,128], index: 17, kind: output, shape index: {}]
  %s18 = sld [smem:[#allocation0]]
  $region137: #{tpu_custom_call.1} parent=0
    _
  %s20 = ssub.s32 1, %s18
  %s21 = scalar_select 0, %s20, %s18
  $region1: #{tpu_custom_call.1} parent=0
    #allocation4 [shape = 'u8[131072]{0}', space=vmem, size = 0x20000, scoped, tag = 'input window, operand 0']
    #allocation5 [shape = 's32[2]{0}', space=sflag, size = 0x8, scoped, tag = 'scoped memory for tpu_custom_call.1']
    #allocation6 [shape = 's32[2]{0}', space=sflag, size = 0x8, scoped, tag = 'scoped memory for tpu_custom_call.1']
    #allocation7 [shape = 'u8[512]{0}', space=vmem, size = 0x400, scoped, tag = 'input window, operand 2, single buffered']
    #allocation8 [shape = 's32[1]{0}', space=sflag, size = 0x4, scoped, tag = 'scoped memory for tpu_custom_call.1']
    #allocation9 [shape = 'u8[32768]{0}', space=vmem, size = 0x8000, scoped, tag = 'input window, operand 3, single buffered']
    #allocation10 [shape = 'u8[32768]{0}', space=vmem, size = 0x8000, scoped, tag = 'input window, operand 5, single buffered']
    #allocation11 [shape = 's32[1]{0}', space=sflag, size = 0x4, scoped, tag = 'scoped memory for tpu_custom_call.1']
    #allocation12 [shape = 'u8[32768]{0}', space=vmem, size = 0x8000, scoped, tag = 'input window, operand 7, single buffered']
    #allocation13 [shape = 'u8[32768]{0}', space=vmem, size = 0x8000, scoped, tag = 'input window, operand 9, single buffered']
    #allocation14 [shape = 's32[1]{0}', space=sflag, size = 0x4, scoped, tag = 'scoped memory for tpu_custom_call.1']
    #allocation15 [shape = 'u8[65536]{0}', space=vmem, size = 0x10000, scoped, tag = 'input window, operand 13, single buffered']
    #allocation16 [shape = 'u8[65536]{0}', space=vmem, size = 0x10000, scoped, tag = 'input window, operand 15, single buffered']
    #allocation17 [shape = 's32[1]{0}', space=sflag, size = 0x4, scoped, tag = 'scoped memory for tpu_custom_call.1']
    #allocation18 [shape = 'u8[65536]{0}', space=vmem, size = 0x10000, scoped, tag = 'output window, operand 0']
    %22 = vsyncpa [#allocation5], 0
    %s23 = scalar_lea.sflag [#allocation5], 1
    %24 = vsyncpa %s23, 0
    %25 = vsyncpa [#allocation8], 0
    %26 = vsyncpa [#allocation11], 0
    %27 = vsyncpa [#allocation14], 0
    %28 = vsyncpa [#allocation17], 0
    %29 = vsyncpa [#allocation6], 0
    %s30 = scalar_lea.sflag [#allocation6], 1
    %31 = vsyncpa %s30, 0
    loop: start=0, step=1, limit=6
    $region2: #{tpu_custom_call.1} parent=1 // loop_pre_header
      _
    $region3: #{tpu_custom_call.1} parent=1 // loop_header
      %s33 = sphi 0, %s37
      %p34 = scmp.ge.s32.totalorder %s33, 6
      %s40 = sphi 0, %s52
      %s41 = sphi 0, %s48
      %s42 = sphi 0, %s40
      %s43 = sphi 0, %s41
      %s44 = sphi 0, %s42
      %s45 = sphi 0, %s43
      %s55 = sphi 0, %s57
      %s58 = sphi 0, %s55
      %s59 = sphi 0, %s58
      %s75 = sphi 0, %s59
      %s79 = sphi 0, %s79
      %s81 = sphi 0, %s79
      %s82 = sphi 0, %s81
      %s96 = sphi 0, %s82
      %s100 = sphi 0, %s100
      %s102 = sphi 0, %s100
      %s103 = sphi 0, %s102
      %s117 = sphi 0, %s103
      %s121 = sphi 0, %s121
      %s123 = sphi 0, %s121
      %s124 = sphi 0, %s123
      %s138 = sphi 0, %s124
      %s142 = sphi 0, %s142
      %s144 = sphi 0, %s142
      %s145 = sphi 0, %s144
      %s159 = sphi 0, %s145
      %s163 = sphi 0, %s163
      %s165 = sphi 0, %s163
      %s166 = sphi 0, %s165
      %s180 = sphi 0, %s166
      %s184 = sphi 0, %s184
      %s186 = sphi 0, %s184
      %s187 = sphi 0, %s186
      %s201 = sphi 0, %s187
      %s205 = sphi 0, %s205
      %s207 = sphi 0, %s205
      %s208 = sphi 0, %s207
      %s222 = sphi 0, %s208
      %s226 = sphi 0, %s226
      %s228 = sphi 0, %s226
      %s229 = sphi 0, %s228
      %s243 = sphi 0, %s229
      %s247 = sphi 0, %s247
      %s249 = sphi 0, %s247
      %s250 = sphi 0, %s249
      %s264 = sphi 0, %s250
      %s268 = sphi 0, %s268
      %s270 = sphi 0, %s268
      %s271 = sphi 0, %s270
      %s285 = sphi 0, %s271
      %s289 = sphi 0, %s289
      %s291 = sphi 0, %s289
      %s292 = sphi 0, %s291
      %s306 = sphi 0, %s292
      %s310 = sphi 0, %s310
      %s312 = sphi 0, %s310
      %s313 = sphi 0, %s312
      %s327 = sphi 0, %s313
      %s331 = sphi 0, %s331
      %s333 = sphi 0, %s331
      %s334 = sphi 0, %s333
      %s348 = sphi 0, %s334
      %s352 = sphi 0, %s352
      %s354 = sphi 0, %s352
      %s355 = sphi 0, %s354
      %s369 = sphi 0, %s355
      %s373 = sphi 0, %s373
      %s375 = sphi 0, %s373
      %s376 = sphi 0, %s375
      %s390 = sphi 0, %s376
      %s394 = sphi 0, %s394
      %s396 = sphi 0, %s394
      %s397 = sphi 0, %s396
      %s411 = sphi 0, %s397
      %s419 = sphi 0, %s421
      %s422 = sphi 0, %s419
      %s423 = sphi 0, %s422
      %s439 = sphi 0, %s423
    $region4: #{tpu_custom_call.1} parent=1 // loop_header_branch
      %36 = sbr.rel (%p34) target = $region8
    $region5: #{tpu_custom_call.1} parent=1 // loop_body
      %s38 = ssub.s32 %s33, 1
      %s39 = ssub.s32 %s33, 2
      %s46 = sadd.s32 1, %s41
      %p47 = scmp.ge.s32.totalorder %s46, 2
      %s48 = scalar_select %p47, 0, %s46
      %s49 = sadd.s32 1, %s40
      %s50 = scalar_select %p47, %s49, %s40
      %p51 = scmp.ge.s32.totalorder %s50, 2
      %s52 = scalar_select %p51, 0, %s50
      %s53 = ssub.s32 %s40, %s52
      %p54 = scmp.eq.s32.totalorder %s53, 0
      %s56 = sadd.s32 %s55, 1
      %s57 = scalar_select %p54, %s55, %s56
      %p60 = pneg %p54
      %p61 = scmp.eq.s32.totalorder %s33, 3
      %p62 = por %p60, %p61
      %p63 = scmp.ne.s32.totalorder %s55, %s58
      %p64 = scmp.eq.s32.totalorder %s33, 0
      %p65 = por %p63, %p64
      %p66 = scmp.ne.s32.totalorder %s55, %s58
      %p67 = scmp.eq.s32.totalorder %s38, 3
      %p68 = por %p66, %p67
      %p69 = scmp.ne.s32.totalorder %s58, %s59
      %p70 = scmp.eq.s32.totalorder %s38, 0
      %p71 = por %p69, %p70
      %p72 = scmp.ne.s32.totalorder %s58, %s59
      %p73 = scmp.eq.s32.totalorder %s39, 3
      %p74 = por %p72, %p73
      %p76 = scmp.ne.s32.totalorder %s59, %s75
      %p77 = scmp.eq.s32.totalorder %s39, 0
      %p78 = por %p76, %p77
      %s80 = sadd.s32 %s79, 1
      %p83 = scmp.eq.s32.totalorder %s33, 3
      %p84 = scmp.ne.s32.totalorder %s79, %s81
      %p85 = scmp.eq.s32.totalorder %s33, 0
      %p86 = por %p84, %p85
      %p87 = scmp.ne.s32.totalorder %s79, %s81
      %p88 = scmp.eq.s32.totalorder %s38, 3
      %p89 = por %p87, %p88
      %p90 = scmp.ne.s32.totalorder %s81, %s82
      %p91 = scmp.eq.s32.totalorder %s38, 0
      %p92 = por %p90, %p91
      %p93 = scmp.ne.s32.totalorder %s81, %s82
      %p94 = scmp.eq.s32.totalorder %s39, 3
      %p95 = por %p93, %p94
      %p97 = scmp.ne.s32.totalorder %s82, %s96
      %p98 = scmp.eq.s32.totalorder %s39, 0
      %p99 = por %p97, %p98
      %s101 = sadd.s32 %s100, 1
      %p104 = scmp.eq.s32.totalorder %s33, 3
      %p105 = scmp.ne.s32.totalorder %s100, %s102
      %p106 = scmp.eq.s32.totalorder %s33, 0
      %p107 = por %p105, %p106
      %p108 = scmp.ne.s32.totalorder %s100, %s102
      %p109 = scmp.eq.s32.totalorder %s38, 3
      %p110 = por %p108, %p109
      %p111 = scmp.ne.s32.totalorder %s102, %s103
      %p112 = scmp.eq.s32.totalorder %s38, 0
      %p113 = por %p111, %p112
      %p114 = scmp.ne.s32.totalorder %s102, %s103
      %p115 = scmp.eq.s32.totalorder %s39, 3
      %p116 = por %p114, %p115
      %p118 = scmp.ne.s32.totalorder %s103, %s117
      %p119 = scmp.eq.s32.totalorder %s39, 0
      %p120 = por %p118, %p119
      %s122 = sadd.s32 %s121, 1
      %p125 = scmp.eq.s32.totalorder %s33, 3
      %p126 = scmp.ne.s32.totalorder %s121, %s123
      %p127 = scmp.eq.s32.totalorder %s33, 0
      %p128 = por %p126, %p127
      %p129 = scmp.ne.s32.totalorder %s121, %s123
      %p130 = scmp.eq.s32.totalorder %s38, 3
      %p131 = por %p129, %p130
      %p132 = scmp.ne.s32.totalorder %s123, %s124
      %p133 = scmp.eq.s32.totalorder %s38, 0
      %p134 = por %p132, %p133
      %p135 = scmp.ne.s32.totalorder %s123, %s124
      %p136 = scmp.eq.s32.totalorder %s39, 3
      %p137 = por %p135, %p136
      %p139 = scmp.ne.s32.totalorder %s124, %s138
      %p140 = scmp.eq.s32.totalorder %s39, 0
      %p141 = por %p139, %p140
      %s143 = sadd.s32 %s142, 1
      %p146 = scmp.eq.s32.totalorder %s33, 3
      %p147 = scmp.ne.s32.totalorder %s142, %s144
      %p148 = scmp.eq.s32.totalorder %s33, 0
      %p149 = por %p147, %p148
      %p150 = scmp.ne.s32.totalorder %s142, %s144
      %p151 = scmp.eq.s32.totalorder %s38, 3
      %p152 = por %p150, %p151
      %p153 = scmp.ne.s32.totalorder %s144, %s145
      %p154 = scmp.eq.s32.totalorder %s38, 0
      %p155 = por %p153, %p154
      %p156 = scmp.ne.s32.totalorder %s144, %s145
      %p157 = scmp.eq.s32.totalorder %s39, 3
      %p158 = por %p156, %p157
      %p160 = scmp.ne.s32.totalorder %s145, %s159
      %p161 = scmp.eq.s32.totalorder %s39, 0
      %p162 = por %p160, %p161
      %s164 = sadd.s32 %s163, 1
      %p167 = scmp.eq.s32.totalorder %s33, 3
      %p168 = scmp.ne.s32.totalorder %s163, %s165
      %p169 = scmp.eq.s32.totalorder %s33, 0
      %p170 = por %p168, %p169
      %p171 = scmp.ne.s32.totalorder %s163, %s165
      %p172 = scmp.eq.s32.totalorder %s38, 3
      %p173 = por %p171, %p172
      %p174 = scmp.ne.s32.totalorder %s165, %s166
      %p175 = scmp.eq.s32.totalorder %s38, 0
      %p176 = por %p174, %p175
      %p177 = scmp.ne.s32.totalorder %s165, %s166
      %p178 = scmp.eq.s32.totalorder %s39, 3
      %p179 = por %p177, %p178
      %p181 = scmp.ne.s32.totalorder %s166, %s180
      %p182 = scmp.eq.s32.totalorder %s39, 0
      %p183 = por %p181, %p182
      %s185 = sadd.s32 %s184, 1
      %p188 = scmp.eq.s32.totalorder %s33, 3
      %p189 = scmp.ne.s32.totalorder %s184, %s186
      %p190 = scmp.eq.s32.totalorder %s33, 0
      %p191 = por %p189, %p190
      %p192 = scmp.ne.s32.totalorder %s184, %s186
      %p193 = scmp.eq.s32.totalorder %s38, 3
      %p194 = por %p192, %p193
      %p195 = scmp.ne.s32.totalorder %s186, %s187
      %p196 = scmp.eq.s32.totalorder %s38, 0
      %p197 = por %p195, %p196
      %p198 = scmp.ne.s32.totalorder %s186, %s187
      %p199 = scmp.eq.s32.totalorder %s39, 3
      %p200 = por %p198, %p199
      %p202 = scmp.ne.s32.totalorder %s187, %s201
      %p203 = scmp.eq.s32.totalorder %s39, 0
      %p204 = por %p202, %p203
      %s206 = sadd.s32 %s205, 1
      %p209 = scmp.eq.s32.totalorder %s33, 3
      %p210 = scmp.ne.s32.totalorder %s205, %s207
      %p211 = scmp.eq.s32.totalorder %s33, 0
      %p212 = por %p210, %p211
      %p213 = scmp.ne.s32.totalorder %s205, %s207
      %p214 = scmp.eq.s32.totalorder %s38, 3
      %p215 = por %p213, %p214
      %p216 = scmp.ne.s32.totalorder %s207, %s208
      %p217 = scmp.eq.s32.totalorder %s38, 0
      %p218 = por %p216, %p217
      %p219 = scmp.ne.s32.totalorder %s207, %s208
      %p220 = scmp.eq.s32.totalorder %s39, 3
      %p221 = por %p219, %p220
      %p223 = scmp.ne.s32.totalorder %s208, %s222
      %p224 = scmp.eq.s32.totalorder %s39, 0
      %p225 = por %p223, %p224
      %s227 = sadd.s32 %s226, 1
      %p230 = scmp.eq.s32.totalorder %s33, 3
      %p231 = scmp.ne.s32.totalorder %s226, %s228
      %p232 = scmp.eq.s32.totalorder %s33, 0
      %p233 = por %p231, %p232
      %p234 = scmp.ne.s32.totalorder %s226, %s228
      %p235 = scmp.eq.s32.totalorder %s38, 3
      %p236 = por %p234, %p235
      %p237 = scmp.ne.s32.totalorder %s228, %s229
      %p238 = scmp.eq.s32.totalorder %s38, 0
      %p239 = por %p237, %p238
      %p240 = scmp.ne.s32.totalorder %s228, %s229
      %p241 = scmp.eq.s32.totalorder %s39, 3
      %p242 = por %p240, %p241
      %p244 = scmp.ne.s32.totalorder %s229, %s243
      %p245 = scmp.eq.s32.totalorder %s39, 0
      %p246 = por %p244, %p245
      %s248 = sadd.s32 %s247, 1
      %p251 = scmp.eq.s32.totalorder %s33, 3
      %p252 = scmp.ne.s32.totalorder %s247, %s249
      %p253 = scmp.eq.s32.totalorder %s33, 0
      %p254 = por %p252, %p253
      %p255 = scmp.ne.s32.totalorder %s247, %s249
      %p256 = scmp.eq.s32.totalorder %s38, 3
      %p257 = por %p255, %p256
      %p258 = scmp.ne.s32.totalorder %s249, %s250
      %p259 = scmp.eq.s32.totalorder %s38, 0
      %p260 = por %p258, %p259
      %p261 = scmp.ne.s32.totalorder %s249, %s250
      %p262 = scmp.eq.s32.totalorder %s39, 3
      %p263 = por %p261, %p262
      %p265 = scmp.ne.s32.totalorder %s250, %s264
      %p266 = scmp.eq.s32.totalorder %s39, 0
      %p267 = por %p265, %p266
      %s269 = sadd.s32 %s268, 1
      %p272 = scmp.eq.s32.totalorder %s33, 3
      %p273 = scmp.ne.s32.totalorder %s268, %s270
      %p274 = scmp.eq.s32.totalorder %s33, 0
      %p275 = por %p273, %p274
      %p276 = scmp.ne.s32.totalorder %s268, %s270
      %p277 = scmp.eq.s32.totalorder %s38, 3
      %p278 = por %p276, %p277
      %p279 = scmp.ne.s32.totalorder %s270, %s271
      %p280 = scmp.eq.s32.totalorder %s38, 0
      %p281 = por %p279, %p280
      %p282 = scmp.ne.s32.totalorder %s270, %s271
      %p283 = scmp.eq.s32.totalorder %s39, 3
      %p284 = por %p282, %p283
      %p286 = scmp.ne.s32.totalorder %s271, %s285
      %p287 = scmp.eq.s32.totalorder %s39, 0
      %p288 = por %p286, %p287
      %s290 = sadd.s32 %s289, 1
      %p293 = scmp.eq.s32.totalorder %s33, 3
      %p294 = scmp.ne.s32.totalorder %s289, %s291
      %p295 = scmp.eq.s32.totalorder %s33, 0
      %p296 = por %p294, %p295
      %p297 = scmp.ne.s32.totalorder %s289, %s291
      %p298 = scmp.eq.s32.totalorder %s38, 3
      %p299 = por %p297, %p298
      %p300 = scmp.ne.s32.totalorder %s291, %s292
      %p301 = scmp.eq.s32.totalorder %s38, 0
      %p302 = por %p300, %p301
      %p303 = scmp.ne.s32.totalorder %s291, %s292
      %p304 = scmp.eq.s32.totalorder %s39, 3
      %p305 = por %p303, %p304
      %p307 = scmp.ne.s32.totalorder %s292, %s306
      %p308 = scmp.eq.s32.totalorder %s39, 0
      %p309 = por %p307, %p308
      %s311 = sadd.s32 %s310, 1
      %p314 = scmp.eq.s32.totalorder %s33, 3
      %p315 = scmp.ne.s32.totalorder %s310, %s312
      %p316 = scmp.eq.s32.totalorder %s33, 0
      %p317 = por %p315, %p316
      %p318 = scmp.ne.s32.totalorder %s310, %s312
      %p319 = scmp.eq.s32.totalorder %s38, 3
      %p320 = por %p318, %p319
      %p321 = scmp.ne.s32.totalorder %s312, %s313
      %p322 = scmp.eq.s32.totalorder %s38, 0
      %p323 = por %p321, %p322
      %p324 = scmp.ne.s32.totalorder %s312, %s313
      %p325 = scmp.eq.s32.totalorder %s39, 3
      %p326 = por %p324, %p325
      %p328 = scmp.ne.s32.totalorder %s313, %s327
      %p329 = scmp.eq.s32.totalorder %s39, 0
      %p330 = por %p328, %p329
      %s332 = sadd.s32 %s331, 1
      %p335 = scmp.eq.s32.totalorder %s33, 3
      %p336 = scmp.ne.s32.totalorder %s331, %s333
      %p337 = scmp.eq.s32.totalorder %s33, 0
      %p338 = por %p336, %p337
      %p339 = scmp.ne.s32.totalorder %s331, %s333
      %p340 = scmp.eq.s32.totalorder %s38, 3
      %p341 = por %p339, %p340
      %p342 = scmp.ne.s32.totalorder %s333, %s334
      %p343 = scmp.eq.s32.totalorder %s38, 0
      %p344 = por %p342, %p343
      %p345 = scmp.ne.s32.totalorder %s333, %s334
      %p346 = scmp.eq.s32.totalorder %s39, 3
      %p347 = por %p345, %p346
      %p349 = scmp.ne.s32.totalorder %s334, %s348
      %p350 = scmp.eq.s32.totalorder %s39, 0
      %p351 = por %p349, %p350
      %s353 = sadd.s32 %s352, 1
      %p356 = scmp.eq.s32.totalorder %s33, 3
      %p357 = scmp.ne.s32.totalorder %s352, %s354
      %p358 = scmp.eq.s32.totalorder %s33, 0
      %p359 = por %p357, %p358
      %p360 = scmp.ne.s32.totalorder %s352, %s354
      %p361 = scmp.eq.s32.totalorder %s38, 3
      %p362 = por %p360, %p361
      %p363 = scmp.ne.s32.totalorder %s354, %s355
      %p364 = scmp.eq.s32.totalorder %s38, 0
      %p365 = por %p363, %p364
      %p366 = scmp.ne.s32.totalorder %s354, %s355
      %p367 = scmp.eq.s32.totalorder %s39, 3
      %p368 = por %p366, %p367
      %p370 = scmp.ne.s32.totalorder %s355, %s369
      %p371 = scmp.eq.s32.totalorder %s39, 0
      %p372 = por %p370, %p371
      %s374 = sadd.s32 %s373, 1
      %p377 = scmp.eq.s32.totalorder %s33, 3
      %p378 = scmp.ne.s32.totalorder %s373, %s375
      %p379 = scmp.eq.s32.totalorder %s33, 0
      %p380 = por %p378, %p379
      %p381 = scmp.ne.s32.totalorder %s373, %s375
      %p382 = scmp.eq.s32.totalorder %s38, 3
      %p383 = por %p381, %p382
      %p384 = scmp.ne.s32.totalorder %s375, %s376
      %p385 = scmp.eq.s32.totalorder %s38, 0
      %p386 = por %p384, %p385
      %p387 = scmp.ne.s32.totalorder %s375, %s376
      %p388 = scmp.eq.s32.totalorder %s39, 3
      %p389 = por %p387, %p388
      %p391 = scmp.ne.s32.totalorder %s376, %s390
      %p392 = scmp.eq.s32.totalorder %s39, 0
      %p393 = por %p391, %p392
      %s395 = sadd.s32 %s394, 1
      %p398 = scmp.eq.s32.totalorder %s33, 3
      %p399 = scmp.ne.s32.totalorder %s394, %s396
      %p400 = scmp.eq.s32.totalorder %s33, 0
      %p401 = por %p399, %p400
      %p402 = scmp.ne.s32.totalorder %s394, %s396
      %p403 = scmp.eq.s32.totalorder %s38, 3
      %p404 = por %p402, %p403
      %p405 = scmp.ne.s32.totalorder %s396, %s397
      %p406 = scmp.eq.s32.totalorder %s38, 0
      %p407 = por %p405, %p406
      %p408 = scmp.ne.s32.totalorder %s396, %s397
      %p409 = scmp.eq.s32.totalorder %s39, 3
      %p410 = por %p408, %p409
      %p412 = scmp.ne.s32.totalorder %s397, %s411
      %p413 = scmp.eq.s32.totalorder %s39, 0
      %p414 = por %p412, %p413
      %s415 = ssub.s32 %s40, %s52
      %s416 = ssub.s32 %s41, %s48
      %s417 = sor.u32 %s415, %s416
      %p418 = scmp.eq.s32.totalorder %s417, 0
      %s420 = sadd.s32 %s419, 1
      %s421 = scalar_select %p418, %s419, %s420
      %p424 = pneg %p418
      %p425 = scmp.eq.s32.totalorder %s33, 3
      %p426 = por %p424, %p425
      %p427 = scmp.ne.s32.totalorder %s419, %s422
      %p428 = scmp.eq.s32.totalorder %s33, 0
      %p429 = por %p427, %p428
      %p430 = scmp.ne.s32.totalorder %s419, %s422
      %p431 = scmp.eq.s32.totalorder %s38, 3
      %p432 = por %p430, %p431
      %p433 = scmp.ne.s32.totalorder %s422, %s423
      %p434 = scmp.eq.s32.totalorder %s38, 0
      %p435 = por %p433, %p434
      %p436 = scmp.ne.s32.totalorder %s422, %s423
      %p437 = scmp.eq.s32.totalorder %s39, 3
      %p438 = por %p436, %p437
      %p440 = scmp.ne.s32.totalorder %s423, %s439
      %p441 = scmp.eq.s32.totalorder %s39, 0
      %p442 = por %p440, %p441
      %p443 = scmp.le.s32.totalorder 1, %s33
      %p444 = scmp.lt.s32.totalorder %s33, 5
      %p445 = pnand %p443, %p444
      %p446 = pneg %p445
      // Predicated region
      $region9: #{tpu_custom_call.1} parent=5 // pred_check
        _
      $region10: #{tpu_custom_call.1} parent=5 // pred_check_branch
        %448 = sbr.rel (%p445) target = $region12
      $region11: #{tpu_custom_call.1} parent=5 // pred_region
        %s449 = ssub.s32 %s33, 1
        // Predicated region
        $region13: #{tpu_custom_call.1} parent=11 // pred_check
          %p450 = pneg %p92
        $region14: #{tpu_custom_call.1} parent=11 // pred_check_branch
          %452 = sbr.rel (%p450) target = $region16
        $region15: #{tpu_custom_call.1} parent=11 // pred_region
          _
        $region16: #{tpu_custom_call.1} parent=11 // pred_fallthru
          _
        // Predicated region
        $region17: #{tpu_custom_call.1} parent=11 // pred_check
          %p453 = pneg %p113
        $region18: #{tpu_custom_call.1} parent=11 // pred_check_branch
          %455 = sbr.rel (%p453) target = $region20
        $region19: #{tpu_custom_call.1} parent=11 // pred_region
          %s457 = ssub.s32 16, 16
          %458 = vsyncadd [#allocation8], %s457
          %s460 = sshll.u32 [#allocation7], 4
          %s461 = int_to_ptr.vmem [resolvable:$true] %s460
          %463 = dma.hbm_to_vmem [thread:$0]  %s2, 16, %s461, [#allocation8]
        $region20: #{tpu_custom_call.1} parent=11 // pred_fallthru
          _
        // Predicated region
        $region21: #{tpu_custom_call.1} parent=11 // pred_check
          %p464 = pneg %p134
        $region22: #{tpu_custom_call.1} parent=11 // pred_check_branch
          %466 = sbr.rel (%p464) target = $region24
        $region23: #{tpu_custom_call.1} parent=11 // pred_region
          %s468 = ssub.s32 1024, 1024
          %469 = vsyncadd [#allocation8], %s468
          %s470 = sshll.u32 [#allocation9], 4
          %s471 = int_to_ptr.vmem [resolvable:$true] %s470
          %476 = dma.hbm_to_vmem [thread:$0]  %s3, 1024, %s471, [#allocation8], 64, 64, 4
        $region24: #{tpu_custom_call.1} parent=11 // pred_fallthru
          _
        // Predicated region
        $region25: #{tpu_custom_call.1} parent=11 // pred_check
          %p477 = pneg %p155
        $region26: #{tpu_custom_call.1} parent=11 // pred_check_branch
          %479 = sbr.rel (%p477) target = $region28
        $region27: #{tpu_custom_call.1} parent=11 // pred_region
          _
        $region28: #{tpu_custom_call.1} parent=11 // pred_fallthru
          _
        // Predicated region
        $region29: #{tpu_custom_call.1} parent=11 // pred_check
          %p480 = pneg %p176
        $region30: #{tpu_custom_call.1} parent=11 // pred_check_branch
          %482 = sbr.rel (%p480) target = $region32
        $region31: #{tpu_custom_call.1} parent=11 // pred_region
          %s484 = ssub.s32 1024, 1024
          %485 = vsyncadd [#allocation11], %s484
          %s486 = sshll.u32 [#allocation10], 4
          %s487 = int_to_ptr.vmem [resolvable:$true] %s486
          %492 = dma.hbm_to_vmem [thread:$0]  %s5, 1024, %s487, [#allocation11], 64, 64, 4
        $region32: #{tpu_custom_call.1} parent=11 // pred_fallthru
          _
        // Predicated region
        $region33: #{tpu_custom_call.1} parent=11 // pred_check
          %p493 = pneg %p197
        $region34: #{tpu_custom_call.1} parent=11 // pred_check_branch
          %495 = sbr.rel (%p493) target = $region36
        $region35: #{tpu_custom_call.1} parent=11 // pred_region
          _
        $region36: #{tpu_custom_call.1} parent=11 // pred_fallthru
          _
        // Predicated region
        $region37: #{tpu_custom_call.1} parent=11 // pred_check
          %p496 = pneg %p218
        $region38: #{tpu_custom_call.1} parent=11 // pred_check_branch
          %498 = sbr.rel (%p496) target = $region40
        $region39: #{tpu_custom_call.1} parent=11 // pred_region
          %s500 = ssub.s32 1024, 1024
          %501 = vsyncadd [#allocation11], %s500
          %s502 = sshll.u32 [#allocation12], 4
          %s503 = int_to_ptr.vmem [resolvable:$true] %s502
          %508 = dma.hbm_to_vmem [thread:$0]  %s7, 1024, %s503, [#allocation11], 64, 64, 4
        $region40: #{tpu_custom_call.1} parent=11 // pred_fallthru
          _
        // Predicated region
        $region41: #{tpu_custom_call.1} parent=11 // pred_check
          %p509 = pneg %p239
        $region42: #{tpu_custom_call.1} parent=11 // pred_check_branch
          %511 = sbr.rel (%p509) target = $region44
        $region43: #{tpu_custom_call.1} parent=11 // pred_region
          _
        $region44: #{tpu_custom_call.1} parent=11 // pred_fallthru
          _
        // Predicated region
        $region45: #{tpu_custom_call.1} parent=11 // pred_check
          %p512 = pneg %p260
        $region46: #{tpu_custom_call.1} parent=11 // pred_check_branch
          %514 = sbr.rel (%p512) target = $region48
        $region47: #{tpu_custom_call.1} parent=11 // pred_region
          %s516 = ssub.s32 1024, 1024
          %517 = vsyncadd [#allocation14], %s516
          %s518 = sshll.u32 [#allocation13], 4
          %s519 = int_to_ptr.vmem [resolvable:$true] %s518
          %524 = dma.hbm_to_vmem [thread:$0]  %s9, 1024, %s519, [#allocation14], 64, 64, 4
        $region48: #{tpu_custom_call.1} parent=11 // pred_fallthru
          _
        // Predicated region
        $region49: #{tpu_custom_call.1} parent=11 // pred_check
          %p525 = pneg %p281
        $region50: #{tpu_custom_call.1} parent=11 // pred_check_branch
          %527 = sbr.rel (%p525) target = $region52
        $region51: #{tpu_custom_call.1} parent=11 // pred_region
          _
        $region52: #{tpu_custom_call.1} parent=11 // pred_fallthru
          _
        // Predicated region
        $region53: #{tpu_custom_call.1} parent=11 // pred_check
          %p528 = pneg %p302
        $region54: #{tpu_custom_call.1} parent=11 // pred_check_branch
          %530 = sbr.rel (%p528) target = $region56
        $region55: #{tpu_custom_call.1} parent=11 // pred_region
          _
        $region56: #{tpu_custom_call.1} parent=11 // pred_fallthru
          _
        // Predicated region
        $region57: #{tpu_custom_call.1} parent=11 // pred_check
          %p531 = pneg %p323
        $region58: #{tpu_custom_call.1} parent=11 // pred_check_branch
          %533 = sbr.rel (%p531) target = $region60
        $region59: #{tpu_custom_call.1} parent=11 // pred_region
          _
        $region60: #{tpu_custom_call.1} parent=11 // pred_fallthru
          _
        // Predicated region
        $region61: #{tpu_custom_call.1} parent=11 // pred_check
          %p534 = pneg %p344
        $region62: #{tpu_custom_call.1} parent=11 // pred_check_branch
          %536 = sbr.rel (%p534) target = $region64
        $region63: #{tpu_custom_call.1} parent=11 // pred_region
          %s538 = ssub.s32 2048, 2048
          %539 = vsyncadd [#allocation14], %s538
          %s540 = sshll.u32 [#allocation15], 4
          %s541 = int_to_ptr.vmem [resolvable:$true] %s540
          %546 = dma.hbm_to_vmem [thread:$0]  %s13, 2048, %s541, [#allocation14], 128, 128, 8
        $region64: #{tpu_custom_call.1} parent=11 // pred_fallthru
          _
        // Predicated region
        $region65: #{tpu_custom_call.1} parent=11 // pred_check
          %p547 = pneg %p365
        $region66: #{tpu_custom_call.1} parent=11 // pred_check_branch
          %549 = sbr.rel (%p547) target = $region68
        $region67: #{tpu_custom_call.1} parent=11 // pred_region
          _
        $region68: #{tpu_custom_call.1} parent=11 // pred_fallthru
          _
        // Predicated region
        $region69: #{tpu_custom_call.1} parent=11 // pred_check
          %p550 = pneg %p386
        $region70: #{tpu_custom_call.1} parent=11 // pred_check_branch
          %552 = sbr.rel (%p550) target = $region72
        $region71: #{tpu_custom_call.1} parent=11 // pred_region
          %s554 = ssub.s32 2048, 2048
          %555 = vsyncadd [#allocation17], %s554
          %s556 = sshll.u32 [#allocation16], 4
          %s557 = int_to_ptr.vmem [resolvable:$true] %s556
          %562 = dma.hbm_to_vmem [thread:$0]  %s15, 2048, %s557, [#allocation17], 64, 64, 4
        $region72: #{tpu_custom_call.1} parent=11 // pred_fallthru
          _
        // Predicated region
        $region73: #{tpu_custom_call.1} parent=11 // pred_check
          %p563 = pneg %p407
        $region74: #{tpu_custom_call.1} parent=11 // pred_check_branch
          %565 = sbr.rel (%p563) target = $region76
        $region75: #{tpu_custom_call.1} parent=11 // pred_region
          _
        $region76: #{tpu_custom_call.1} parent=11 // pred_fallthru
          _
      $region12: #{tpu_custom_call.1} parent=5 // pred_fallthru
        _
      %p566 = scmp.lt.s32.totalorder %s33, 4
      // Predicated region
      $region77: #{tpu_custom_call.1} parent=5 // pred_check
        %p567 = pneg %p566
      $region78: #{tpu_custom_call.1} parent=5 // pred_check_branch
        %569 = sbr.rel (%p567) target = $region80
      $region79: #{tpu_custom_call.1} parent=5 // pred_region
        // Predicated region
        $region81: #{tpu_custom_call.1} parent=79 // pred_check
          %p570 = pneg %p65
        $region82: #{tpu_custom_call.1} parent=79 // pred_check_branch
          %572 = sbr.rel (%p570) target = $region84
        $region83: #{tpu_custom_call.1} parent=79 // pred_region
          %s573 = sand.u32 %s55, 1
          %s574 = scalar_lea.sflag [#allocation5], %s573
          %s575 = sand.u32 %s55, 1
          %s576 = smul.addr %s575, 128
          %s577 = scalar_lea.vmem [#allocation4], %s576
          %s579 = ssub.s32 2048, 2048
          %580 = vsyncadd %s574, %s579
          %s581 = smul.addr %s40, 16
          %s582 = smul.addr %s581, 128
          %s583 = scalar_lea.hbm %s0, %s582
          %s584 = sshll.u32 %s577, 4
          %s585 = int_to_ptr.vmem [resolvable:$true] %s584
          %590 = dma.hbm_to_vmem [thread:$0]  %s583, 2048, %s585, %s574, 128, 128, 8
        $region84: #{tpu_custom_call.1} parent=79 // pred_fallthru
          _
      $region80: #{tpu_custom_call.1} parent=5 // pred_fallthru
        _
      %p591 = scmp.le.s32.totalorder 1, %s33
      %p592 = scmp.lt.s32.totalorder %s33, 5
      %p593 = pnand %p591, %p592
      %p594 = pneg %p593
      // Predicated region
      $region85: #{tpu_custom_call.1} parent=5 // pred_check
        _
      $region86: #{tpu_custom_call.1} parent=5 // pred_check_branch
        %596 = sbr.rel (%p593) target = $region88
      $region87: #{tpu_custom_call.1} parent=5 // pred_region
        %s597 = ssub.s32 %s33, 1
        %s598 = sand.u32 %s58, 1
        %s599 = scalar_lea.sflag [#allocation5], %s598
        %s600 = sand.u32 %s58, 1
        %s601 = smul.addr %s600, 128
        %s602 = scalar_lea.vmem [#allocation4], %s601
        // Predicated region
        $region89: #{tpu_custom_call.1} parent=87 // pred_check
          %p603 = pneg %p71
        $region90: #{tpu_custom_call.1} parent=87 // pred_check_branch
          %605 = sbr.rel (%p603) target = $region92
        $region91: #{tpu_custom_call.1} parent=87 // pred_region
          %606 = dma.done %s599, 2048
        $region92: #{tpu_custom_call.1} parent=87 // pred_fallthru
          _
        // Predicated region
        $region93: #{tpu_custom_call.1} parent=87 // pred_check
          %p607 = pneg %p113
        $region94: #{tpu_custom_call.1} parent=87 // pred_check_branch
          %609 = sbr.rel (%p607) target = $region96
        $region95: #{tpu_custom_call.1} parent=87 // pred_region
          %610 = dma.done [#allocation8], 16
        $region96: #{tpu_custom_call.1} parent=87 // pred_fallthru
          _
        // Predicated region
        $region97: #{tpu_custom_call.1} parent=87 // pred_check
          %p611 = pneg %p134
        $region98: #{tpu_custom_call.1} parent=87 // pred_check_branch
          %613 = sbr.rel (%p611) target = $region100
        $region99: #{tpu_custom_call.1} parent=87 // pred_region
          %614 = dma.done [#allocation8], 1024
        $region100: #{tpu_custom_call.1} parent=87 // pred_fallthru
          _
        // Predicated region
        $region101: #{tpu_custom_call.1} parent=87 // pred_check
          %p615 = pneg %p176
        $region102: #{tpu_custom_call.1} parent=87 // pred_check_branch
          %617 = sbr.rel (%p615) target = $region104
        $region103: #{tpu_custom_call.1} parent=87 // pred_region
          %618 = dma.done [#allocation11], 1024
        $region104: #{tpu_custom_call.1} parent=87 // pred_fallthru
          _
        // Predicated region
        $region105: #{tpu_custom_call.1} parent=87 // pred_check
          %p619 = pneg %p218
        $region106: #{tpu_custom_call.1} parent=87 // pred_check_branch
          %621 = sbr.rel (%p619) target = $region108
        $region107: #{tpu_custom_call.1} parent=87 // pred_region
          %622 = dma.done [#allocation11], 1024
        $region108: #{tpu_custom_call.1} parent=87 // pred_fallthru
          _
        // Predicated region
        $region109: #{tpu_custom_call.1} parent=87 // pred_check
          %p623 = pneg %p260
        $region110: #{tpu_custom_call.1} parent=87 // pred_check_branch
          %625 = sbr.rel (%p623) target = $region112
        $region111: #{tpu_custom_call.1} parent=87 // pred_region
          %626 = dma.done [#allocation14], 1024
        $region112: #{tpu_custom_call.1} parent=87 // pred_fallthru
          _
        // Predicated region
        $region113: #{tpu_custom_call.1} parent=87 // pred_check
          %p627 = pneg %p344
        $region114: #{tpu_custom_call.1} parent=87 // pred_check_branch
          %629 = sbr.rel (%p627) target = $region116
        $region115: #{tpu_custom_call.1} parent=87 // pred_region
          %630 = dma.done [#allocation14], 2048
        $region116: #{tpu_custom_call.1} parent=87 // pred_fallthru
          _
        // Predicated region
        $region117: #{tpu_custom_call.1} parent=87 // pred_check
          %p631 = pneg %p386
        $region118: #{tpu_custom_call.1} parent=87 // pred_check_branch
          %633 = sbr.rel (%p631) target = $region120
        $region119: #{tpu_custom_call.1} parent=87 // pred_region
          %634 = dma.done [#allocation17], 2048
        $region120: #{tpu_custom_call.1} parent=87 // pred_fallthru
          _
        %s635 = sand.u32 %s58, 1
        %s636 = scalar_lea.sflag [#allocation5], %s635
        %s637 = sand.u32 %s58, 1
        %s638 = smul.addr %s637, 128
        %s639 = scalar_lea.vmem [#allocation4], %s638
        %p640 = pneg %p71
        %p641 = pneg %p68
        %p642 = pneg %p92
        %p643 = pneg %p89
        %p644 = pneg %p113
        %p645 = pneg %p110
        %p646 = pneg %p134
        %p647 = pneg %p131
        %p648 = pneg %p155
        %p649 = pneg %p152
        %p650 = pneg %p176
        %p651 = pneg %p173
        %p652 = pneg %p197
        %p653 = pneg %p194
        %p654 = pneg %p218
        %p655 = pneg %p215
        %p656 = pneg %p239
        %p657 = pneg %p236
        %p658 = pneg %p260
        %p659 = pneg %p257
        %p660 = pneg %p281
        %p661 = pneg %p278
        %p662 = pneg %p302
        %p663 = pneg %p299
        %p664 = pneg %p323
        %p665 = pneg %p320
        %p666 = pneg %p344
        %p667 = pneg %p341
        %p668 = pneg %p365
        %p669 = pneg %p362
        %p670 = pneg %p386
        %p671 = pneg %p383
        %p672 = pneg %p407
        %p673 = pneg %p404
        %p674 = pneg %p435
        %p675 = pneg %p432
        %s676 = sand.u32 %s422, 1
        %s677 = scalar_lea.sflag [#allocation6], %s676
        %s678 = sand.u32 %s422, 1
        %s679 = smul.addr %s678, 64
        %s680 = scalar_lea.vmem [#allocation18], %s679
        %s681 = smul.u32 8, %s43
        %p683 = scmp.eq.s32.totalorder %s43, 0
        // Predicated region
        $region121: #{tpu_custom_call.1} parent=87 // pred_check
          %p684 = pneg %p683
        $region122: #{tpu_custom_call.1} parent=87 // pred_check_branch
          %686 = sbr.rel (%p684) target = $region124
        $region123: #{tpu_custom_call.1} parent=87 // pred_region
          %v687 = vld [vmem:[%s602] sm:$0xff]
          %v688 = vld [vmem:[%s602 + $0x8] sm:$0xff]
          %v689 = vld [vmem:[%s602 + $0x10] sm:$0xff]
          %v690 = vld [vmem:[%s602 + $0x18] sm:$0xff]
          %v691 = vld [vmem:[%s602 + $0x20] sm:$0xff]
          %v692 = vld [vmem:[%s602 + $0x28] sm:$0xff]
          %v693 = vld [vmem:[%s602 + $0x30] sm:$0xff]
          %v694 = vld [vmem:[%s602 + $0x38] sm:$0xff]
          %v695 = vld [vmem:[%s602 + $0x40] sm:$0xff]
          %v696 = vld [vmem:[%s602 + $0x48] sm:$0xff]
          %v697 = vld [vmem:[%s602 + $0x50] sm:$0xff]
          %v698 = vld [vmem:[%s602 + $0x58] sm:$0xff]
          %v699 = vld [vmem:[%s602 + $0x60] sm:$0xff]
          %v700 = vld [vmem:[%s602 + $0x68] sm:$0xff]
          %v701 = vld [vmem:[%s602 + $0x70] sm:$0xff]
          %v702 = vld [vmem:[%s602 + $0x78] sm:$0xff]
          %703 = vadd.xlane.f32.xlu0 %v687
          %v704 = vpop.xlane.xlu0 %703
          %705 = vadd.xlane.f32.xlu0 %v688
          %v706 = vpop.xlane.xlu0 %705
          %707 = vadd.xlane.f32.xlu0 %v689
          %v708 = vpop.xlane.xlu0 %707
          %709 = vadd.xlane.f32.xlu0 %v690
          %v710 = vpop.xlane.xlu0 %709
          %711 = vadd.xlane.f32.xlu0 %v691
          %v712 = vpop.xlane.xlu0 %711
          %713 = vadd.xlane.f32.xlu0 %v692
          %v714 = vpop.xlane.xlu0 %713
          %715 = vadd.xlane.f32.xlu0 %v693
          %v716 = vpop.xlane.xlu0 %715
          %717 = vadd.xlane.f32.xlu0 %v694
          %v718 = vpop.xlane.xlu0 %717
          %719 = vadd.xlane.f32.xlu0 %v695
          %v720 = vpop.xlane.xlu0 %719
          %721 = vadd.xlane.f32.xlu0 %v696
          %v722 = vpop.xlane.xlu0 %721
          %723 = vadd.xlane.f32.xlu0 %v697
          %v724 = vpop.xlane.xlu0 %723
          %725 = vadd.xlane.f32.xlu0 %v698
          %v726 = vpop.xlane.xlu0 %725
          %727 = vadd.xlane.f32.xlu0 %v699
          %v728 = vpop.xlane.xlu0 %727
          %729 = vadd.xlane.f32.xlu0 %v700
          %v730 = vpop.xlane.xlu0 %729
          %731 = vadd.xlane.f32.xlu0 %v701
          %v732 = vpop.xlane.xlu0 %731
          %733 = vadd.xlane.f32.xlu0 %v702
          %v734 = vpop.xlane.xlu0 %733
          %v735 = vrcp.pop 128.0
          %v736 = vmul.f32 %v704, %v735
          %v737 = vmul.f32 %v706, %v735
          %v738 = vmul.f32 %v708, %v735
          %v739 = vmul.f32 %v710, %v735
          %v740 = vmul.f32 %v712, %v735
          %v741 = vmul.f32 %v714, %v735
          %v742 = vmul.f32 %v716, %v735
          %v743 = vmul.f32 %v718, %v735
          %v744 = vmul.f32 %v720, %v735
          %v745 = vmul.f32 %v722, %v735
          %v746 = vmul.f32 %v724, %v735
          %v747 = vmul.f32 %v726, %v735
          %v748 = vmul.f32 %v728, %v735
          %v749 = vmul.f32 %v730, %v735
          %v750 = vmul.f32 %v732, %v735
          %v751 = vmul.f32 %v734, %v735
          %v752 = vsub.f32 %v687, %v736
          %v753 = vsub.f32 %v688, %v737
          %v754 = vsub.f32 %v689, %v738
          %v755 = vsub.f32 %v690, %v739
          %v756 = vsub.f32 %v691, %v740
          %v757 = vsub.f32 %v692, %v741
          %v758 = vsub.f32 %v693, %v742
          %v759 = vsub.f32 %v694, %v743
          %v760 = vsub.f32 %v695, %v744
          %v761 = vsub.f32 %v696, %v745
          %v762 = vsub.f32 %v697, %v746
          %v763 = vsub.f32 %v698, %v747
          %v764 = vsub.f32 %v699, %v748
          %v765 = vsub.f32 %v700, %v749
          %v766 = vsub.f32 %v701, %v750
          %v767 = vsub.f32 %v702, %v751
          %v768 = vmul.f32 %v752, %v752
          %v769 = vmul.f32 %v753, %v753
          %v770 = vmul.f32 %v754, %v754
          %v771 = vmul.f32 %v755, %v755
          %v772 = vmul.f32 %v756, %v756
          %v773 = vmul.f32 %v757, %v757
          %v774 = vmul.f32 %v758, %v758
          %v775 = vmul.f32 %v759, %v759
          %v776 = vmul.f32 %v760, %v760
          %v777 = vmul.f32 %v761, %v761
          %v778 = vmul.f32 %v762, %v762
          %v779 = vmul.f32 %v763, %v763
          %v780 = vmul.f32 %v764, %v764
          %v781 = vmul.f32 %v765, %v765
          %v782 = vmul.f32 %v766, %v766
          %v783 = vmul.f32 %v767, %v767
          %784 = vadd.xlane.f32.xlu0 %v768
          %v785 = vpop.xlane.xlu0 %784
          %786 = vadd.xlane.f32.xlu0 %v769
          %v787 = vpop.xlane.xlu0 %786
          %788 = vadd.xlane.f32.xlu0 %v770
          %v789 = vpop.xlane.xlu0 %788
          %790 = vadd.xlane.f32.xlu0 %v771
          %v791 = vpop.xlane.xlu0 %790
          %792 = vadd.xlane.f32.xlu0 %v772
          %v793 = vpop.xlane.xlu0 %792
          %794 = vadd.xlane.f32.xlu0 %v773
          %v795 = vpop.xlane.xlu0 %794
          %796 = vadd.xlane.f32.xlu0 %v774
          %v797 = vpop.xlane.xlu0 %796
          %798 = vadd.xlane.f32.xlu0 %v775
          %v799 = vpop.xlane.xlu0 %798
          %800 = vadd.xlane.f32.xlu0 %v776
          %v801 = vpop.xlane.xlu0 %800
          %802 = vadd.xlane.f32.xlu0 %v777
          %v803 = vpop.xlane.xlu0 %802
          %804 = vadd.xlane.f32.xlu0 %v778
          %v805 = vpop.xlane.xlu0 %804
          %806 = vadd.xlane.f32.xlu0 %v779
          %v807 = vpop.xlane.xlu0 %806
          %808 = vadd.xlane.f32.xlu0 %v780
          %v809 = vpop.xlane.xlu0 %808
          %810 = vadd.xlane.f32.xlu0 %v781
          %v811 = vpop.xlane.xlu0 %810
          %812 = vadd.xlane.f32.xlu0 %v782
          %v813 = vpop.xlane.xlu0 %812
          %814 = vadd.xlane.f32.xlu0 %v783
          %v815 = vpop.xlane.xlu0 %814
          %v816 = vmul.f32 %v785, %v735
          %v817 = vmul.f32 %v787, %v735
          %v818 = vmul.f32 %v789, %v735
          %v819 = vmul.f32 %v791, %v735
          %v820 = vmul.f32 %v793, %v735
          %v821 = vmul.f32 %v795, %v735
          %v822 = vmul.f32 %v797, %v735
          %v823 = vmul.f32 %v799, %v735
          %v824 = vmul.f32 %v801, %v735
          %v825 = vmul.f32 %v803, %v735
          %v826 = vmul.f32 %v805, %v735
          %v827 = vmul.f32 %v807, %v735
          %v828 = vmul.f32 %v809, %v735
          %v829 = vmul.f32 %v811, %v735
          %v830 = vmul.f32 %v813, %v735
          %v831 = vmul.f32 %v815, %v735
          %v832 = vadd.f32 %v816, 1e-05
          %v833 = vadd.f32 %v817, 1e-05
          %v834 = vadd.f32 %v818, 1e-05
          %v835 = vadd.f32 %v819, 1e-05
          %v836 = vadd.f32 %v820, 1e-05
          %v837 = vadd.f32 %v821, 1e-05
          %v838 = vadd.f32 %v822, 1e-05
          %v839 = vadd.f32 %v823, 1e-05
          %v840 = vadd.f32 %v824, 1e-05
          %v841 = vadd.f32 %v825, 1e-05
          %v842 = vadd.f32 %v826, 1e-05
          %v843 = vadd.f32 %v827, 1e-05
          %v844 = vadd.f32 %v828, 1e-05
          %v845 = vadd.f32 %v829, 1e-05
          %v846 = vadd.f32 %v830, 1e-05
          %v847 = vadd.f32 %v831, 1e-05
          %v848 = vrsqrt.pop %v832
          %v849 = vrsqrt.pop %v833
          %v850 = vrsqrt.pop %v834
          %v851 = vrsqrt.pop %v835
          %v852 = vrsqrt.pop %v836
          %v853 = vrsqrt.pop %v837
          %v854 = vrsqrt.pop %v838
          %v855 = vrsqrt.pop %v839
          %v856 = vrsqrt.pop %v840
          %v857 = vrsqrt.pop %v841
          %v858 = vrsqrt.pop %v842
          %v859 = vrsqrt.pop %v843
          %v860 = vrsqrt.pop %v844
          %v861 = vrsqrt.pop %v845
          %v862 = vrsqrt.pop %v846
          %v863 = vrsqrt.pop %v847
          %v864 = vmul.f32 %v752, %v848
          %v865 = vmul.f32 %v753, %v849
          %v866 = vmul.f32 %v754, %v850
          %v867 = vmul.f32 %v755, %v851
          %v868 = vmul.f32 %v756, %v852
          %v869 = vmul.f32 %v757, %v853
          %v870 = vmul.f32 %v758, %v854
          %v871 = vmul.f32 %v759, %v855
          %v872 = vmul.f32 %v760, %v856
          %v873 = vmul.f32 %v761, %v857
          %v874 = vmul.f32 %v762, %v858
          %v875 = vmul.f32 %v763, %v859
          %v876 = vmul.f32 %v764, %v860
          %v877 = vmul.f32 %v765, %v861
          %v878 = vmul.f32 %v766, %v862
          %v879 = vmul.f32 %v767, %v863
          %v880 = vld [vmem:[%s1] sm:$0x1]
          %v882 = vlaneseq
          %v883 = vshrl.u32 %v882, 7
          %v884 = vsub.s32 0, %v883
          %v885 = vrot.slane %v880, %v884
          %v887 = vmul.f32 %v864, %v885
          %v888 = vmul.f32 %v865, %v885
          %v889 = vmul.f32 %v866, %v885
          %v890 = vmul.f32 %v867, %v885
          %v891 = vmul.f32 %v868, %v885
          %v892 = vmul.f32 %v869, %v885
          %v893 = vmul.f32 %v870, %v885
          %v894 = vmul.f32 %v871, %v885
          %v895 = vmul.f32 %v872, %v885
          %v896 = vmul.f32 %v873, %v885
          %v897 = vmul.f32 %v874, %v885
          %v898 = vmul.f32 %v875, %v885
          %v899 = vmul.f32 %v876, %v885
          %v900 = vmul.f32 %v877, %v885
          %v901 = vmul.f32 %v878, %v885
          %v902 = vmul.f32 %v879, %v885
          %v903 = vld [vmem:[#allocation7] sm:$0x1]
          %v905 = vlaneseq
          %v906 = vshrl.u32 %v905, 7
          %v907 = vsub.s32 0, %v906
          %v908 = vrot.slane %v903, %v907
          %v910 = vadd.f32 %v887, %v908
          %v911 = vadd.f32 %v888, %v908
          %v912 = vadd.f32 %v889, %v908
          %v913 = vadd.f32 %v890, %v908
          %v914 = vadd.f32 %v891, %v908
          %v915 = vadd.f32 %v892, %v908
          %v916 = vadd.f32 %v893, %v908
          %v917 = vadd.f32 %v894, %v908
          %v918 = vadd.f32 %v895, %v908
          %v919 = vadd.f32 %v896, %v908
          %v920 = vadd.f32 %v897, %v908
          %v921 = vadd.f32 %v898, %v908
          %v922 = vadd.f32 %v899, %v908
          %v923 = vadd.f32 %v900, %v908
          %v924 = vadd.f32 %v901, %v908
          %v925 = vadd.f32 %v902, %v908
          %v926 = vpack.c.bf16 %v911, %v910
          %v927 = vpack.c.bf16 %v913, %v912
          %v928 = vpack.c.bf16 %v915, %v914
          %v929 = vpack.c.bf16 %v917, %v916
          %v930 = vpack.c.bf16 %v919, %v918
          %v931 = vpack.c.bf16 %v921, %v920
          %v932 = vpack.c.bf16 %v923, %v922
          %v933 = vpack.c.bf16 %v925, %v924
          %v934 = vld [vmem:[#allocation10] sm:$0xf]
          %v935 = vld [vmem:[#allocation10 + $0x4] sm:$0xf]
          %v936 = vld [vmem:[#allocation10 + $0x8] sm:$0xf]
          %v937 = vld [vmem:[#allocation10 + $0xc] sm:$0xf]
          %v938 = vld [vmem:[#allocation10 + $0x10] sm:$0xf]
          %v939 = vld [vmem:[#allocation10 + $0x14] sm:$0xf]
          %v940 = vld [vmem:[#allocation10 + $0x18] sm:$0xf]
          %v941 = vld [vmem:[#allocation10 + $0x1c] sm:$0xf]
          %v942 = vld [vmem:[#allocation10 + $0x20] sm:$0xf]
          %v943 = vld [vmem:[#allocation10 + $0x24] sm:$0xf]
          %v944 = vld [vmem:[#allocation10 + $0x28] sm:$0xf]
          %v945 = vld [vmem:[#allocation10 + $0x2c] sm:$0xf]
          %v946 = vld [vmem:[#allocation10 + $0x30] sm:$0xf]
          %v947 = vld [vmem:[#allocation10 + $0x34] sm:$0xf]
          %v948 = vld [vmem:[#allocation10 + $0x38] sm:$0xf]
          %v949 = vld [vmem:[#allocation10 + $0x3c] sm:$0xf]
          %v950 = vld [vmem:[%s6] sm:$0x1]
          %v952 = vlaneseq
          %v953 = vshrl.u32 %v952, 7
          %v954 = vsub.s32 0, %v953
          %v955 = vrot.slane %v950, %v954
          %v973 = vunpack.c.l.b16 %v934
          %v974 = vunpack.c.l.b16 %v935
          %v975 = vunpack.c.l.b16 %v936
          %v976 = vunpack.c.l.b16 %v937
          %v977 = vunpack.c.l.b16 %v938
          %v978 = vunpack.c.l.b16 %v939
          %v979 = vunpack.c.l.b16 %v940
          %v980 = vunpack.c.l.b16 %v941
          %v981 = vunpack.c.l.b16 %v942
          %v982 = vunpack.c.l.b16 %v943
          %v983 = vunpack.c.l.b16 %v944
          %v984 = vunpack.c.l.b16 %v945
          %v985 = vunpack.c.l.b16 %v946
          %v986 = vunpack.c.l.b16 %v947
          %v987 = vunpack.c.l.b16 %v948
          %v988 = vunpack.c.l.b16 %v949
          %v989 = vpack.c.b16 %v974, %v973
          %v990 = vpack.c.b16 %v976, %v975
          %v991 = vpack.c.b16 %v978, %v977
          %v992 = vpack.c.b16 %v980, %v979
          %v993 = vpack.c.b16 %v982, %v981
          %v994 = vpack.c.b16 %v984, %v983
          %v995 = vpack.c.b16 %v986, %v985
          %v996 = vpack.c.b16 %v988, %v987
          %1005 = vmatprep.subr.bf16.mxu0 0
          %1006 = vmatpush1.bf16.msra.mxu0 %v996
          %1007 = vmatprep.subr.bf16.mxu0 0
          %1008 = vmatpush1.bf16.msra.mxu0 %v995
          %1009 = vmatprep.subr.bf16.mxu0 0
          %1010 = vmatpush1.bf16.msra.mxu0 %v994
          %1011 = vmatprep.subr.bf16.mxu0 0
          %1012 = vmatpush1.bf16.msra.mxu0 %v993
          %1013 = vmatprep.subr.bf16.mxu0 0
          %1014 = vmatpush1.bf16.msra.mxu0 %v992
          %1015 = vmatprep.subr.bf16.mxu0 0
          %1016 = vmatpush1.bf16.msra.mxu0 %v991
          %1017 = vmatprep.subr.bf16.mxu0 0
          %1018 = vmatpush1.bf16.msra.mxu0 %v990
          %1019 = vmatprep.subr.bf16.mxu0 0
          %1020 = vmatpush1.bf16.msra.mxu0 %v989
          %1021 = vmatprep.subr.bf16.mxu0 0
          %1022 = vmatpush2.bf16.msra.mxu0 0
          %1023 = vmatprep.subr.bf16.mxu0 0
          %1024 = vmatpush2.bf16.msra.mxu0 0
          %1025 = vmatprep.subr.bf16.mxu0 0
          %1026 = vmatpush2.bf16.msra.mxu0 0
          %1027 = vmatprep.subr.bf16.mxu0 0
          %1028 = vmatpush2.bf16.msra.mxu0 0
          %1029 = vmatprep.subr.bf16.mxu0 0
          %1030 = vmatpush2.bf16.msra.mxu0 0
          %1031 = vmatprep.subr.bf16.mxu0 0
          %1032 = vmatpush2.bf16.msra.mxu0 0
          %1033 = vmatprep.subr.bf16.mxu0 0
          %1034 = vmatpush2.bf16.msra.mxu0 0
          %1035 = vmatprep.subr.bf16.mxu0 0
          %1036 = vmatpush2.bf16.msra.mxu0 0
          %1037 = vmatprep.mubr.bf16.mxu0 0
          %1038 = vmatmul.mubr.bf16.gmra.mxu0 %v926
          %v1039 = vpop.f32.mrf.mxu0
          %v1040 = vadd.f32 %v955, %v1039
          %v1041 = vpop.f32.mrf.mxu0
          %v1042 = vpop.f32.mrf.mxu0
          %v1043 = vadd.f32 %v955, %v1042
          %v1044 = vpop.f32.mrf.mxu0
          %1045 = vmatprep.mubr.bf16.mxu0 0
          %1046 = vmatmul.mubr.bf16.gmra.mxu0 %v927
          %v1047 = vpop.f32.mrf.mxu0
          %v1048 = vadd.f32 %v955, %v1047
          %v1049 = vpop.f32.mrf.mxu0
          %v1050 = vpop.f32.mrf.mxu0
          %v1051 = vadd.f32 %v955, %v1050
          %v1052 = vpop.f32.mrf.mxu0
          %1053 = vmatprep.mubr.bf16.mxu0 0
          %1054 = vmatmul.mubr.bf16.gmra.mxu0 %v928
          %v1055 = vpop.f32.mrf.mxu0
          %v1056 = vadd.f32 %v955, %v1055
          %v1057 = vpop.f32.mrf.mxu0
          %v1058 = vpop.f32.mrf.mxu0
          %v1059 = vadd.f32 %v955, %v1058
          %v1060 = vpop.f32.mrf.mxu0
          %1061 = vmatprep.mubr.bf16.mxu0 0
          %1062 = vmatmul.mubr.bf16.gmra.mxu0 %v929
          %v1063 = vpop.f32.mrf.mxu0
          %v1064 = vadd.f32 %v955, %v1063
          %v1065 = vpop.f32.mrf.mxu0
          %v1066 = vpop.f32.mrf.mxu0
          %v1067 = vadd.f32 %v955, %v1066
          %v1068 = vpop.f32.mrf.mxu0
          %1069 = vmatprep.mubr.bf16.mxu0 0
          %1070 = vmatmul.mubr.bf16.gmra.mxu0 %v930
          %v1071 = vpop.f32.mrf.mxu0
          %v1072 = vadd.f32 %v955, %v1071
          %v1073 = vpop.f32.mrf.mxu0
          %v1074 = vpop.f32.mrf.mxu0
          %v1075 = vadd.f32 %v955, %v1074
          %v1076 = vpop.f32.mrf.mxu0
          %1077 = vmatprep.mubr.bf16.mxu0 0
          %1078 = vmatmul.mubr.bf16.gmra.mxu0 %v931
          %v1079 = vpop.f32.mrf.mxu0
          %v1080 = vadd.f32 %v955, %v1079
          %v1081 = vpop.f32.mrf.mxu0
          %v1082 = vpop.f32.mrf.mxu0
          %v1083 = vadd.f32 %v955, %v1082
          %v1084 = vpop.f32.mrf.mxu0
          %1085 = vmatprep.mubr.bf16.mxu0 0
          %1086 = vmatmul.mubr.bf16.gmra.mxu0 %v932
          %v1087 = vpop.f32.mrf.mxu0
          %v1088 = vadd.f32 %v955, %v1087
          %v1089 = vpop.f32.mrf.mxu0
          %v1090 = vpop.f32.mrf.mxu0
          %v1091 = vadd.f32 %v955, %v1090
          %v1092 = vpop.f32.mrf.mxu0
          %1093 = vmatprep.mubr.bf16.mxu0 0
          %1094 = vmatmul.mubr.bf16.gmra.mxu0 %v933
          %v1095 = vpop.f32.mrf.mxu0
          %v1096 = vadd.f32 %v955, %v1095
          %v1097 = vpop.f32.mrf.mxu0
          %v1098 = vpop.f32.mrf.mxu0
          %v1099 = vadd.f32 %v955, %v1098
          %v1100 = vpop.f32.mrf.mxu0
          %1101 = vdwg.mxu0
          %v1102 = vld [vmem:[#allocation12] sm:$0xf]
          %v1103 = vld [vmem:[#allocation12 + $0x4] sm:$0xf]
          %v1104 = vld [vmem:[#allocation12 + $0x8] sm:$0xf]
          %v1105 = vld [vmem:[#allocation12 + $0xc] sm:$0xf]
          %v1106 = vld [vmem:[#allocation12 + $0x10] sm:$0xf]
          %v1107 = vld [vmem:[#allocation12 + $0x14] sm:$0xf]
          %v1108 = vld [vmem:[#allocation12 + $0x18] sm:$0xf]
          %v1109 = vld [vmem:[#allocation12 + $0x1c] sm:$0xf]
          %v1110 = vld [vmem:[#allocation12 + $0x20] sm:$0xf]
          %v1111 = vld [vmem:[#allocation12 + $0x24] sm:$0xf]
          %v1112 = vld [vmem:[#allocation12 + $0x28] sm:$0xf]
          %v1113 = vld [vmem:[#allocation12 + $0x2c] sm:$0xf]
          %v1114 = vld [vmem:[#allocation12 + $0x30] sm:$0xf]
          %v1115 = vld [vmem:[#allocation12 + $0x34] sm:$0xf]
          %v1116 = vld [vmem:[#allocation12 + $0x38] sm:$0xf]
          %v1117 = vld [vmem:[#allocation12 + $0x3c] sm:$0xf]
          %v1118 = vld [vmem:[%s8] sm:$0x1]
          %v1120 = vlaneseq
          %v1121 = vshrl.u32 %v1120, 7
          %v1122 = vsub.s32 0, %v1121
          %v1123 = vrot.slane %v1118, %v1122
          %v1141 = vunpack.c.l.b16 %v1102
          %v1142 = vunpack.c.l.b16 %v1103
          %v1143 = vunpack.c.l.b16 %v1104
          %v1144 = vunpack.c.l.b16 %v1105
          %v1145 = vunpack.c.l.b16 %v1106
          %v1146 = vunpack.c.l.b16 %v1107
          %v1147 = vunpack.c.l.b16 %v1108
          %v1148 = vunpack.c.l.b16 %v1109
          %v1149 = vunpack.c.l.b16 %v1110
          %v1150 = vunpack.c.l.b16 %v1111
          %v1151 = vunpack.c.l.b16 %v1112
          %v1152 = vunpack.c.l.b16 %v1113
          %v1153 = vunpack.c.l.b16 %v1114
          %v1154 = vunpack.c.l.b16 %v1115
          %v1155 = vunpack.c.l.b16 %v1116
          %v1156 = vunpack.c.l.b16 %v1117
          %v1157 = vpack.c.b16 %v1142, %v1141
          %v1158 = vpack.c.b16 %v1144, %v1143
          %v1159 = vpack.c.b16 %v1146, %v1145
          %v1160 = vpack.c.b16 %v1148, %v1147
          %v1161 = vpack.c.b16 %v1150, %v1149
          %v1162 = vpack.c.b16 %v1152, %v1151
          %v1163 = vpack.c.b16 %v1154, %v1153
          %v1164 = vpack.c.b16 %v1156, %v1155
          %1173 = vmatprep.subr.bf16.mxu0 0
          %1174 = vmatpush1.bf16.msra.mxu0 %v1164
          %1175 = vmatprep.subr.bf16.mxu0 0
          %1176 = vmatpush1.bf16.msra.mxu0 %v1163
          %1177 = vmatprep.subr.bf16.mxu0 0
          %1178 = vmatpush1.bf16.msra.mxu0 %v1162
          %1179 = vmatprep.subr.bf16.mxu0 0
          %1180 = vmatpush1.bf16.msra.mxu0 %v1161
          %1181 = vmatprep.subr.bf16.mxu0 0
          %1182 = vmatpush1.bf16.msra.mxu0 %v1160
          %1183 = vmatprep.subr.bf16.mxu0 0
          %1184 = vmatpush1.bf16.msra.mxu0 %v1159
          %1185 = vmatprep.subr.bf16.mxu0 0
          %1186 = vmatpush1.bf16.msra.mxu0 %v1158
          %1187 = vmatprep.subr.bf16.mxu0 0
          %1188 = vmatpush1.bf16.msra.mxu0 %v1157
          %1189 = vmatprep.subr.bf16.mxu0 0
          %1190 = vmatpush2.bf16.msra.mxu0 0
          %1191 = vmatprep.subr.bf16.mxu0 0
          %1192 = vmatpush2.bf16.msra.mxu0 0
          %1193 = vmatprep.subr.bf16.mxu0 0
          %1194 = vmatpush2.bf16.msra.mxu0 0
          %1195 = vmatprep.subr.bf16.mxu0 0
          %1196 = vmatpush2.bf16.msra.mxu0 0
          %1197 = vmatprep.subr.bf16.mxu0 0
          %1198 = vmatpush2.bf16.msra.mxu0 0
          %1199 = vmatprep.subr.bf16.mxu0 0
          %1200 = vmatpush2.bf16.msra.mxu0 0
          %1201 = vmatprep.subr.bf16.mxu0 0
          %1202 = vmatpush2.bf16.msra.mxu0 0
          %1203 = vmatprep.subr.bf16.mxu0 0
          %1204 = vmatpush2.bf16.msra.mxu0 0
          %1205 = vmatprep.mubr.bf16.mxu0 0
          %1206 = vmatmul.mubr.bf16.gmra.mxu0 %v926
          %v1207 = vpop.f32.mrf.mxu0
          %v1208 = vadd.f32 %v1123, %v1207
          %v1209 = vpop.f32.mrf.mxu0
          %v1210 = vpop.f32.mrf.mxu0
          %v1211 = vadd.f32 %v1123, %v1210
          %v1212 = vpop.f32.mrf.mxu0
          %1213 = vmatprep.mubr.bf16.mxu0 0
          %1214 = vmatmul.mubr.bf16.gmra.mxu0 %v927
          %v1215 = vpop.f32.mrf.mxu0
          %v1216 = vadd.f32 %v1123, %v1215
          %v1217 = vpop.f32.mrf.mxu0
          %v1218 = vpop.f32.mrf.mxu0
          %v1219 = vadd.f32 %v1123, %v1218
          %v1220 = vpop.f32.mrf.mxu0
          %1221 = vmatprep.mubr.bf16.mxu0 0
          %1222 = vmatmul.mubr.bf16.gmra.mxu0 %v928
          %v1223 = vpop.f32.mrf.mxu0
          %v1224 = vadd.f32 %v1123, %v1223
          %v1225 = vpop.f32.mrf.mxu0
          %v1226 = vpop.f32.mrf.mxu0
          %v1227 = vadd.f32 %v1123, %v1226
          %v1228 = vpop.f32.mrf.mxu0
          %1229 = vmatprep.mubr.bf16.mxu0 0
          %1230 = vmatmul.mubr.bf16.gmra.mxu0 %v929
          %v1231 = vpop.f32.mrf.mxu0
          %v1232 = vadd.f32 %v1123, %v1231
          %v1233 = vpop.f32.mrf.mxu0
          %v1234 = vpop.f32.mrf.mxu0
          %v1235 = vadd.f32 %v1123, %v1234
          %v1236 = vpop.f32.mrf.mxu0
          %1237 = vmatprep.mubr.bf16.mxu0 0
          %1238 = vmatmul.mubr.bf16.gmra.mxu0 %v930
          %v1239 = vpop.f32.mrf.mxu0
          %v1240 = vadd.f32 %v1123, %v1239
          %v1241 = vpop.f32.mrf.mxu0
          %v1242 = vpop.f32.mrf.mxu0
          %v1243 = vadd.f32 %v1123, %v1242
          %v1244 = vpop.f32.mrf.mxu0
          %1245 = vmatprep.mubr.bf16.mxu0 0
          %1246 = vmatmul.mubr.bf16.gmra.mxu0 %v931
          %v1247 = vpop.f32.mrf.mxu0
          %v1248 = vadd.f32 %v1123, %v1247
          %v1249 = vpop.f32.mrf.mxu0
          %v1250 = vpop.f32.mrf.mxu0
          %v1251 = vadd.f32 %v1123, %v1250
          %v1252 = vpop.f32.mrf.mxu0
          %1253 = vmatprep.mubr.bf16.mxu0 0
          %1254 = vmatmul.mubr.bf16.gmra.mxu0 %v932
          %v1255 = vpop.f32.mrf.mxu0
          %v1256 = vadd.f32 %v1123, %v1255
          %v1257 = vpop.f32.mrf.mxu0
          %v1258 = vpop.f32.mrf.mxu0
          %v1259 = vadd.f32 %v1123, %v1258
          %v1260 = vpop.f32.mrf.mxu0
          %1261 = vmatprep.mubr.bf16.mxu0 0
          %1262 = vmatmul.mubr.bf16.gmra.mxu0 %v933
          %v1263 = vpop.f32.mrf.mxu0
          %v1264 = vadd.f32 %v1123, %v1263
          %v1265 = vpop.f32.mrf.mxu0
          %v1266 = vpop.f32.mrf.mxu0
          %v1267 = vadd.f32 %v1123, %v1266
          %v1268 = vpop.f32.mrf.mxu0
          %1269 = vdwg.mxu0
          %v1270 = vpack.c.bf16 %v1043, %v1040
          %v1271 = vpack.c.bf16 %v1051, %v1048
          %v1272 = vpack.c.bf16 %v1059, %v1056
          %v1273 = vpack.c.bf16 %v1067, %v1064
          %v1274 = vpack.c.bf16 %v1075, %v1072
          %v1275 = vpack.c.bf16 %v1083, %v1080
          %v1276 = vpack.c.bf16 %v1091, %v1088
          %v1277 = vpack.c.bf16 %v1099, %v1096
          %v1278 = vpack.c.bf16 %v1211, %v1208
          %v1279 = vpack.c.bf16 %v1219, %v1216
          %v1280 = vpack.c.bf16 %v1227, %v1224
          %v1281 = vpack.c.bf16 %v1235, %v1232
          %v1282 = vpack.c.bf16 %v1243, %v1240
          %v1283 = vpack.c.bf16 %v1251, %v1248
          %v1284 = vpack.c.bf16 %v1259, %v1256
          %v1285 = vpack.c.bf16 %v1267, %v1264
          %v1294 = vunpack.c.l.b16 %v1270
          %v1295 = vunpack.c.h.b16 %v1270
          %v1296 = vunpack.c.l.b16 %v1271
          %v1297 = vunpack.c.h.b16 %v1271
          %v1298 = vunpack.c.l.b16 %v1272
          %v1299 = vunpack.c.h.b16 %v1272
          %v1300 = vunpack.c.l.b16 %v1273
          %v1301 = vunpack.c.h.b16 %v1273
          %v1302 = vunpack.c.l.b16 %v1274
          %v1303 = vunpack.c.h.b16 %v1274
          %v1304 = vunpack.c.l.b16 %v1275
          %v1305 = vunpack.c.h.b16 %v1275
          %v1306 = vunpack.c.l.b16 %v1276
          %v1307 = vunpack.c.h.b16 %v1276
          %v1308 = vunpack.c.l.b16 %v1277
          %v1309 = vunpack.c.h.b16 %v1277
          %v1310 = vpack.c.b16 %v1294, %v1294
          %v1311 = vpack.c.b16 %v1295, %v1295
          %v1312 = vpack.c.b16 %v1296, %v1296
          %v1313 = vpack.c.b16 %v1297, %v1297
          %v1314 = vpack.c.b16 %v1298, %v1298
          %v1315 = vpack.c.b16 %v1299, %v1299
          %v1316 = vpack.c.b16 %v1300, %v1300
          %v1317 = vpack.c.b16 %v1301, %v1301
          %v1318 = vpack.c.b16 %v1302, %v1302
          %v1319 = vpack.c.b16 %v1303, %v1303
          %v1320 = vpack.c.b16 %v1304, %v1304
          %v1321 = vpack.c.b16 %v1305, %v1305
          %v1322 = vpack.c.b16 %v1306, %v1306
          %v1323 = vpack.c.b16 %v1307, %v1307
          %v1324 = vpack.c.b16 %v1308, %v1308
          %v1325 = vpack.c.b16 %v1309, %v1309
          %vm1342 = vcmask 257024
          %1343 = vst.msk [vmem:[#allocation2] sm:$0xf] %vm1342, %v1310
          %1344 = vst.msk [vmem:[#allocation2 + $0x4] sm:$0xf] %vm1342, %v1311
          %1345 = vst.msk [vmem:[#allocation2 + $0x8] sm:$0xf] %vm1342, %v1312
          %1346 = vst.msk [vmem:[#allocation2 + $0xc] sm:$0xf] %vm1342, %v1313
          %1347 = vst.msk [vmem:[#allocation2 + $0x10] sm:$0xf] %vm1342, %v1314
          %1348 = vst.msk [vmem:[#allocation2 + $0x14] sm:$0xf] %vm1342, %v1315
          %1349 = vst.msk [vmem:[#allocation2 + $0x18] sm:$0xf] %vm1342, %v1316
          %1350 = vst.msk [vmem:[#allocation2 + $0x1c] sm:$0xf] %vm1342, %v1317
          %1351 = vst.msk [vmem:[#allocation2 + $0x20] sm:$0xf] %vm1342, %v1318
          %1352 = vst.msk [vmem:[#allocation2 + $0x24] sm:$0xf] %vm1342, %v1319
          %1353 = vst.msk [vmem:[#allocation2 + $0x28] sm:$0xf] %vm1342, %v1320
          %1354 = vst.msk [vmem:[#allocation2 + $0x2c] sm:$0xf] %vm1342, %v1321
          %1355 = vst.msk [vmem:[#allocation2 + $0x30] sm:$0xf] %vm1342, %v1322
          %1356 = vst.msk [vmem:[#allocation2 + $0x34] sm:$0xf] %vm1342, %v1323
          %1357 = vst.msk [vmem:[#allocation2 + $0x38] sm:$0xf] %vm1342, %v1324
          %1358 = vst.msk [vmem:[#allocation2 + $0x3c] sm:$0xf] %vm1342, %v1325
          %v1367 = vunpack.c.l.b16 %v1278
          %v1368 = vunpack.c.h.b16 %v1278
          %v1369 = vunpack.c.l.b16 %v1279
          %v1370 = vunpack.c.h.b16 %v1279
          %v1371 = vunpack.c.l.b16 %v1280
          %v1372 = vunpack.c.h.b16 %v1280
          %v1373 = vunpack.c.l.b16 %v1281
          %v1374 = vunpack.c.h.b16 %v1281
          %v1375 = vunpack.c.l.b16 %v1282
          %v1376 = vunpack.c.h.b16 %v1282
          %v1377 = vunpack.c.l.b16 %v1283
          %v1378 = vunpack.c.h.b16 %v1283
          %v1379 = vunpack.c.l.b16 %v1284
          %v1380 = vunpack.c.h.b16 %v1284
          %v1381 = vunpack.c.l.b16 %v1285
          %v1382 = vunpack.c.h.b16 %v1285
          %v1383 = vpack.c.b16 %v1367, %v1367
          %v1384 = vpack.c.b16 %v1368, %v1368
          %v1385 = vpack.c.b16 %v1369, %v1369
          %v1386 = vpack.c.b16 %v1370, %v1370
          %v1387 = vpack.c.b16 %v1371, %v1371
          %v1388 = vpack.c.b16 %v1372, %v1372
          %v1389 = vpack.c.b16 %v1373, %v1373
          %v1390 = vpack.c.b16 %v1374, %v1374
          %v1391 = vpack.c.b16 %v1375, %v1375
          %v1392 = vpack.c.b16 %v1376, %v1376
          %v1393 = vpack.c.b16 %v1377, %v1377
          %v1394 = vpack.c.b16 %v1378, %v1378
          %v1395 = vpack.c.b16 %v1379, %v1379
          %v1396 = vpack.c.b16 %v1380, %v1380
          %v1397 = vpack.c.b16 %v1381, %v1381
          %v1398 = vpack.c.b16 %v1382, %v1382
          %1415 = vst.msk [vmem:[#allocation3] sm:$0xf] %vm1342, %v1383
          %1416 = vst.msk [vmem:[#allocation3 + $0x4] sm:$0xf] %vm1342, %v1384
          %1417 = vst.msk [vmem:[#allocation3 + $0x8] sm:$0xf] %vm1342, %v1385
          %1418 = vst.msk [vmem:[#allocation3 + $0xc] sm:$0xf] %vm1342, %v1386
          %1419 = vst.msk [vmem:[#allocation3 + $0x10] sm:$0xf] %vm1342, %v1387
          %1420 = vst.msk [vmem:[#allocation3 + $0x14] sm:$0xf] %vm1342, %v1388
          %1421 = vst.msk [vmem:[#allocation3 + $0x18] sm:$0xf] %vm1342, %v1389
          %1422 = vst.msk [vmem:[#allocation3 + $0x1c] sm:$0xf] %vm1342, %v1390
          %1423 = vst.msk [vmem:[#allocation3 + $0x20] sm:$0xf] %vm1342, %v1391
          %1424 = vst.msk [vmem:[#allocation3 + $0x24] sm:$0xf] %vm1342, %v1392
          %1425 = vst.msk [vmem:[#allocation3 + $0x28] sm:$0xf] %vm1342, %v1393
          %1426 = vst.msk [vmem:[#allocation3 + $0x2c] sm:$0xf] %vm1342, %v1394
          %1427 = vst.msk [vmem:[#allocation3 + $0x30] sm:$0xf] %vm1342, %v1395
          %1428 = vst.msk [vmem:[#allocation3 + $0x34] sm:$0xf] %vm1342, %v1396
          %1429 = vst.msk [vmem:[#allocation3 + $0x38] sm:$0xf] %vm1342, %v1397
          %1430 = vst.msk [vmem:[#allocation3 + $0x3c] sm:$0xf] %vm1342, %v1398
          %1431 = vrot.lane.b32.xlu0 %v1310, 96
          %v1432 = vpop.permute.xlu0 %1431
          %1433 = vrot.lane.b32.xlu0 %v1311, 96
          %v1434 = vpop.permute.xlu0 %1433
          %1435 = vrot.lane.b32.xlu0 %v1312, 96
          %v1436 = vpop.permute.xlu0 %1435
          %1437 = vrot.lane.b32.xlu0 %v1313, 96
          %v1438 = vpop.permute.xlu0 %1437
          %1439 = vrot.lane.b32.xlu0 %v1314, 96
          %v1440 = vpop.permute.xlu0 %1439
          %1441 = vrot.lane.b32.xlu0 %v1315, 96
          %v1442 = vpop.permute.xlu0 %1441
          %1443 = vrot.lane.b32.xlu0 %v1316, 96
          %v1444 = vpop.permute.xlu0 %1443
          %1445 = vrot.lane.b32.xlu0 %v1317, 96
          %v1446 = vpop.permute.xlu0 %1445
          %1447 = vrot.lane.b32.xlu0 %v1318, 96
          %v1448 = vpop.permute.xlu0 %1447
          %1449 = vrot.lane.b32.xlu0 %v1319, 96
          %v1450 = vpop.permute.xlu0 %1449
          %1451 = vrot.lane.b32.xlu0 %v1320, 96
          %v1452 = vpop.permute.xlu0 %1451
          %1453 = vrot.lane.b32.xlu0 %v1321, 96
          %v1454 = vpop.permute.xlu0 %1453
          %1455 = vrot.lane.b32.xlu0 %v1322, 96
          %v1456 = vpop.permute.xlu0 %1455
          %1457 = vrot.lane.b32.xlu0 %v1323, 96
          %v1458 = vpop.permute.xlu0 %1457
          %1459 = vrot.lane.b32.xlu0 %v1324, 96
          %v1460 = vpop.permute.xlu0 %1459
          %1461 = vrot.lane.b32.xlu0 %v1325, 96
          %v1462 = vpop.permute.xlu0 %1461
          %s1479 = scalar_lea.vmem [#allocation2], 64
          %1480 = vst.msk [vmem:[%s1479] sm:$0xf] %vm1342, %v1432
          %1481 = vst.msk [vmem:[%s1479 + $0x4] sm:$0xf] %vm1342, %v1434
          %1482 = vst.msk [vmem:[%s1479 + $0x8] sm:$0xf] %vm1342, %v1436
          %1483 = vst.msk [vmem:[%s1479 + $0xc] sm:$0xf] %vm1342, %v1438
          %1484 = vst.msk [vmem:[%s1479 + $0x10] sm:$0xf] %vm1342, %v1440
          %1485 = vst.msk [vmem:[%s1479 + $0x14] sm:$0xf] %vm1342, %v1442
          %1486 = vst.msk [vmem:[%s1479 + $0x18] sm:$0xf] %vm1342, %v1444
          %1487 = vst.msk [vmem:[%s1479 + $0x1c] sm:$0xf] %vm1342, %v1446
          %1488 = vst.msk [vmem:[%s1479 + $0x20] sm:$0xf] %vm1342, %v1448
          %1489 = vst.msk [vmem:[%s1479 + $0x24] sm:$0xf] %vm1342, %v1450
          %1490 = vst.msk [vmem:[%s1479 + $0x28] sm:$0xf] %vm1342, %v1452
          %1491 = vst.msk [vmem:[%s1479 + $0x2c] sm:$0xf] %vm1342, %v1454
          %1492 = vst.msk [vmem:[%s1479 + $0x30] sm:$0xf] %vm1342, %v1456
          %1493 = vst.msk [vmem:[%s1479 + $0x34] sm:$0xf] %vm1342, %v1458
          %1494 = vst.msk [vmem:[%s1479 + $0x38] sm:$0xf] %vm1342, %v1460
          %1495 = vst.msk [vmem:[%s1479 + $0x3c] sm:$0xf] %vm1342, %v1462
          %1496 = vrot.lane.b32.xlu0 %v1383, 96
          %v1497 = vpop.permute.xlu0 %1496
          %1498 = vrot.lane.b32.xlu0 %v1384, 96
          %v1499 = vpop.permute.xlu0 %1498
          %1500 = vrot.lane.b32.xlu0 %v1385, 96
          %v1501 = vpop.permute.xlu0 %1500
          %1502 = vrot.lane.b32.xlu0 %v1386, 96
          %v1503 = vpop.permute.xlu0 %1502
          %1504 = vrot.lane.b32.xlu0 %v1387, 96
          %v1505 = vpop.permute.xlu0 %1504
          %1506 = vrot.lane.b32.xlu0 %v1388, 96
          %v1507 = vpop.permute.xlu0 %1506
          %1508 = vrot.lane.b32.xlu0 %v1389, 96
          %v1509 = vpop.permute.xlu0 %1508
          %1510 = vrot.lane.b32.xlu0 %v1390, 96
          %v1511 = vpop.permute.xlu0 %1510
          %1512 = vrot.lane.b32.xlu0 %v1391, 96
          %v1513 = vpop.permute.xlu0 %1512
          %1514 = vrot.lane.b32.xlu0 %v1392, 96
          %v1515 = vpop.permute.xlu0 %1514
          %1516 = vrot.lane.b32.xlu0 %v1393, 96
          %v1517 = vpop.permute.xlu0 %1516
          %1518 = vrot.lane.b32.xlu0 %v1394, 96
          %v1519 = vpop.permute.xlu0 %1518
          %1520 = vrot.lane.b32.xlu0 %v1395, 96
          %v1521 = vpop.permute.xlu0 %1520
          %1522 = vrot.lane.b32.xlu0 %v1396, 96
          %v1523 = vpop.permute.xlu0 %1522
          %1524 = vrot.lane.b32.xlu0 %v1397, 96
          %v1525 = vpop.permute.xlu0 %1524
          %1526 = vrot.lane.b32.xlu0 %v1398, 96
          %v1527 = vpop.permute.xlu0 %1526
          %s1544 = scalar_lea.vmem [#allocation3], 64
          %1545 = vst.msk [vmem:[%s1544] sm:$0xf] %vm1342, %v1497
          %1546 = vst.msk [vmem:[%s1544 + $0x4] sm:$0xf] %vm1342, %v1499
          %1547 = vst.msk [vmem:[%s1544 + $0x8] sm:$0xf] %vm1342, %v1501
          %1548 = vst.msk [vmem:[%s1544 + $0xc] sm:$0xf] %vm1342, %v1503
          %1549 = vst.msk [vmem:[%s1544 + $0x10] sm:$0xf] %vm1342, %v1505
          %1550 = vst.msk [vmem:[%s1544 + $0x14] sm:$0xf] %vm1342, %v1507
          %1551 = vst.msk [vmem:[%s1544 + $0x18] sm:$0xf] %vm1342, %v1509
          %1552 = vst.msk [vmem:[%s1544 + $0x1c] sm:$0xf] %vm1342, %v1511
          %1553 = vst.msk [vmem:[%s1544 + $0x20] sm:$0xf] %vm1342, %v1513
          %1554 = vst.msk [vmem:[%s1544 + $0x24] sm:$0xf] %vm1342, %v1515
          %1555 = vst.msk [vmem:[%s1544 + $0x28] sm:$0xf] %vm1342, %v1517
          %1556 = vst.msk [vmem:[%s1544 + $0x2c] sm:$0xf] %vm1342, %v1519
          %1557 = vst.msk [vmem:[%s1544 + $0x30] sm:$0xf] %vm1342, %v1521
          %1558 = vst.msk [vmem:[%s1544 + $0x34] sm:$0xf] %vm1342, %v1523
          %1559 = vst.msk [vmem:[%s1544 + $0x38] sm:$0xf] %vm1342, %v1525
          %1560 = vst.msk [vmem:[%s1544 + $0x3c] sm:$0xf] %vm1342, %v1527
          %1561 = vrot.lane.b32.xlu0 %v1310, 64
          %v1562 = vpop.permute.xlu0 %1561
          %1563 = vrot.lane.b32.xlu0 %v1311, 64
          %v1564 = vpop.permute.xlu0 %1563
          %1565 = vrot.lane.b32.xlu0 %v1312, 64
          %v1566 = vpop.permute.xlu0 %1565
          %1567 = vrot.lane.b32.xlu0 %v1313, 64
          %v1568 = vpop.permute.xlu0 %1567
          %1569 = vrot.lane.b32.xlu0 %v1314, 64
          %v1570 = vpop.permute.xlu0 %1569
          %1571 = vrot.lane.b32.xlu0 %v1315, 64
          %v1572 = vpop.permute.xlu0 %1571
          %1573 = vrot.lane.b32.xlu0 %v1316, 64
          %v1574 = vpop.permute.xlu0 %1573
          %1575 = vrot.lane.b32.xlu0 %v1317, 64
          %v1576 = vpop.permute.xlu0 %1575
          %1577 = vrot.lane.b32.xlu0 %v1318, 64
          %v1578 = vpop.permute.xlu0 %1577
          %1579 = vrot.lane.b32.xlu0 %v1319, 64
          %v1580 = vpop.permute.xlu0 %1579
          %1581 = vrot.lane.b32.xlu0 %v1320, 64
          %v1582 = vpop.permute.xlu0 %1581
          %1583 = vrot.lane.b32.xlu0 %v1321, 64
          %v1584 = vpop.permute.xlu0 %1583
          %1585 = vrot.lane.b32.xlu0 %v1322, 64
          %v1586 = vpop.permute.xlu0 %1585
          %1587 = vrot.lane.b32.xlu0 %v1323, 64
          %v1588 = vpop.permute.xlu0 %1587
          %1589 = vrot.lane.b32.xlu0 %v1324, 64
          %v1590 = vpop.permute.xlu0 %1589
          %1591 = vrot.lane.b32.xlu0 %v1325, 64
          %v1592 = vpop.permute.xlu0 %1591
          %s1609 = scalar_lea.vmem [#allocation2], 128
          %1610 = vst.msk [vmem:[%s1609] sm:$0xf] %vm1342, %v1562
          %1611 = vst.msk [vmem:[%s1609 + $0x4] sm:$0xf] %vm1342, %v1564
          %1612 = vst.msk [vmem:[%s1609 + $0x8] sm:$0xf] %vm1342, %v1566
          %1613 = vst.msk [vmem:[%s1609 + $0xc] sm:$0xf] %vm1342, %v1568
          %1614 = vst.msk [vmem:[%s1609 + $0x10] sm:$0xf] %vm1342, %v1570
          %1615 = vst.msk [vmem:[%s1609 + $0x14] sm:$0xf] %vm1342, %v1572
          %1616 = vst.msk [vmem:[%s1609 + $0x18] sm:$0xf] %vm1342, %v1574
          %1617 = vst.msk [vmem:[%s1609 + $0x1c] sm:$0xf] %vm1342, %v1576
          %1618 = vst.msk [vmem:[%s1609 + $0x20] sm:$0xf] %vm1342, %v1578
          %1619 = vst.msk [vmem:[%s1609 + $0x24] sm:$0xf] %vm1342, %v1580
          %1620 = vst.msk [vmem:[%s1609 + $0x28] sm:$0xf] %vm1342, %v1582
          %1621 = vst.msk [vmem:[%s1609 + $0x2c] sm:$0xf] %vm1342, %v1584
          %1622 = vst.msk [vmem:[%s1609 + $0x30] sm:$0xf] %vm1342, %v1586
          %1623 = vst.msk [vmem:[%s1609 + $0x34] sm:$0xf] %vm1342, %v1588
          %1624 = vst.msk [vmem:[%s1609 + $0x38] sm:$0xf] %vm1342, %v1590
          %1625 = vst.msk [vmem:[%s1609 + $0x3c] sm:$0xf] %vm1342, %v1592
          %1626 = vrot.lane.b32.xlu0 %v1383, 64
          %v1627 = vpop.permute.xlu0 %1626
          %1628 = vrot.lane.b32.xlu0 %v1384, 64
          %v1629 = vpop.permute.xlu0 %1628
          %1630 = vrot.lane.b32.xlu0 %v1385, 64
          %v1631 = vpop.permute.xlu0 %1630
          %1632 = vrot.lane.b32.xlu0 %v1386, 64
          %v1633 = vpop.permute.xlu0 %1632
          %1634 = vrot.lane.b32.xlu0 %v1387, 64
          %v1635 = vpop.permute.xlu0 %1634
          %1636 = vrot.lane.b32.xlu0 %v1388, 64
          %v1637 = vpop.permute.xlu0 %1636
          %1638 = vrot.lane.b32.xlu0 %v1389, 64
          %v1639 = vpop.permute.xlu0 %1638
          %1640 = vrot.lane.b32.xlu0 %v1390, 64
          %v1641 = vpop.permute.xlu0 %1640
          %1642 = vrot.lane.b32.xlu0 %v1391, 64
          %v1643 = vpop.permute.xlu0 %1642
          %1644 = vrot.lane.b32.xlu0 %v1392, 64
          %v1645 = vpop.permute.xlu0 %1644
          %1646 = vrot.lane.b32.xlu0 %v1393, 64
          %v1647 = vpop.permute.xlu0 %1646
          %1648 = vrot.lane.b32.xlu0 %v1394, 64
          %v1649 = vpop.permute.xlu0 %1648
          %1650 = vrot.lane.b32.xlu0 %v1395, 64
          %v1651 = vpop.permute.xlu0 %1650
          %1652 = vrot.lane.b32.xlu0 %v1396, 64
          %v1653 = vpop.permute.xlu0 %1652
          %1654 = vrot.lane.b32.xlu0 %v1397, 64
          %v1655 = vpop.permute.xlu0 %1654
          %1656 = vrot.lane.b32.xlu0 %v1398, 64
          %v1657 = vpop.permute.xlu0 %1656
          %s1674 = scalar_lea.vmem [#allocation3], 128
          %1675 = vst.msk [vmem:[%s1674] sm:$0xf] %vm1342, %v1627
          %1676 = vst.msk [vmem:[%s1674 + $0x4] sm:$0xf] %vm1342, %v1629
          %1677 = vst.msk [vmem:[%s1674 + $0x8] sm:$0xf] %vm1342, %v1631
          %1678 = vst.msk [vmem:[%s1674 + $0xc] sm:$0xf] %vm1342, %v1633
          %1679 = vst.msk [vmem:[%s1674 + $0x10] sm:$0xf] %vm1342, %v1635
          %1680 = vst.msk [vmem:[%s1674 + $0x14] sm:$0xf] %vm1342, %v1637
          %1681 = vst.msk [vmem:[%s1674 + $0x18] sm:$0xf] %vm1342, %v1639
          %1682 = vst.msk [vmem:[%s1674 + $0x1c] sm:$0xf] %vm1342, %v1641
          %1683 = vst.msk [vmem:[%s1674 + $0x20] sm:$0xf] %vm1342, %v1643
          %1684 = vst.msk [vmem:[%s1674 + $0x24] sm:$0xf] %vm1342, %v1645
          %1685 = vst.msk [vmem:[%s1674 + $0x28] sm:$0xf] %vm1342, %v1647
          %1686 = vst.msk [vmem:[%s1674 + $0x2c] sm:$0xf] %vm1342, %v1649
          %1687 = vst.msk [vmem:[%s1674 + $0x30] sm:$0xf] %vm1342, %v1651
          %1688 = vst.msk [vmem:[%s1674 + $0x34] sm:$0xf] %vm1342, %v1653
          %1689 = vst.msk [vmem:[%s1674 + $0x38] sm:$0xf] %vm1342, %v1655
          %1690 = vst.msk [vmem:[%s1674 + $0x3c] sm:$0xf] %vm1342, %v1657
          %1691 = vrot.lane.b32.xlu0 %v1310, 32
          %v1692 = vpop.permute.xlu0 %1691
          %1693 = vrot.lane.b32.xlu0 %v1311, 32
          %v1694 = vpop.permute.xlu0 %1693
          %1695 = vrot.lane.b32.xlu0 %v1312, 32
          %v1696 = vpop.permute.xlu0 %1695
          %1697 = vrot.lane.b32.xlu0 %v1313, 32
          %v1698 = vpop.permute.xlu0 %1697
          %1699 = vrot.lane.b32.xlu0 %v1314, 32
          %v1700 = vpop.permute.xlu0 %1699
          %1701 = vrot.lane.b32.xlu0 %v1315, 32
          %v1702 = vpop.permute.xlu0 %1701
          %1703 = vrot.lane.b32.xlu0 %v1316, 32
          %v1704 = vpop.permute.xlu0 %1703
          %1705 = vrot.lane.b32.xlu0 %v1317, 32
          %v1706 = vpop.permute.xlu0 %1705
          %1707 = vrot.lane.b32.xlu0 %v1318, 32
          %v1708 = vpop.permute.xlu0 %1707
          %1709 = vrot.lane.b32.xlu0 %v1319, 32
          %v1710 = vpop.permute.xlu0 %1709
          %1711 = vrot.lane.b32.xlu0 %v1320, 32
          %v1712 = vpop.permute.xlu0 %1711
          %1713 = vrot.lane.b32.xlu0 %v1321, 32
          %v1714 = vpop.permute.xlu0 %1713
          %1715 = vrot.lane.b32.xlu0 %v1322, 32
          %v1716 = vpop.permute.xlu0 %1715
          %1717 = vrot.lane.b32.xlu0 %v1323, 32
          %v1718 = vpop.permute.xlu0 %1717
          %1719 = vrot.lane.b32.xlu0 %v1324, 32
          %v1720 = vpop.permute.xlu0 %1719
          %1721 = vrot.lane.b32.xlu0 %v1325, 32
          %v1722 = vpop.permute.xlu0 %1721
          %s1739 = scalar_lea.vmem [#allocation2], 192
          %1740 = vst.msk [vmem:[%s1739] sm:$0xf] %vm1342, %v1692
          %1741 = vst.msk [vmem:[%s1739 + $0x4] sm:$0xf] %vm1342, %v1694
          %1742 = vst.msk [vmem:[%s1739 + $0x8] sm:$0xf] %vm1342, %v1696
          %1743 = vst.msk [vmem:[%s1739 + $0xc] sm:$0xf] %vm1342, %v1698
          %1744 = vst.msk [vmem:[%s1739 + $0x10] sm:$0xf] %vm1342, %v1700
          %1745 = vst.msk [vmem:[%s1739 + $0x14] sm:$0xf] %vm1342, %v1702
          %1746 = vst.msk [vmem:[%s1739 + $0x18] sm:$0xf] %vm1342, %v1704
          %1747 = vst.msk [vmem:[%s1739 + $0x1c] sm:$0xf] %vm1342, %v1706
          %1748 = vst.msk [vmem:[%s1739 + $0x20] sm:$0xf] %vm1342, %v1708
          %1749 = vst.msk [vmem:[%s1739 + $0x24] sm:$0xf] %vm1342, %v1710
          %1750 = vst.msk [vmem:[%s1739 + $0x28] sm:$0xf] %vm1342, %v1712
          %1751 = vst.msk [vmem:[%s1739 + $0x2c] sm:$0xf] %vm1342, %v1714
          %1752 = vst.msk [vmem:[%s1739 + $0x30] sm:$0xf] %vm1342, %v1716
          %1753 = vst.msk [vmem:[%s1739 + $0x34] sm:$0xf] %vm1342, %v1718
          %1754 = vst.msk [vmem:[%s1739 + $0x38] sm:$0xf] %vm1342, %v1720
          %1755 = vst.msk [vmem:[%s1739 + $0x3c] sm:$0xf] %vm1342, %v1722
          %1756 = vrot.lane.b32.xlu0 %v1383, 32
          %v1757 = vpop.permute.xlu0 %1756
          %1758 = vrot.lane.b32.xlu0 %v1384, 32
          %v1759 = vpop.permute.xlu0 %1758
          %1760 = vrot.lane.b32.xlu0 %v1385, 32
          %v1761 = vpop.permute.xlu0 %1760
          %1762 = vrot.lane.b32.xlu0 %v1386, 32
          %v1763 = vpop.permute.xlu0 %1762
          %1764 = vrot.lane.b32.xlu0 %v1387, 32
          %v1765 = vpop.permute.xlu0 %1764
          %1766 = vrot.lane.b32.xlu0 %v1388, 32
          %v1767 = vpop.permute.xlu0 %1766
          %1768 = vrot.lane.b32.xlu0 %v1389, 32
          %v1769 = vpop.permute.xlu0 %1768
          %1770 = vrot.lane.b32.xlu0 %v1390, 32
          %v1771 = vpop.permute.xlu0 %1770
          %1772 = vrot.lane.b32.xlu0 %v1391, 32
          %v1773 = vpop.permute.xlu0 %1772
          %1774 = vrot.lane.b32.xlu0 %v1392, 32
          %v1775 = vpop.permute.xlu0 %1774
          %1776 = vrot.lane.b32.xlu0 %v1393, 32
          %v1777 = vpop.permute.xlu0 %1776
          %1778 = vrot.lane.b32.xlu0 %v1394, 32
          %v1779 = vpop.permute.xlu0 %1778
          %1780 = vrot.lane.b32.xlu0 %v1395, 32
          %v1781 = vpop.permute.xlu0 %1780
          %1782 = vrot.lane.b32.xlu0 %v1396, 32
          %v1783 = vpop.permute.xlu0 %1782
          %1784 = vrot.lane.b32.xlu0 %v1397, 32
          %v1785 = vpop.permute.xlu0 %1784
          %1786 = vrot.lane.b32.xlu0 %v1398, 32
          %v1787 = vpop.permute.xlu0 %1786
          %s1804 = scalar_lea.vmem [#allocation3], 192
          %1805 = vst.msk [vmem:[%s1804] sm:$0xf] %vm1342, %v1757
          %1806 = vst.msk [vmem:[%s1804 + $0x4] sm:$0xf] %vm1342, %v1759
          %1807 = vst.msk [vmem:[%s1804 + $0x8] sm:$0xf] %vm1342, %v1761
          %1808 = vst.msk [vmem:[%s1804 + $0xc] sm:$0xf] %vm1342, %v1763
          %1809 = vst.msk [vmem:[%s1804 + $0x10] sm:$0xf] %vm1342, %v1765
          %1810 = vst.msk [vmem:[%s1804 + $0x14] sm:$0xf] %vm1342, %v1767
          %1811 = vst.msk [vmem:[%s1804 + $0x18] sm:$0xf] %vm1342, %v1769
          %1812 = vst.msk [vmem:[%s1804 + $0x1c] sm:$0xf] %vm1342, %v1771
          %1813 = vst.msk [vmem:[%s1804 + $0x20] sm:$0xf] %vm1342, %v1773
          %1814 = vst.msk [vmem:[%s1804 + $0x24] sm:$0xf] %vm1342, %v1775
          %1815 = vst.msk [vmem:[%s1804 + $0x28] sm:$0xf] %vm1342, %v1777
          %1816 = vst.msk [vmem:[%s1804 + $0x2c] sm:$0xf] %vm1342, %v1779
          %1817 = vst.msk [vmem:[%s1804 + $0x30] sm:$0xf] %vm1342, %v1781
          %1818 = vst.msk [vmem:[%s1804 + $0x34] sm:$0xf] %vm1342, %v1783
          %1819 = vst.msk [vmem:[%s1804 + $0x38] sm:$0xf] %vm1342, %v1785
          %1820 = vst.msk [vmem:[%s1804 + $0x3c] sm:$0xf] %vm1342, %v1787
        $region124: #{tpu_custom_call.1} parent=87 // pred_fallthru
          _
        %s1821 = smul.u32 %s43, 64
        %s1822 = scalar_lea.vmem %s602, %s1821 [#allocation4]
        %v1823 = vld [vmem:[%s1822] sm:$0xff]
        %v1824 = vld [vmem:[%s1822 + $0x8] sm:$0xff]
        %v1825 = vld [vmem:[%s1822 + $0x10] sm:$0xff]
        %v1826 = vld [vmem:[%s1822 + $0x18] sm:$0xff]
        %v1827 = vld [vmem:[%s1822 + $0x20] sm:$0xff]
        %v1828 = vld [vmem:[%s1822 + $0x28] sm:$0xff]
        %v1829 = vld [vmem:[%s1822 + $0x30] sm:$0xff]
        %v1830 = vld [vmem:[%s1822 + $0x38] sm:$0xff]
        %1831 = vadd.xlane.f32.xlu0 %v1823
        %v1832 = vpop.xlane.xlu0 %1831
        %1833 = vadd.xlane.f32.xlu0 %v1824
        %v1834 = vpop.xlane.xlu0 %1833
        %1835 = vadd.xlane.f32.xlu0 %v1825
        %v1836 = vpop.xlane.xlu0 %1835
        %1837 = vadd.xlane.f32.xlu0 %v1826
        %v1838 = vpop.xlane.xlu0 %1837
        %1839 = vadd.xlane.f32.xlu0 %v1827
        %v1840 = vpop.xlane.xlu0 %1839
        %1841 = vadd.xlane.f32.xlu0 %v1828
        %v1842 = vpop.xlane.xlu0 %1841
        %1843 = vadd.xlane.f32.xlu0 %v1829
        %v1844 = vpop.xlane.xlu0 %1843
        %1845 = vadd.xlane.f32.xlu0 %v1830
        %v1846 = vpop.xlane.xlu0 %1845
        %v1847 = vrcp.pop 128.0
        %v1848 = vmul.f32 %v1832, %v1847
        %v1849 = vmul.f32 %v1834, %v1847
        %v1850 = vmul.f32 %v1836, %v1847
        %v1851 = vmul.f32 %v1838, %v1847
        %v1852 = vmul.f32 %v1840, %v1847
        %v1853 = vmul.f32 %v1842, %v1847
        %v1854 = vmul.f32 %v1844, %v1847
        %v1855 = vmul.f32 %v1846, %v1847
        %v1856 = vsub.f32 %v1823, %v1848
        %v1857 = vsub.f32 %v1824, %v1849
        %v1858 = vsub.f32 %v1825, %v1850
        %v1859 = vsub.f32 %v1826, %v1851
        %v1860 = vsub.f32 %v1827, %v1852
        %v1861 = vsub.f32 %v1828, %v1853
        %v1862 = vsub.f32 %v1829, %v1854
        %v1863 = vsub.f32 %v1830, %v1855
        %v1864 = vmul.f32 %v1856, %v1856
        %v1865 = vmul.f32 %v1857, %v1857
        %v1866 = vmul.f32 %v1858, %v1858
        %v1867 = vmul.f32 %v1859, %v1859
        %v1868 = vmul.f32 %v1860, %v1860
        %v1869 = vmul.f32 %v1861, %v1861
        %v1870 = vmul.f32 %v1862, %v1862
        %v1871 = vmul.f32 %v1863, %v1863
        %1872 = vadd.xlane.f32.xlu0 %v1864
        %v1873 = vpop.xlane.xlu0 %1872
        %1874 = vadd.xlane.f32.xlu0 %v1865
        %v1875 = vpop.xlane.xlu0 %1874
        %1876 = vadd.xlane.f32.xlu0 %v1866
        %v1877 = vpop.xlane.xlu0 %1876
        %1878 = vadd.xlane.f32.xlu0 %v1867
        %v1879 = vpop.xlane.xlu0 %1878
        %1880 = vadd.xlane.f32.xlu0 %v1868
        %v1881 = vpop.xlane.xlu0 %1880
        %1882 = vadd.xlane.f32.xlu0 %v1869
        %v1883 = vpop.xlane.xlu0 %1882
        %1884 = vadd.xlane.f32.xlu0 %v1870
        %v1885 = vpop.xlane.xlu0 %1884
        %1886 = vadd.xlane.f32.xlu0 %v1871
        %v1887 = vpop.xlane.xlu0 %1886
        %v1888 = vmul.f32 %v1873, %v1847
        %v1889 = vmul.f32 %v1875, %v1847
        %v1890 = vmul.f32 %v1877, %v1847
        %v1891 = vmul.f32 %v1879, %v1847
        %v1892 = vmul.f32 %v1881, %v1847
        %v1893 = vmul.f32 %v1883, %v1847
        %v1894 = vmul.f32 %v1885, %v1847
        %v1895 = vmul.f32 %v1887, %v1847
        %v1896 = vadd.f32 %v1888, 1e-05
        %v1897 = vadd.f32 %v1889, 1e-05
        %v1898 = vadd.f32 %v1890, 1e-05
        %v1899 = vadd.f32 %v1891, 1e-05
        %v1900 = vadd.f32 %v1892, 1e-05
        %v1901 = vadd.f32 %v1893, 1e-05
        %v1902 = vadd.f32 %v1894, 1e-05
        %v1903 = vadd.f32 %v1895, 1e-05
        %v1904 = vrsqrt.pop %v1896
        %v1905 = vrsqrt.pop %v1897
        %v1906 = vrsqrt.pop %v1898
        %v1907 = vrsqrt.pop %v1899
        %v1908 = vrsqrt.pop %v1900
        %v1909 = vrsqrt.pop %v1901
        %v1910 = vrsqrt.pop %v1902
        %v1911 = vrsqrt.pop %v1903
        %v1912 = vmul.f32 %v1856, %v1904
        %v1913 = vmul.f32 %v1857, %v1905
        %v1914 = vmul.f32 %v1858, %v1906
        %v1915 = vmul.f32 %v1859, %v1907
        %v1916 = vmul.f32 %v1860, %v1908
        %v1917 = vmul.f32 %v1861, %v1909
        %v1918 = vmul.f32 %v1862, %v1910
        %v1919 = vmul.f32 %v1863, %v1911
        %v1920 = vld [vmem:[%s1] sm:$0x1]
        %v1922 = vlaneseq
        %v1923 = vshrl.u32 %v1922, 7
        %v1924 = vsub.s32 0, %v1923
        %v1925 = vrot.slane %v1920, %v1924
        %v1927 = vmul.f32 %v1912, %v1925
        %v1928 = vmul.f32 %v1913, %v1925
        %v1929 = vmul.f32 %v1914, %v1925
        %v1930 = vmul.f32 %v1915, %v1925
        %v1931 = vmul.f32 %v1916, %v1925
        %v1932 = vmul.f32 %v1917, %v1925
        %v1933 = vmul.f32 %v1918, %v1925
        %v1934 = vmul.f32 %v1919, %v1925
        %v1935 = vld [vmem:[#allocation7] sm:$0x1]
        %v1937 = vlaneseq
        %v1938 = vshrl.u32 %v1937, 7
        %v1939 = vsub.s32 0, %v1938
        %v1940 = vrot.slane %v1935, %v1939
        %v1942 = vadd.f32 %v1927, %v1940
        %v1943 = vadd.f32 %v1928, %v1940
        %v1944 = vadd.f32 %v1929, %v1940
        %v1945 = vadd.f32 %v1930, %v1940
        %v1946 = vadd.f32 %v1931, %v1940
        %v1947 = vadd.f32 %v1932, %v1940
        %v1948 = vadd.f32 %v1933, %v1940
        %v1949 = vadd.f32 %v1934, %v1940
        %v1950 = vpack.c.bf16 %v1943, %v1942
        %v1951 = vpack.c.bf16 %v1945, %v1944
        %v1952 = vpack.c.bf16 %v1947, %v1946
        %v1953 = vpack.c.bf16 %v1949, %v1948
        %v1954 = vld [vmem:[#allocation9] sm:$0xf]
        %v1955 = vld [vmem:[#allocation9 + $0x4] sm:$0xf]
        %v1956 = vld [vmem:[#allocation9 + $0x8] sm:$0xf]
        %v1957 = vld [vmem:[#allocation9 + $0xc] sm:$0xf]
        %v1958 = vld [vmem:[#allocation9 + $0x10] sm:$0xf]
        %v1959 = vld [vmem:[#allocation9 + $0x14] sm:$0xf]
        %v1960 = vld [vmem:[#allocation9 + $0x18] sm:$0xf]
        %v1961 = vld [vmem:[#allocation9 + $0x1c] sm:$0xf]
        %v1962 = vld [vmem:[#allocation9 + $0x20] sm:$0xf]
        %v1963 = vld [vmem:[#allocation9 + $0x24] sm:$0xf]
        %v1964 = vld [vmem:[#allocation9 + $0x28] sm:$0xf]
        %v1965 = vld [vmem:[#allocation9 + $0x2c] sm:$0xf]
        %v1966 = vld [vmem:[#allocation9 + $0x30] sm:$0xf]
        %v1967 = vld [vmem:[#allocation9 + $0x34] sm:$0xf]
        %v1968 = vld [vmem:[#allocation9 + $0x38] sm:$0xf]
        %v1969 = vld [vmem:[#allocation9 + $0x3c] sm:$0xf]
        %v1970 = vld [vmem:[%s4] sm:$0x1]
        %v1972 = vlaneseq
        %v1973 = vshrl.u32 %v1972, 7
        %v1974 = vsub.s32 0, %v1973
        %v1975 = vrot.slane %v1970, %v1974
        %v1993 = vunpack.c.l.b16 %v1954
        %v1994 = vunpack.c.l.b16 %v1955
        %v1995 = vunpack.c.l.b16 %v1956
        %v1996 = vunpack.c.l.b16 %v1957
        %v1997 = vunpack.c.l.b16 %v1958
        %v1998 = vunpack.c.l.b16 %v1959
        %v1999 = vunpack.c.l.b16 %v1960
        %v2000 = vunpack.c.l.b16 %v1961
        %v2001 = vunpack.c.l.b16 %v1962
        %v2002 = vunpack.c.l.b16 %v1963
        %v2003 = vunpack.c.l.b16 %v1964
        %v2004 = vunpack.c.l.b16 %v1965
        %v2005 = vunpack.c.l.b16 %v1966
        %v2006 = vunpack.c.l.b16 %v1967
        %v2007 = vunpack.c.l.b16 %v1968
        %v2008 = vunpack.c.l.b16 %v1969
        %v2009 = vpack.c.b16 %v1994, %v1993
        %v2010 = vpack.c.b16 %v1996, %v1995
        %v2011 = vpack.c.b16 %v1998, %v1997
        %v2012 = vpack.c.b16 %v2000, %v1999
        %v2013 = vpack.c.b16 %v2002, %v2001
        %v2014 = vpack.c.b16 %v2004, %v2003
        %v2015 = vpack.c.b16 %v2006, %v2005
        %v2016 = vpack.c.b16 %v2008, %v2007
        %2025 = vmatprep.subr.bf16.mxu0 0
        %2026 = vmatpush1.bf16.msra.mxu0 %v2016
        %2027 = vmatprep.subr.bf16.mxu0 0
        %2028 = vmatpush1.bf16.msra.mxu0 %v2015
        %2029 = vmatprep.subr.bf16.mxu0 0
        %2030 = vmatpush1.bf16.msra.mxu0 %v2014
        %2031 = vmatprep.subr.bf16.mxu0 0
        %2032 = vmatpush1.bf16.msra.mxu0 %v2013
        %2033 = vmatprep.subr.bf16.mxu0 0
        %2034 = vmatpush1.bf16.msra.mxu0 %v2012
        %2035 = vmatprep.subr.bf16.mxu0 0
        %2036 = vmatpush1.bf16.msra.mxu0 %v2011
        %2037 = vmatprep.subr.bf16.mxu0 0
        %2038 = vmatpush1.bf16.msra.mxu0 %v2010
        %2039 = vmatprep.subr.bf16.mxu0 0
        %2040 = vmatpush1.bf16.msra.mxu0 %v2009
        %2041 = vmatprep.subr.bf16.mxu0 0
        %2042 = vmatpush2.bf16.msra.mxu0 0
        %2043 = vmatprep.subr.bf16.mxu0 0
        %2044 = vmatpush2.bf16.msra.mxu0 0
        %2045 = vmatprep.subr.bf16.mxu0 0
        %2046 = vmatpush2.bf16.msra.mxu0 0
        %2047 = vmatprep.subr.bf16.mxu0 0
        %2048 = vmatpush2.bf16.msra.mxu0 0
        %2049 = vmatprep.subr.bf16.mxu0 0
        %2050 = vmatpush2.bf16.msra.mxu0 0
        %2051 = vmatprep.subr.bf16.mxu0 0
        %2052 = vmatpush2.bf16.msra.mxu0 0
        %2053 = vmatprep.subr.bf16.mxu0 0
        %2054 = vmatpush2.bf16.msra.mxu0 0
        %2055 = vmatprep.subr.bf16.mxu0 0
        %2056 = vmatpush2.bf16.msra.mxu0 0
        %2057 = vmatprep.mubr.bf16.mxu0 0
        %2058 = vmatmul.mubr.bf16.gmra.mxu0 %v1950
        %v2059 = vpop.f32.mrf.mxu0
        %v2060 = vadd.f32 %v1975, %v2059
        %v2061 = vpop.f32.mrf.mxu0
        %v2062 = vpop.f32.mrf.mxu0
        %v2063 = vadd.f32 %v1975, %v2062
        %v2064 = vpop.f32.mrf.mxu0
        %2065 = vmatprep.mubr.bf16.mxu0 0
        %2066 = vmatmul.mubr.bf16.gmra.mxu0 %v1951
        %v2067 = vpop.f32.mrf.mxu0
        %v2068 = vadd.f32 %v1975, %v2067
        %v2069 = vpop.f32.mrf.mxu0
        %v2070 = vpop.f32.mrf.mxu0
        %v2071 = vadd.f32 %v1975, %v2070
        %v2072 = vpop.f32.mrf.mxu0
        %2073 = vmatprep.mubr.bf16.mxu0 0
        %2074 = vmatmul.mubr.bf16.gmra.mxu0 %v1952
        %v2075 = vpop.f32.mrf.mxu0
        %v2076 = vadd.f32 %v1975, %v2075
        %v2077 = vpop.f32.mrf.mxu0
        %v2078 = vpop.f32.mrf.mxu0
        %v2079 = vadd.f32 %v1975, %v2078
        %v2080 = vpop.f32.mrf.mxu0
        %2081 = vmatprep.mubr.bf16.mxu0 0
        %2082 = vmatmul.mubr.bf16.gmra.mxu0 %v1953
        %v2083 = vpop.f32.mrf.mxu0
        %v2084 = vadd.f32 %v1975, %v2083
        %v2085 = vpop.f32.mrf.mxu0
        %v2086 = vpop.f32.mrf.mxu0
        %v2087 = vadd.f32 %v1975, %v2086
        %v2088 = vpop.f32.mrf.mxu0
        %2089 = vdwg.mxu0
        %v2090 = vmul.f32 %v2060, 0.17677669
        %v2091 = vmul.f32 %v2063, 0.17677669
        %v2092 = vmul.f32 %v2068, 0.17677669
        %v2093 = vmul.f32 %v2071, 0.17677669
        %v2094 = vmul.f32 %v2076, 0.17677669
        %v2095 = vmul.f32 %v2079, 0.17677669
        %v2096 = vmul.f32 %v2084, 0.17677669
        %v2097 = vmul.f32 %v2087, 0.17677669
        %v2098 = vpack.c.bf16 %v2091, %v2090
        %v2099 = vpack.c.bf16 %v2093, %v2092
        %v2100 = vpack.c.bf16 %v2095, %v2094
        %v2101 = vpack.c.bf16 %v2097, %v2096
        %2106 = vrot.lane.b32.xlu0 %v2098, 96
        %v2107 = vpop.permute.xlu0 %2106
        %2108 = vrot.lane.b32.xlu0 %v2099, 96
        %v2109 = vpop.permute.xlu0 %2108
        %2110 = vrot.lane.b32.xlu0 %v2100, 96
        %v2111 = vpop.permute.xlu0 %2110
        %2112 = vrot.lane.b32.xlu0 %v2101, 96
        %v2113 = vpop.permute.xlu0 %2112
        %2114 = vrot.lane.b32.xlu0 %v2098, 64
        %v2115 = vpop.permute.xlu0 %2114
        %2116 = vrot.lane.b32.xlu0 %v2099, 64
        %v2117 = vpop.permute.xlu0 %2116
        %2118 = vrot.lane.b32.xlu0 %v2100, 64
        %v2119 = vpop.permute.xlu0 %2118
        %2120 = vrot.lane.b32.xlu0 %v2101, 64
        %v2121 = vpop.permute.xlu0 %2120
        %2122 = vrot.lane.b32.xlu0 %v2098, 32
        %v2123 = vpop.permute.xlu0 %2122
        %2124 = vrot.lane.b32.xlu0 %v2099, 32
        %v2125 = vpop.permute.xlu0 %2124
        %2126 = vrot.lane.b32.xlu0 %v2100, 32
        %v2127 = vpop.permute.xlu0 %2126
        %2128 = vrot.lane.b32.xlu0 %v2101, 32
        %v2129 = vpop.permute.xlu0 %2128
        %v2130 = vld [vmem:[#allocation2] sm:$0xf]
        %v2131 = vld [vmem:[#allocation2 + $0x4] sm:$0xf]
        %v2132 = vld [vmem:[#allocation2 + $0x8] sm:$0xf]
        %v2133 = vld [vmem:[#allocation2 + $0xc] sm:$0xf]
        %v2134 = vld [vmem:[#allocation2 + $0x10] sm:$0xf]
        %v2135 = vld [vmem:[#allocation2 + $0x14] sm:$0xf]
        %v2136 = vld [vmem:[#allocation2 + $0x18] sm:$0xf]
        %v2137 = vld [vmem:[#allocation2 + $0x1c] sm:$0xf]
        %v2138 = vld [vmem:[#allocation2 + $0x20] sm:$0xf]
        %v2139 = vld [vmem:[#allocation2 + $0x24] sm:$0xf]
        %v2140 = vld [vmem:[#allocation2 + $0x28] sm:$0xf]
        %v2141 = vld [vmem:[#allocation2 + $0x2c] sm:$0xf]
        %v2142 = vld [vmem:[#allocation2 + $0x30] sm:$0xf]
        %v2143 = vld [vmem:[#allocation2 + $0x34] sm:$0xf]
        %v2144 = vld [vmem:[#allocation2 + $0x38] sm:$0xf]
        %v2145 = vld [vmem:[#allocation2 + $0x3c] sm:$0xf]
        %v2146 = vld [vmem:[#allocation2 + $0x40] sm:$0xf]
        %v2147 = vld [vmem:[#allocation2 + $0x44] sm:$0xf]
        %v2148 = vld [vmem:[#allocation2 + $0x48] sm:$0xf]
        %v2149 = vld [vmem:[#allocation2 + $0x4c] sm:$0xf]
        %v2150 = vld [vmem:[#allocation2 + $0x50] sm:$0xf]
        %v2151 = vld [vmem:[#allocation2 + $0x54] sm:$0xf]
        %v2152 = vld [vmem:[#allocation2 + $0x58] sm:$0xf]
        %v2153 = vld [vmem:[#allocation2 + $0x5c] sm:$0xf]
        %v2154 = vld [vmem:[#allocation2 + $0x60] sm:$0xf]
        %v2155 = vld [vmem:[#allocation2 + $0x64] sm:$0xf]
        %v2156 = vld [vmem:[#allocation2 + $0x68] sm:$0xf]
        %v2157 = vld [vmem:[#allocation2 + $0x6c] sm:$0xf]
        %v2158 = vld [vmem:[#allocation2 + $0x70] sm:$0xf]
        %v2159 = vld [vmem:[#allocation2 + $0x74] sm:$0xf]
        %v2160 = vld [vmem:[#allocation2 + $0x78] sm:$0xf]
        %v2161 = vld [vmem:[#allocation2 + $0x7c] sm:$0xf]
        %v2162 = vld [vmem:[#allocation2 + $0x80] sm:$0xf]
        %v2163 = vld [vmem:[#allocation2 + $0x84] sm:$0xf]
        %v2164 = vld [vmem:[#allocation2 + $0x88] sm:$0xf]
        %v2165 = vld [vmem:[#allocation2 + $0x8c] sm:$0xf]
        %v2166 = vld [vmem:[#allocation2 + $0x90] sm:$0xf]
        %v2167 = vld [vmem:[#allocation2 + $0x94] sm:$0xf]
        %v2168 = vld [vmem:[#allocation2 + $0x98] sm:$0xf]
        %v2169 = vld [vmem:[#allocation2 + $0x9c] sm:$0xf]
        %v2170 = vld [vmem:[#allocation2 + $0xa0] sm:$0xf]
        %v2171 = vld [vmem:[#allocation2 + $0xa4] sm:$0xf]
        %v2172 = vld [vmem:[#allocation2 + $0xa8] sm:$0xf]
        %v2173 = vld [vmem:[#allocation2 + $0xac] sm:$0xf]
        %v2174 = vld [vmem:[#allocation2 + $0xb0] sm:$0xf]
        %v2175 = vld [vmem:[#allocation2 + $0xb4] sm:$0xf]
        %v2176 = vld [vmem:[#allocation2 + $0xb8] sm:$0xf]
        %v2177 = vld [vmem:[#allocation2 + $0xbc] sm:$0xf]
        %v2178 = vld [vmem:[#allocation2 + $0xc0] sm:$0xf]
        %v2179 = vld [vmem:[#allocation2 + $0xc4] sm:$0xf]
        %v2180 = vld [vmem:[#allocation2 + $0xc8] sm:$0xf]
        %v2181 = vld [vmem:[#allocation2 + $0xcc] sm:$0xf]
        %v2182 = vld [vmem:[#allocation2 + $0xd0] sm:$0xf]
        %v2183 = vld [vmem:[#allocation2 + $0xd4] sm:$0xf]
        %v2184 = vld [vmem:[#allocation2 + $0xd8] sm:$0xf]
        %v2185 = vld [vmem:[#allocation2 + $0xdc] sm:$0xf]
        %v2186 = vld [vmem:[#allocation2 + $0xe0] sm:$0xf]
        %v2187 = vld [vmem:[#allocation2 + $0xe4] sm:$0xf]
        %v2188 = vld [vmem:[#allocation2 + $0xe8] sm:$0xf]
        %v2189 = vld [vmem:[#allocation2 + $0xec] sm:$0xf]
        %v2190 = vld [vmem:[#allocation2 + $0xf0] sm:$0xf]
        %v2191 = vld [vmem:[#allocation2 + $0xf4] sm:$0xf]
        %v2192 = vld [vmem:[#allocation2 + $0xf8] sm:$0xf]
        %v2193 = vld [vmem:[#allocation2 + $0xfc] sm:$0xf]
        %v2210 = vunpack.c.l.b16 %v2130
        %v2211 = vunpack.c.l.b16 %v2131
        %v2212 = vunpack.c.l.b16 %v2132
        %v2213 = vunpack.c.l.b16 %v2133
        %v2214 = vunpack.c.l.b16 %v2134
        %v2215 = vunpack.c.l.b16 %v2135
        %v2216 = vunpack.c.l.b16 %v2136
        %v2217 = vunpack.c.l.b16 %v2137
        %v2218 = vunpack.c.l.b16 %v2138
        %v2219 = vunpack.c.l.b16 %v2139
        %v2220 = vunpack.c.l.b16 %v2140
        %v2221 = vunpack.c.l.b16 %v2141
        %v2222 = vunpack.c.l.b16 %v2142
        %v2223 = vunpack.c.l.b16 %v2143
        %v2224 = vunpack.c.l.b16 %v2144
        %v2225 = vunpack.c.l.b16 %v2145
        %v2226 = vpack.c.b16 %v2211, %v2210
        %v2227 = vpack.c.b16 %v2213, %v2212
        %v2228 = vpack.c.b16 %v2215, %v2214
        %v2229 = vpack.c.b16 %v2217, %v2216
        %v2230 = vpack.c.b16 %v2219, %v2218
        %v2231 = vpack.c.b16 %v2221, %v2220
        %v2232 = vpack.c.b16 %v2223, %v2222
        %v2233 = vpack.c.b16 %v2225, %v2224
        %vm2234 = vcmask 261120
        %v2236 = vsel %vm2234, %v2098, 0
        %v2239 = vsel %vm2234, %v2099, 0
        %v2242 = vsel %vm2234, %v2100, 0
        %v2245 = vsel %vm2234, %v2101, 0
        %v2248 = vsel %vm2234, %v2226, 0
        %v2251 = vsel %vm2234, %v2227, 0
        %v2254 = vsel %vm2234, %v2228, 0
        %v2257 = vsel %vm2234, %v2229, 0
        %v2260 = vsel %vm2234, %v2230, 0
        %v2263 = vsel %vm2234, %v2231, 0
        %v2266 = vsel %vm2234, %v2232, 0
        %v2269 = vsel %vm2234, %v2233, 0
        %2271 = vmatprep.subr.bf16.mxu0 0
        %2272 = vmatpush1.bf16.xpose.msra.mxu0 %v2269
        %2273 = vmatprep.subr.bf16.mxu0 0
        %2274 = vmatpush1.bf16.xpose.msra.mxu0 %v2266
        %2275 = vmatprep.subr.bf16.mxu0 0
        %2276 = vmatpush1.bf16.xpose.msra.mxu0 %v2263
        %2277 = vmatprep.subr.bf16.mxu0 0
        %2278 = vmatpush1.bf16.xpose.msra.mxu0 %v2260
        %2279 = vmatprep.subr.bf16.mxu0 0
        %2280 = vmatpush1.bf16.xpose.msra.mxu0 %v2257
        %2281 = vmatprep.subr.bf16.mxu0 0
        %2282 = vmatpush1.bf16.xpose.msra.mxu0 %v2254
        %2283 = vmatprep.subr.bf16.mxu0 0
        %2284 = vmatpush1.bf16.xpose.msra.mxu0 %v2251
        %2285 = vmatprep.subr.bf16.mxu0 0
        %2286 = vmatpush1.bf16.xpose.msra.mxu0 %v2248
        %2287 = vmatprep.subr.bf16.mxu0 0
        %2288 = vmatpush2.bf16.xpose.msra.mxu0 0
        %2289 = vmatprep.subr.bf16.mxu0 0
        %2290 = vmatpush2.bf16.xpose.msra.mxu0 0
        %2291 = vmatprep.subr.bf16.mxu0 0
        %2292 = vmatpush2.bf16.xpose.msra.mxu0 0
        %2293 = vmatprep.subr.bf16.mxu0 0
        %2294 = vmatpush2.bf16.xpose.msra.mxu0 0
        %2295 = vmatprep.subr.bf16.mxu0 0
        %2296 = vmatpush2.bf16.xpose.msra.mxu0 0
        %2297 = vmatprep.subr.bf16.mxu0 0
        %2298 = vmatpush2.bf16.xpose.msra.mxu0 0
        %2299 = vmatprep.subr.bf16.mxu0 0
        %2300 = vmatpush2.bf16.xpose.msra.mxu0 0
        %2301 = vmatprep.subr.bf16.mxu0 0
        %2302 = vmatpush2.bf16.xpose.msra.mxu0 0
        %2303 = vmatprep.mubr.bf16.mxu0 0
        %2304 = vmatmul.mubr.bf16.gmra.mxu0 %v2236
        %v2305 = vpop.f32.mrf.mxu0
        %v2306 = vadd.f32 0.0, %v2305
        %v2307 = vpop.f32.mrf.mxu0
        %v2308 = vpop.f32.mrf.mxu0
        %v2309 = vadd.f32 0.0, %v2308
        %v2310 = vpop.f32.mrf.mxu0
        %2311 = vmatprep.mubr.bf16.mxu0 0
        %2312 = vmatmul.mubr.bf16.gmra.mxu0 %v2239
        %v2313 = vpop.f32.mrf.mxu0
        %v2314 = vadd.f32 0.0, %v2313
        %v2315 = vpop.f32.mrf.mxu0
        %v2316 = vpop.f32.mrf.mxu0
        %v2317 = vadd.f32 0.0, %v2316
        %v2318 = vpop.f32.mrf.mxu0
        %2319 = vmatprep.mubr.bf16.mxu0 0
        %2320 = vmatmul.mubr.bf16.gmra.mxu0 %v2242
        %v2321 = vpop.f32.mrf.mxu0
        %v2322 = vadd.f32 0.0, %v2321
        %v2323 = vpop.f32.mrf.mxu0
        %v2324 = vpop.f32.mrf.mxu0
        %v2325 = vadd.f32 0.0, %v2324
        %v2326 = vpop.f32.mrf.mxu0
        %2327 = vmatprep.mubr.bf16.mxu0 0
        %2328 = vmatmul.mubr.bf16.gmra.mxu0 %v2245
        %v2329 = vpop.f32.mrf.mxu0
        %v2330 = vadd.f32 0.0, %v2329
        %v2331 = vpop.f32.mrf.mxu0
        %v2332 = vpop.f32.mrf.mxu0
        %v2333 = vadd.f32 0.0, %v2332
        %v2334 = vpop.f32.mrf.mxu0
        %2335 = vdwg.mxu0
        %v2352 = vunpack.c.l.b16 %v2146
        %v2353 = vunpack.c.l.b16 %v2147
        %v2354 = vunpack.c.l.b16 %v2148
        %v2355 = vunpack.c.l.b16 %v2149
        %v2356 = vunpack.c.l.b16 %v2150
        %v2357 = vunpack.c.l.b16 %v2151
        %v2358 = vunpack.c.l.b16 %v2152
        %v2359 = vunpack.c.l.b16 %v2153
        %v2360 = vunpack.c.l.b16 %v2154
        %v2361 = vunpack.c.l.b16 %v2155
        %v2362 = vunpack.c.l.b16 %v2156
        %v2363 = vunpack.c.l.b16 %v2157
        %v2364 = vunpack.c.l.b16 %v2158
        %v2365 = vunpack.c.l.b16 %v2159
        %v2366 = vunpack.c.l.b16 %v2160
        %v2367 = vunpack.c.l.b16 %v2161
        %v2368 = vpack.c.b16 %v2353, %v2352
        %v2369 = vpack.c.b16 %v2355, %v2354
        %v2370 = vpack.c.b16 %v2357, %v2356
        %v2371 = vpack.c.b16 %v2359, %v2358
        %v2372 = vpack.c.b16 %v2361, %v2360
        %v2373 = vpack.c.b16 %v2363, %v2362
        %v2374 = vpack.c.b16 %v2365, %v2364
        %v2375 = vpack.c.b16 %v2367, %v2366
        %v2377 = vsel %vm2234, %v2107, 0
        %v2380 = vsel %vm2234, %v2109, 0
        %v2383 = vsel %vm2234, %v2111, 0
        %v2386 = vsel %vm2234, %v2113, 0
        %v2389 = vsel %vm2234, %v2368, 0
        %v2392 = vsel %vm2234, %v2369, 0
        %v2395 = vsel %vm2234, %v2370, 0
        %v2398 = vsel %vm2234, %v2371, 0
        %v2401 = vsel %vm2234, %v2372, 0
        %v2404 = vsel %vm2234, %v2373, 0
        %v2407 = vsel %vm2234, %v2374, 0
        %v2410 = vsel %vm2234, %v2375, 0
        %2412 = vmatprep.subr.bf16.mxu0 0
        %2413 = vmatpush1.bf16.xpose.msra.mxu0 %v2410
        %2414 = vmatprep.subr.bf16.mxu0 0
        %2415 = vmatpush1.bf16.xpose.msra.mxu0 %v2407
        %2416 = vmatprep.subr.bf16.mxu0 0
        %2417 = vmatpush1.bf16.xpose.msra.mxu0 %v2404
        %2418 = vmatprep.subr.bf16.mxu0 0
        %2419 = vmatpush1.bf16.xpose.msra.mxu0 %v2401
        %2420 = vmatprep.subr.bf16.mxu0 0
        %2421 = vmatpush1.bf16.xpose.msra.mxu0 %v2398
        %2422 = vmatprep.subr.bf16.mxu0 0
        %2423 = vmatpush1.bf16.xpose.msra.mxu0 %v2395
        %2424 = vmatprep.subr.bf16.mxu0 0
        %2425 = vmatpush1.bf16.xpose.msra.mxu0 %v2392
        %2426 = vmatprep.subr.bf16.mxu0 0
        %2427 = vmatpush1.bf16.xpose.msra.mxu0 %v2389
        %2428 = vmatprep.subr.bf16.mxu0 0
        %2429 = vmatpush2.bf16.xpose.msra.mxu0 0
        %2430 = vmatprep.subr.bf16.mxu0 0
        %2431 = vmatpush2.bf16.xpose.msra.mxu0 0
        %2432 = vmatprep.subr.bf16.mxu0 0
        %2433 = vmatpush2.bf16.xpose.msra.mxu0 0
        %2434 = vmatprep.subr.bf16.mxu0 0
        %2435 = vmatpush2.bf16.xpose.msra.mxu0 0
        %2436 = vmatprep.subr.bf16.mxu0 0
        %2437 = vmatpush2.bf16.xpose.msra.mxu0 0
        %2438 = vmatprep.subr.bf16.mxu0 0
        %2439 = vmatpush2.bf16.xpose.msra.mxu0 0
        %2440 = vmatprep.subr.bf16.mxu0 0
        %2441 = vmatpush2.bf16.xpose.msra.mxu0 0
        %2442 = vmatprep.subr.bf16.mxu0 0
        %2443 = vmatpush2.bf16.xpose.msra.mxu0 0
        %2444 = vmatprep.mubr.bf16.mxu0 0
        %2445 = vmatmul.mubr.bf16.gmra.mxu0 %v2377
        %v2446 = vpop.f32.mrf.mxu0
        %v2447 = vadd.f32 0.0, %v2446
        %v2448 = vpop.f32.mrf.mxu0
        %v2449 = vpop.f32.mrf.mxu0
        %v2450 = vadd.f32 0.0, %v2449
        %v2451 = vpop.f32.mrf.mxu0
        %2452 = vmatprep.mubr.bf16.mxu0 0
        %2453 = vmatmul.mubr.bf16.gmra.mxu0 %v2380
        %v2454 = vpop.f32.mrf.mxu0
        %v2455 = vadd.f32 0.0, %v2454
        %v2456 = vpop.f32.mrf.mxu0
        %v2457 = vpop.f32.mrf.mxu0
        %v2458 = vadd.f32 0.0, %v2457
        %v2459 = vpop.f32.mrf.mxu0
        %2460 = vmatprep.mubr.bf16.mxu0 0
        %2461 = vmatmul.mubr.bf16.gmra.mxu0 %v2383
        %v2462 = vpop.f32.mrf.mxu0
        %v2463 = vadd.f32 0.0, %v2462
        %v2464 = vpop.f32.mrf.mxu0
        %v2465 = vpop.f32.mrf.mxu0
        %v2466 = vadd.f32 0.0, %v2465
        %v2467 = vpop.f32.mrf.mxu0
        %2468 = vmatprep.mubr.bf16.mxu0 0
        %2469 = vmatmul.mubr.bf16.gmra.mxu0 %v2386
        %v2470 = vpop.f32.mrf.mxu0
        %v2471 = vadd.f32 0.0, %v2470
        %v2472 = vpop.f32.mrf.mxu0
        %v2473 = vpop.f32.mrf.mxu0
        %v2474 = vadd.f32 0.0, %v2473
        %v2475 = vpop.f32.mrf.mxu0
        %2476 = vdwg.mxu0
        %v2493 = vunpack.c.l.b16 %v2162
        %v2494 = vunpack.c.l.b16 %v2163
        %v2495 = vunpack.c.l.b16 %v2164
        %v2496 = vunpack.c.l.b16 %v2165
        %v2497 = vunpack.c.l.b16 %v2166
        %v2498 = vunpack.c.l.b16 %v2167
        %v2499 = vunpack.c.l.b16 %v2168
        %v2500 = vunpack.c.l.b16 %v2169
        %v2501 = vunpack.c.l.b16 %v2170
        %v2502 = vunpack.c.l.b16 %v2171
        %v2503 = vunpack.c.l.b16 %v2172
        %v2504 = vunpack.c.l.b16 %v2173
        %v2505 = vunpack.c.l.b16 %v2174
        %v2506 = vunpack.c.l.b16 %v2175
        %v2507 = vunpack.c.l.b16 %v2176
        %v2508 = vunpack.c.l.b16 %v2177
        %v2509 = vpack.c.b16 %v2494, %v2493
        %v2510 = vpack.c.b16 %v2496, %v2495
        %v2511 = vpack.c.b16 %v2498, %v2497
        %v2512 = vpack.c.b16 %v2500, %v2499
        %v2513 = vpack.c.b16 %v2502, %v2501
        %v2514 = vpack.c.b16 %v2504, %v2503
        %v2515 = vpack.c.b16 %v2506, %v2505
        %v2516 = vpack.c.b16 %v2508, %v2507
        %v2518 = vsel %vm2234, %v2115, 0
        %v2521 = vsel %vm2234, %v2117, 0
        %v2524 = vsel %vm2234, %v2119, 0
        %v2527 = vsel %vm2234, %v2121, 0
        %v2530 = vsel %vm2234, %v2509, 0
        %v2533 = vsel %vm2234, %v2510, 0
        %v2536 = vsel %vm2234, %v2511, 0
        %v2539 = vsel %vm2234, %v2512, 0
        %v2542 = vsel %vm2234, %v2513, 0
        %v2545 = vsel %vm2234, %v2514, 0
        %v2548 = vsel %vm2234, %v2515, 0
        %v2551 = vsel %vm2234, %v2516, 0
        %2553 = vmatprep.subr.bf16.mxu0 0
        %2554 = vmatpush1.bf16.xpose.msra.mxu0 %v2551
        %2555 = vmatprep.subr.bf16.mxu0 0
        %2556 = vmatpush1.bf16.xpose.msra.mxu0 %v2548
        %2557 = vmatprep.subr.bf16.mxu0 0
        %2558 = vmatpush1.bf16.xpose.msra.mxu0 %v2545
        %2559 = vmatprep.subr.bf16.mxu0 0
        %2560 = vmatpush1.bf16.xpose.msra.mxu0 %v2542
        %2561 = vmatprep.subr.bf16.mxu0 0
        %2562 = vmatpush1.bf16.xpose.msra.mxu0 %v2539
        %2563 = vmatprep.subr.bf16.mxu0 0
        %2564 = vmatpush1.bf16.xpose.msra.mxu0 %v2536
        %2565 = vmatprep.subr.bf16.mxu0 0
        %2566 = vmatpush1.bf16.xpose.msra.mxu0 %v2533
        %2567 = vmatprep.subr.bf16.mxu0 0
        %2568 = vmatpush1.bf16.xpose.msra.mxu0 %v2530
        %2569 = vmatprep.subr.bf16.mxu0 0
        %2570 = vmatpush2.bf16.xpose.msra.mxu0 0
        %2571 = vmatprep.subr.bf16.mxu0 0
        %2572 = vmatpush2.bf16.xpose.msra.mxu0 0
        %2573 = vmatprep.subr.bf16.mxu0 0
        %2574 = vmatpush2.bf16.xpose.msra.mxu0 0
        %2575 = vmatprep.subr.bf16.mxu0 0
        %2576 = vmatpush2.bf16.xpose.msra.mxu0 0
        %2577 = vmatprep.subr.bf16.mxu0 0
        %2578 = vmatpush2.bf16.xpose.msra.mxu0 0
        %2579 = vmatprep.subr.bf16.mxu0 0
        %2580 = vmatpush2.bf16.xpose.msra.mxu0 0
        %2581 = vmatprep.subr.bf16.mxu0 0
        %2582 = vmatpush2.bf16.xpose.msra.mxu0 0
        %2583 = vmatprep.subr.bf16.mxu0 0
        %2584 = vmatpush2.bf16.xpose.msra.mxu0 0
        %2585 = vmatprep.mubr.bf16.mxu0 0
        %2586 = vmatmul.mubr.bf16.gmra.mxu0 %v2518
        %v2587 = vpop.f32.mrf.mxu0
        %v2588 = vadd.f32 0.0, %v2587
        %v2589 = vpop.f32.mrf.mxu0
        %v2590 = vpop.f32.mrf.mxu0
        %v2591 = vadd.f32 0.0, %v2590
        %v2592 = vpop.f32.mrf.mxu0
        %2593 = vmatprep.mubr.bf16.mxu0 0
        %2594 = vmatmul.mubr.bf16.gmra.mxu0 %v2521
        %v2595 = vpop.f32.mrf.mxu0
        %v2596 = vadd.f32 0.0, %v2595
        %v2597 = vpop.f32.mrf.mxu0
        %v2598 = vpop.f32.mrf.mxu0
        %v2599 = vadd.f32 0.0, %v2598
        %v2600 = vpop.f32.mrf.mxu0
        %2601 = vmatprep.mubr.bf16.mxu0 0
        %2602 = vmatmul.mubr.bf16.gmra.mxu0 %v2524
        %v2603 = vpop.f32.mrf.mxu0
        %v2604 = vadd.f32 0.0, %v2603
        %v2605 = vpop.f32.mrf.mxu0
        %v2606 = vpop.f32.mrf.mxu0
        %v2607 = vadd.f32 0.0, %v2606
        %v2608 = vpop.f32.mrf.mxu0
        %2609 = vmatprep.mubr.bf16.mxu0 0
        %2610 = vmatmul.mubr.bf16.gmra.mxu0 %v2527
        %v2611 = vpop.f32.mrf.mxu0
        %v2612 = vadd.f32 0.0, %v2611
        %v2613 = vpop.f32.mrf.mxu0
        %v2614 = vpop.f32.mrf.mxu0
        %v2615 = vadd.f32 0.0, %v2614
        %v2616 = vpop.f32.mrf.mxu0
        %2617 = vdwg.mxu0
        %v2634 = vunpack.c.l.b16 %v2178
        %v2635 = vunpack.c.l.b16 %v2179
        %v2636 = vunpack.c.l.b16 %v2180
        %v2637 = vunpack.c.l.b16 %v2181
        %v2638 = vunpack.c.l.b16 %v2182
        %v2639 = vunpack.c.l.b16 %v2183
        %v2640 = vunpack.c.l.b16 %v2184
        %v2641 = vunpack.c.l.b16 %v2185
        %v2642 = vunpack.c.l.b16 %v2186
        %v2643 = vunpack.c.l.b16 %v2187
        %v2644 = vunpack.c.l.b16 %v2188
        %v2645 = vunpack.c.l.b16 %v2189
        %v2646 = vunpack.c.l.b16 %v2190
        %v2647 = vunpack.c.l.b16 %v2191
        %v2648 = vunpack.c.l.b16 %v2192
        %v2649 = vunpack.c.l.b16 %v2193
        %v2650 = vpack.c.b16 %v2635, %v2634
        %v2651 = vpack.c.b16 %v2637, %v2636
        %v2652 = vpack.c.b16 %v2639, %v2638
        %v2653 = vpack.c.b16 %v2641, %v2640
        %v2654 = vpack.c.b16 %v2643, %v2642
        %v2655 = vpack.c.b16 %v2645, %v2644
        %v2656 = vpack.c.b16 %v2647, %v2646
        %v2657 = vpack.c.b16 %v2649, %v2648
        %v2659 = vsel %vm2234, %v2123, 0
        %v2662 = vsel %vm2234, %v2125, 0
        %v2665 = vsel %vm2234, %v2127, 0
        %v2668 = vsel %vm2234, %v2129, 0
        %v2671 = vsel %vm2234, %v2650, 0
        %v2674 = vsel %vm2234, %v2651, 0
        %v2677 = vsel %vm2234, %v2652, 0
        %v2680 = vsel %vm2234, %v2653, 0
        %v2683 = vsel %vm2234, %v2654, 0
        %v2686 = vsel %vm2234, %v2655, 0
        %v2689 = vsel %vm2234, %v2656, 0
        %v2692 = vsel %vm2234, %v2657, 0
        %2694 = vmatprep.subr.bf16.mxu0 0
        %2695 = vmatpush1.bf16.xpose.msra.mxu0 %v2692
        %2696 = vmatprep.subr.bf16.mxu0 0
        %2697 = vmatpush1.bf16.xpose.msra.mxu0 %v2689
        %2698 = vmatprep.subr.bf16.mxu0 0
        %2699 = vmatpush1.bf16.xpose.msra.mxu0 %v2686
        %2700 = vmatprep.subr.bf16.mxu0 0
        %2701 = vmatpush1.bf16.xpose.msra.mxu0 %v2683
        %2702 = vmatprep.subr.bf16.mxu0 0
        %2703 = vmatpush1.bf16.xpose.msra.mxu0 %v2680
        %2704 = vmatprep.subr.bf16.mxu0 0
        %2705 = vmatpush1.bf16.xpose.msra.mxu0 %v2677
        %2706 = vmatprep.subr.bf16.mxu0 0
        %2707 = vmatpush1.bf16.xpose.msra.mxu0 %v2674
        %2708 = vmatprep.subr.bf16.mxu0 0
        %2709 = vmatpush1.bf16.xpose.msra.mxu0 %v2671
        %2710 = vmatprep.subr.bf16.mxu0 0
        %2711 = vmatpush2.bf16.xpose.msra.mxu0 0
        %2712 = vmatprep.subr.bf16.mxu0 0
        %2713 = vmatpush2.bf16.xpose.msra.mxu0 0
        %2714 = vmatprep.subr.bf16.mxu0 0
        %2715 = vmatpush2.bf16.xpose.msra.mxu0 0
        %2716 = vmatprep.subr.bf16.mxu0 0
        %2717 = vmatpush2.bf16.xpose.msra.mxu0 0
        %2718 = vmatprep.subr.bf16.mxu0 0
        %2719 = vmatpush2.bf16.xpose.msra.mxu0 0
        %2720 = vmatprep.subr.bf16.mxu0 0
        %2721 = vmatpush2.bf16.xpose.msra.mxu0 0
        %2722 = vmatprep.subr.bf16.mxu0 0
        %2723 = vmatpush2.bf16.xpose.msra.mxu0 0
        %2724 = vmatprep.subr.bf16.mxu0 0
        %2725 = vmatpush2.bf16.xpose.msra.mxu0 0
        %2726 = vmatprep.mubr.bf16.mxu0 0
        %2727 = vmatmul.mubr.bf16.gmra.mxu0 %v2659
        %v2728 = vpop.f32.mrf.mxu0
        %v2729 = vadd.f32 0.0, %v2728
        %v2730 = vpop.f32.mrf.mxu0
        %v2731 = vpop.f32.mrf.mxu0
        %v2732 = vadd.f32 0.0, %v2731
        %v2733 = vpop.f32.mrf.mxu0
        %2734 = vmatprep.mubr.bf16.mxu0 0
        %2735 = vmatmul.mubr.bf16.gmra.mxu0 %v2662
        %v2736 = vpop.f32.mrf.mxu0
        %v2737 = vadd.f32 0.0, %v2736
        %v2738 = vpop.f32.mrf.mxu0
        %v2739 = vpop.f32.mrf.mxu0
        %v2740 = vadd.f32 0.0, %v2739
        %v2741 = vpop.f32.mrf.mxu0
        %2742 = vmatprep.mubr.bf16.mxu0 0
        %2743 = vmatmul.mubr.bf16.gmra.mxu0 %v2665
        %v2744 = vpop.f32.mrf.mxu0
        %v2745 = vadd.f32 0.0, %v2744
        %v2746 = vpop.f32.mrf.mxu0
        %v2747 = vpop.f32.mrf.mxu0
        %v2748 = vadd.f32 0.0, %v2747
        %v2749 = vpop.f32.mrf.mxu0
        %2750 = vmatprep.mubr.bf16.mxu0 0
        %2751 = vmatmul.mubr.bf16.gmra.mxu0 %v2668
        %v2752 = vpop.f32.mrf.mxu0
        %v2753 = vadd.f32 0.0, %v2752
        %v2754 = vpop.f32.mrf.mxu0
        %v2755 = vpop.f32.mrf.mxu0
        %v2756 = vadd.f32 0.0, %v2755
        %v2757 = vpop.f32.mrf.mxu0
        %2758 = vdwg.mxu0
        %2759 = vmax.xlane.f32.xlu0 %v2306
        %v2760 = vpop.xlane.xlu0 %2759
        %2761 = vmax.xlane.f32.xlu0 %v2309
        %v2762 = vpop.xlane.xlu0 %2761
        %2763 = vmax.xlane.f32.xlu0 %v2314
        %v2764 = vpop.xlane.xlu0 %2763
        %2765 = vmax.xlane.f32.xlu0 %v2317
        %v2766 = vpop.xlane.xlu0 %2765
        %2767 = vmax.xlane.f32.xlu0 %v2322
        %v2768 = vpop.xlane.xlu0 %2767
        %2769 = vmax.xlane.f32.xlu0 %v2325
        %v2770 = vpop.xlane.xlu0 %2769
        %2771 = vmax.xlane.f32.xlu0 %v2330
        %v2772 = vpop.xlane.xlu0 %2771
        %2773 = vmax.xlane.f32.xlu0 %v2333
        %v2774 = vpop.xlane.xlu0 %2773
        %2775 = vmax.xlane.f32.xlu0 %v2447
        %v2776 = vpop.xlane.xlu0 %2775
        %2777 = vmax.xlane.f32.xlu0 %v2450
        %v2778 = vpop.xlane.xlu0 %2777
        %2779 = vmax.xlane.f32.xlu0 %v2455
        %v2780 = vpop.xlane.xlu0 %2779
        %2781 = vmax.xlane.f32.xlu0 %v2458
        %v2782 = vpop.xlane.xlu0 %2781
        %2783 = vmax.xlane.f32.xlu0 %v2463
        %v2784 = vpop.xlane.xlu0 %2783
        %2785 = vmax.xlane.f32.xlu0 %v2466
        %v2786 = vpop.xlane.xlu0 %2785
        %2787 = vmax.xlane.f32.xlu0 %v2471
        %v2788 = vpop.xlane.xlu0 %2787
        %2789 = vmax.xlane.f32.xlu0 %v2474
        %v2790 = vpop.xlane.xlu0 %2789
        %2791 = vmax.xlane.f32.xlu0 %v2588
        %v2792 = vpop.xlane.xlu0 %2791
        %2793 = vmax.xlane.f32.xlu0 %v2591
        %v2794 = vpop.xlane.xlu0 %2793
        %2795 = vmax.xlane.f32.xlu0 %v2596
        %v2796 = vpop.xlane.xlu0 %2795
        %2797 = vmax.xlane.f32.xlu0 %v2599
        %v2798 = vpop.xlane.xlu0 %2797
        %2799 = vmax.xlane.f32.xlu0 %v2604
        %v2800 = vpop.xlane.xlu0 %2799
        %2801 = vmax.xlane.f32.xlu0 %v2607
        %v2802 = vpop.xlane.xlu0 %2801
        %2803 = vmax.xlane.f32.xlu0 %v2612
        %v2804 = vpop.xlane.xlu0 %2803
        %2805 = vmax.xlane.f32.xlu0 %v2615
        %v2806 = vpop.xlane.xlu0 %2805
        %2807 = vmax.xlane.f32.xlu0 %v2729
        %v2808 = vpop.xlane.xlu0 %2807
        %2809 = vmax.xlane.f32.xlu0 %v2732
        %v2810 = vpop.xlane.xlu0 %2809
        %2811 = vmax.xlane.f32.xlu0 %v2737
        %v2812 = vpop.xlane.xlu0 %2811
        %2813 = vmax.xlane.f32.xlu0 %v2740
        %v2814 = vpop.xlane.xlu0 %2813
        %2815 = vmax.xlane.f32.xlu0 %v2745
        %v2816 = vpop.xlane.xlu0 %2815
        %2817 = vmax.xlane.f32.xlu0 %v2748
        %v2818 = vpop.xlane.xlu0 %2817
        %2819 = vmax.xlane.f32.xlu0 %v2753
        %v2820 = vpop.xlane.xlu0 %2819
        %2821 = vmax.xlane.f32.xlu0 %v2756
        %v2822 = vpop.xlane.xlu0 %2821
        %v2823 = vsub.f32 %v2306, %v2760
        %v2824 = vsub.f32 %v2309, %v2762
        %v2825 = vsub.f32 %v2314, %v2764
        %v2826 = vsub.f32 %v2317, %v2766
        %v2827 = vsub.f32 %v2322, %v2768
        %v2828 = vsub.f32 %v2325, %v2770
        %v2829 = vsub.f32 %v2330, %v2772
        %v2830 = vsub.f32 %v2333, %v2774
        %v2831 = vsub.f32 %v2447, %v2776
        %v2832 = vsub.f32 %v2450, %v2778
        %v2833 = vsub.f32 %v2455, %v2780
        %v2834 = vsub.f32 %v2458, %v2782
        %v2835 = vsub.f32 %v2463, %v2784
        %v2836 = vsub.f32 %v2466, %v2786
        %v2837 = vsub.f32 %v2471, %v2788
        %v2838 = vsub.f32 %v2474, %v2790
        %v2839 = vsub.f32 %v2588, %v2792
        %v2840 = vsub.f32 %v2591, %v2794
        %v2841 = vsub.f32 %v2596, %v2796
        %v2842 = vsub.f32 %v2599, %v2798
        %v2843 = vsub.f32 %v2604, %v2800
        %v2844 = vsub.f32 %v2607, %v2802
        %v2845 = vsub.f32 %v2612, %v2804
        %v2846 = vsub.f32 %v2615, %v2806
        %v2847 = vsub.f32 %v2729, %v2808
        %v2848 = vsub.f32 %v2732, %v2810
        %v2849 = vsub.f32 %v2737, %v2812
        %v2850 = vsub.f32 %v2740, %v2814
        %v2851 = vsub.f32 %v2745, %v2816
        %v2852 = vsub.f32 %v2748, %v2818
        %v2853 = vsub.f32 %v2753, %v2820
        %v2854 = vsub.f32 %v2756, %v2822
        %v2855 = vmul.f32 %v2823, 1.442695
        %v2856 = vpow.pop %v2855
        %v2857 = vmul.f32 %v2824, 1.442695
        %v2858 = vpow.pop %v2857
        %v2859 = vmul.f32 %v2825, 1.442695
        %v2860 = vpow.pop %v2859
        %v2861 = vmul.f32 %v2826, 1.442695
        %v2862 = vpow.pop %v2861
        %v2863 = vmul.f32 %v2827, 1.442695
        %v2864 = vpow.pop %v2863
        %v2865 = vmul.f32 %v2828, 1.442695
        %v2866 = vpow.pop %v2865
        %v2867 = vmul.f32 %v2829, 1.442695
        %v2868 = vpow.pop %v2867
        %v2869 = vmul.f32 %v2830, 1.442695
        %v2870 = vpow.pop %v2869
        %v2871 = vmul.f32 %v2831, 1.442695
        %v2872 = vpow.pop %v2871
        %v2873 = vmul.f32 %v2832, 1.442695
        %v2874 = vpow.pop %v2873
        %v2875 = vmul.f32 %v2833, 1.442695
        %v2876 = vpow.pop %v2875
        %v2877 = vmul.f32 %v2834, 1.442695
        %v2878 = vpow.pop %v2877
        %v2879 = vmul.f32 %v2835, 1.442695
        %v2880 = vpow.pop %v2879
        %v2881 = vmul.f32 %v2836, 1.442695
        %v2882 = vpow.pop %v2881
        %v2883 = vmul.f32 %v2837, 1.442695
        %v2884 = vpow.pop %v2883
        %v2885 = vmul.f32 %v2838, 1.442695
        %v2886 = vpow.pop %v2885
        %v2887 = vmul.f32 %v2839, 1.442695
        %v2888 = vpow.pop %v2887
        %v2889 = vmul.f32 %v2840, 1.442695
        %v2890 = vpow.pop %v2889
        %v2891 = vmul.f32 %v2841, 1.442695
        %v2892 = vpow.pop %v2891
        %v2893 = vmul.f32 %v2842, 1.442695
        %v2894 = vpow.pop %v2893
        %v2895 = vmul.f32 %v2843, 1.442695
        %v2896 = vpow.pop %v2895
        %v2897 = vmul.f32 %v2844, 1.442695
        %v2898 = vpow.pop %v2897
        %v2899 = vmul.f32 %v2845, 1.442695
        %v2900 = vpow.pop %v2899
        %v2901 = vmul.f32 %v2846, 1.442695
        %v2902 = vpow.pop %v2901
        %v2903 = vmul.f32 %v2847, 1.442695
        %v2904 = vpow.pop %v2903
        %v2905 = vmul.f32 %v2848, 1.442695
        %v2906 = vpow.pop %v2905
        %v2907 = vmul.f32 %v2849, 1.442695
        %v2908 = vpow.pop %v2907
        %v2909 = vmul.f32 %v2850, 1.442695
        %v2910 = vpow.pop %v2909
        %v2911 = vmul.f32 %v2851, 1.442695
        %v2912 = vpow.pop %v2911
        %v2913 = vmul.f32 %v2852, 1.442695
        %v2914 = vpow.pop %v2913
        %v2915 = vmul.f32 %v2853, 1.442695
        %v2916 = vpow.pop %v2915
        %v2917 = vmul.f32 %v2854, 1.442695
        %v2918 = vpow.pop %v2917
        %2919 = vadd.xlane.f32.xlu0 %v2856
        %v2920 = vpop.xlane.xlu0 %2919
        %2921 = vadd.xlane.f32.xlu0 %v2858
        %v2922 = vpop.xlane.xlu0 %2921
        %2923 = vadd.xlane.f32.xlu0 %v2860
        %v2924 = vpop.xlane.xlu0 %2923
        %2925 = vadd.xlane.f32.xlu0 %v2862
        %v2926 = vpop.xlane.xlu0 %2925
        %2927 = vadd.xlane.f32.xlu0 %v2864
        %v2928 = vpop.xlane.xlu0 %2927
        %2929 = vadd.xlane.f32.xlu0 %v2866
        %v2930 = vpop.xlane.xlu0 %2929
        %2931 = vadd.xlane.f32.xlu0 %v2868
        %v2932 = vpop.xlane.xlu0 %2931
        %2933 = vadd.xlane.f32.xlu0 %v2870
        %v2934 = vpop.xlane.xlu0 %2933
        %2935 = vadd.xlane.f32.xlu0 %v2872
        %v2936 = vpop.xlane.xlu0 %2935
        %2937 = vadd.xlane.f32.xlu0 %v2874
        %v2938 = vpop.xlane.xlu0 %2937
        %2939 = vadd.xlane.f32.xlu0 %v2876
        %v2940 = vpop.xlane.xlu0 %2939
        %2941 = vadd.xlane.f32.xlu0 %v2878
        %v2942 = vpop.xlane.xlu0 %2941
        %2943 = vadd.xlane.f32.xlu0 %v2880
        %v2944 = vpop.xlane.xlu0 %2943
        %2945 = vadd.xlane.f32.xlu0 %v2882
        %v2946 = vpop.xlane.xlu0 %2945
        %2947 = vadd.xlane.f32.xlu0 %v2884
        %v2948 = vpop.xlane.xlu0 %2947
        %2949 = vadd.xlane.f32.xlu0 %v2886
        %v2950 = vpop.xlane.xlu0 %2949
        %2951 = vadd.xlane.f32.xlu0 %v2888
        %v2952 = vpop.xlane.xlu0 %2951
        %2953 = vadd.xlane.f32.xlu0 %v2890
        %v2954 = vpop.xlane.xlu0 %2953
        %2955 = vadd.xlane.f32.xlu0 %v2892
        %v2956 = vpop.xlane.xlu0 %2955
        %2957 = vadd.xlane.f32.xlu0 %v2894
        %v2958 = vpop.xlane.xlu0 %2957
        %2959 = vadd.xlane.f32.xlu0 %v2896
        %v2960 = vpop.xlane.xlu0 %2959
        %2961 = vadd.xlane.f32.xlu0 %v2898
        %v2962 = vpop.xlane.xlu0 %2961
        %2963 = vadd.xlane.f32.xlu0 %v2900
        %v2964 = vpop.xlane.xlu0 %2963
        %2965 = vadd.xlane.f32.xlu0 %v2902
        %v2966 = vpop.xlane.xlu0 %2965
        %2967 = vadd.xlane.f32.xlu0 %v2904
        %v2968 = vpop.xlane.xlu0 %2967
        %2969 = vadd.xlane.f32.xlu0 %v2906
        %v2970 = vpop.xlane.xlu0 %2969
        %2971 = vadd.xlane.f32.xlu0 %v2908
        %v2972 = vpop.xlane.xlu0 %2971
        %2973 = vadd.xlane.f32.xlu0 %v2910
        %v2974 = vpop.xlane.xlu0 %2973
        %2975 = vadd.xlane.f32.xlu0 %v2912
        %v2976 = vpop.xlane.xlu0 %2975
        %2977 = vadd.xlane.f32.xlu0 %v2914
        %v2978 = vpop.xlane.xlu0 %2977
        %2979 = vadd.xlane.f32.xlu0 %v2916
        %v2980 = vpop.xlane.xlu0 %2979
        %2981 = vadd.xlane.f32.xlu0 %v2918
        %v2982 = vpop.xlane.xlu0 %2981
        %v2983 = vrcp.pop %v2920
        %v2984 = vrcp.pop %v2922
        %v2985 = vrcp.pop %v2924
        %v2986 = vrcp.pop %v2926
        %v2987 = vrcp.pop %v2928
        %v2988 = vrcp.pop %v2930
        %v2989 = vrcp.pop %v2932
        %v2990 = vrcp.pop %v2934
        %v2991 = vrcp.pop %v2936
        %v2992 = vrcp.pop %v2938
        %v2993 = vrcp.pop %v2940
        %v2994 = vrcp.pop %v2942
        %v2995 = vrcp.pop %v2944
        %v2996 = vrcp.pop %v2946
        %v2997 = vrcp.pop %v2948
        %v2998 = vrcp.pop %v2950
        %v2999 = vrcp.pop %v2952
        %v3000 = vrcp.pop %v2954
        %v3001 = vrcp.pop %v2956
        %v3002 = vrcp.pop %v2958
        %v3003 = vrcp.pop %v2960
        %v3004 = vrcp.pop %v2962
        %v3005 = vrcp.pop %v2964
        %v3006 = vrcp.pop %v2966
        %v3007 = vrcp.pop %v2968
        %v3008 = vrcp.pop %v2970
        %v3009 = vrcp.pop %v2972
        %v3010 = vrcp.pop %v2974
        %v3011 = vrcp.pop %v2976
        %v3012 = vrcp.pop %v2978
        %v3013 = vrcp.pop %v2980
        %v3014 = vrcp.pop %v2982
        %v3015 = vmul.f32 %v2856, %v2983
        %v3016 = vmul.f32 %v2858, %v2984
        %v3017 = vmul.f32 %v2860, %v2985
        %v3018 = vmul.f32 %v2862, %v2986
        %v3019 = vmul.f32 %v2864, %v2987
        %v3020 = vmul.f32 %v2866, %v2988
        %v3021 = vmul.f32 %v2868, %v2989
        %v3022 = vmul.f32 %v2870, %v2990
        %v3023 = vmul.f32 %v2872, %v2991
        %v3024 = vmul.f32 %v2874, %v2992
        %v3025 = vmul.f32 %v2876, %v2993
        %v3026 = vmul.f32 %v2878, %v2994
        %v3027 = vmul.f32 %v2880, %v2995
        %v3028 = vmul.f32 %v2882, %v2996
        %v3029 = vmul.f32 %v2884, %v2997
        %v3030 = vmul.f32 %v2886, %v2998
        %v3031 = vmul.f32 %v2888, %v2999
        %v3032 = vmul.f32 %v2890, %v3000
        %v3033 = vmul.f32 %v2892, %v3001
        %v3034 = vmul.f32 %v2894, %v3002
        %v3035 = vmul.f32 %v2896, %v3003
        %v3036 = vmul.f32 %v2898, %v3004
        %v3037 = vmul.f32 %v2900, %v3005
        %v3038 = vmul.f32 %v2902, %v3006
        %v3039 = vmul.f32 %v2904, %v3007
        %v3040 = vmul.f32 %v2906, %v3008
        %v3041 = vmul.f32 %v2908, %v3009
        %v3042 = vmul.f32 %v2910, %v3010
        %v3043 = vmul.f32 %v2912, %v3011
        %v3044 = vmul.f32 %v2914, %v3012
        %v3045 = vmul.f32 %v2916, %v3013
        %v3046 = vmul.f32 %v2918, %v3014
        %v3047 = vpack.c.bf16 %v3016, %v3015
        %v3048 = vpack.c.bf16 %v3018, %v3017
        %v3049 = vpack.c.bf16 %v3020, %v3019
        %v3050 = vpack.c.bf16 %v3022, %v3021
        %v3051 = vpack.c.bf16 %v3024, %v3023
        %v3052 = vpack.c.bf16 %v3026, %v3025
        %v3053 = vpack.c.bf16 %v3028, %v3027
        %v3054 = vpack.c.bf16 %v3030, %v3029
        %v3055 = vpack.c.bf16 %v3032, %v3031
        %v3056 = vpack.c.bf16 %v3034, %v3033
        %v3057 = vpack.c.bf16 %v3036, %v3035
        %v3058 = vpack.c.bf16 %v3038, %v3037
        %v3059 = vpack.c.bf16 %v3040, %v3039
        %v3060 = vpack.c.bf16 %v3042, %v3041
        %v3061 = vpack.c.bf16 %v3044, %v3043
        %v3062 = vpack.c.bf16 %v3046, %v3045
        %v3063 = vld [vmem:[#allocation3] sm:$0xf]
        %v3064 = vld [vmem:[#allocation3 + $0x4] sm:$0xf]
        %v3065 = vld [vmem:[#allocation3 + $0x8] sm:$0xf]
        %v3066 = vld [vmem:[#allocation3 + $0xc] sm:$0xf]
        %v3067 = vld [vmem:[#allocation3 + $0x10] sm:$0xf]
        %v3068 = vld [vmem:[#allocation3 + $0x14] sm:$0xf]
        %v3069 = vld [vmem:[#allocation3 + $0x18] sm:$0xf]
        %v3070 = vld [vmem:[#allocation3 + $0x1c] sm:$0xf]
        %v3071 = vld [vmem:[#allocation3 + $0x20] sm:$0xf]
        %v3072 = vld [vmem:[#allocation3 + $0x24] sm:$0xf]
        %v3073 = vld [vmem:[#allocation3 + $0x28] sm:$0xf]
        %v3074 = vld [vmem:[#allocation3 + $0x2c] sm:$0xf]
        %v3075 = vld [vmem:[#allocation3 + $0x30] sm:$0xf]
        %v3076 = vld [vmem:[#allocation3 + $0x34] sm:$0xf]
        %v3077 = vld [vmem:[#allocation3 + $0x38] sm:$0xf]
        %v3078 = vld [vmem:[#allocation3 + $0x3c] sm:$0xf]
        %v3079 = vld [vmem:[#allocation3 + $0x40] sm:$0xf]
        %v3080 = vld [vmem:[#allocation3 + $0x44] sm:$0xf]
        %v3081 = vld [vmem:[#allocation3 + $0x48] sm:$0xf]
        %v3082 = vld [vmem:[#allocation3 + $0x4c] sm:$0xf]
        %v3083 = vld [vmem:[#allocation3 + $0x50] sm:$0xf]
        %v3084 = vld [vmem:[#allocation3 + $0x54] sm:$0xf]
        %v3085 = vld [vmem:[#allocation3 + $0x58] sm:$0xf]
        %v3086 = vld [vmem:[#allocation3 + $0x5c] sm:$0xf]
        %v3087 = vld [vmem:[#allocation3 + $0x60] sm:$0xf]
        %v3088 = vld [vmem:[#allocation3 + $0x64] sm:$0xf]
        %v3089 = vld [vmem:[#allocation3 + $0x68] sm:$0xf]
        %v3090 = vld [vmem:[#allocation3 + $0x6c] sm:$0xf]
        %v3091 = vld [vmem:[#allocation3 + $0x70] sm:$0xf]
        %v3092 = vld [vmem:[#allocation3 + $0x74] sm:$0xf]
        %v3093 = vld [vmem:[#allocation3 + $0x78] sm:$0xf]
        %v3094 = vld [vmem:[#allocation3 + $0x7c] sm:$0xf]
        %v3095 = vld [vmem:[#allocation3 + $0x80] sm:$0xf]
        %v3096 = vld [vmem:[#allocation3 + $0x84] sm:$0xf]
        %v3097 = vld [vmem:[#allocation3 + $0x88] sm:$0xf]
        %v3098 = vld [vmem:[#allocation3 + $0x8c] sm:$0xf]
        %v3099 = vld [vmem:[#allocation3 + $0x90] sm:$0xf]
        %v3100 = vld [vmem:[#allocation3 + $0x94] sm:$0xf]
        %v3101 = vld [vmem:[#allocation3 + $0x98] sm:$0xf]
        %v3102 = vld [vmem:[#allocation3 + $0x9c] sm:$0xf]
        %v3103 = vld [vmem:[#allocation3 + $0xa0] sm:$0xf]
        %v3104 = vld [vmem:[#allocation3 + $0xa4] sm:$0xf]
        %v3105 = vld [vmem:[#allocation3 + $0xa8] sm:$0xf]
        %v3106 = vld [vmem:[#allocation3 + $0xac] sm:$0xf]
        %v3107 = vld [vmem:[#allocation3 + $0xb0] sm:$0xf]
        %v3108 = vld [vmem:[#allocation3 + $0xb4] sm:$0xf]
        %v3109 = vld [vmem:[#allocation3 + $0xb8] sm:$0xf]
        %v3110 = vld [vmem:[#allocation3 + $0xbc] sm:$0xf]
        %v3111 = vld [vmem:[#allocation3 + $0xc0] sm:$0xf]
        %v3112 = vld [vmem:[#allocation3 + $0xc4] sm:$0xf]
        %v3113 = vld [vmem:[#allocation3 + $0xc8] sm:$0xf]
        %v3114 = vld [vmem:[#allocation3 + $0xcc] sm:$0xf]
        %v3115 = vld [vmem:[#allocation3 + $0xd0] sm:$0xf]
        %v3116 = vld [vmem:[#allocation3 + $0xd4] sm:$0xf]
        %v3117 = vld [vmem:[#allocation3 + $0xd8] sm:$0xf]
        %v3118 = vld [vmem:[#allocation3 + $0xdc] sm:$0xf]
        %v3119 = vld [vmem:[#allocation3 + $0xe0] sm:$0xf]
        %v3120 = vld [vmem:[#allocation3 + $0xe4] sm:$0xf]
        %v3121 = vld [vmem:[#allocation3 + $0xe8] sm:$0xf]
        %v3122 = vld [vmem:[#allocation3 + $0xec] sm:$0xf]
        %v3123 = vld [vmem:[#allocation3 + $0xf0] sm:$0xf]
        %v3124 = vld [vmem:[#allocation3 + $0xf4] sm:$0xf]
        %v3125 = vld [vmem:[#allocation3 + $0xf8] sm:$0xf]
        %v3126 = vld [vmem:[#allocation3 + $0xfc] sm:$0xf]
        %v3143 = vunpack.c.l.b16 %v3063
        %v3144 = vunpack.c.l.b16 %v3064
        %v3145 = vunpack.c.l.b16 %v3065
        %v3146 = vunpack.c.l.b16 %v3066
        %v3147 = vunpack.c.l.b16 %v3067
        %v3148 = vunpack.c.l.b16 %v3068
        %v3149 = vunpack.c.l.b16 %v3069
        %v3150 = vunpack.c.l.b16 %v3070
        %v3151 = vunpack.c.l.b16 %v3071
        %v3152 = vunpack.c.l.b16 %v3072
        %v3153 = vunpack.c.l.b16 %v3073
        %v3154 = vunpack.c.l.b16 %v3074
        %v3155 = vunpack.c.l.b16 %v3075
        %v3156 = vunpack.c.l.b16 %v3076
        %v3157 = vunpack.c.l.b16 %v3077
        %v3158 = vunpack.c.l.b16 %v3078
        %v3159 = vpack.c.b16 %v3144, %v3143
        %v3160 = vpack.c.b16 %v3146, %v3145
        %v3161 = vpack.c.b16 %v3148, %v3147
        %v3162 = vpack.c.b16 %v3150, %v3149
        %v3163 = vpack.c.b16 %v3152, %v3151
        %v3164 = vpack.c.b16 %v3154, %v3153
        %v3165 = vpack.c.b16 %v3156, %v3155
        %v3166 = vpack.c.b16 %v3158, %v3157
        %3175 = vmatprep.subr.bf16.mxu0 0
        %3176 = vmatpush1.bf16.msra.mxu0 %v3166
        %3177 = vmatprep.subr.bf16.mxu0 0
        %3178 = vmatpush1.bf16.msra.mxu0 %v3165
        %3179 = vmatprep.subr.bf16.mxu0 0
        %3180 = vmatpush1.bf16.msra.mxu0 %v3164
        %3181 = vmatprep.subr.bf16.mxu0 0
        %3182 = vmatpush1.bf16.msra.mxu0 %v3163
        %3183 = vmatprep.subr.bf16.mxu0 0
        %3184 = vmatpush1.bf16.msra.mxu0 %v3162
        %3185 = vmatprep.subr.bf16.mxu0 0
        %3186 = vmatpush1.bf16.msra.mxu0 %v3161
        %3187 = vmatprep.subr.bf16.mxu0 0
        %3188 = vmatpush1.bf16.msra.mxu0 %v3160
        %3189 = vmatprep.subr.bf16.mxu0 0
        %3190 = vmatpush1.bf16.msra.mxu0 %v3159
        %3191 = vmatprep.subr.bf16.mxu0 0
        %3192 = vmatpush2.bf16.msra.mxu0 0
        %3193 = vmatprep.subr.bf16.mxu0 0
        %3194 = vmatpush2.bf16.msra.mxu0 0
        %3195 = vmatprep.subr.bf16.mxu0 0
        %3196 = vmatpush2.bf16.msra.mxu0 0
        %3197 = vmatprep.subr.bf16.mxu0 0
        %3198 = vmatpush2.bf16.msra.mxu0 0
        %3199 = vmatprep.subr.bf16.mxu0 0
        %3200 = vmatpush2.bf16.msra.mxu0 0
        %3201 = vmatprep.subr.bf16.mxu0 0
        %3202 = vmatpush2.bf16.msra.mxu0 0
        %3203 = vmatprep.subr.bf16.mxu0 0
        %3204 = vmatpush2.bf16.msra.mxu0 0
        %3205 = vmatprep.subr.bf16.mxu0 0
        %3206 = vmatpush2.bf16.msra.mxu0 0
        %3207 = vmatprep.mubr.bf16.mxu0 0
        %3208 = vmatmul.mubr.bf16.gmra.mxu0 %v3047
        %v3209 = vpop.f32.mrf.mxu0
        %v3210 = vadd.f32 0.0, %v3209
        %v3211 = vpop.f32.mrf.mxu0
        %v3212 = vpop.f32.mrf.mxu0
        %v3213 = vadd.f32 0.0, %v3212
        %v3214 = vpop.f32.mrf.mxu0
        %3215 = vmatprep.mubr.bf16.mxu0 0
        %3216 = vmatmul.mubr.bf16.gmra.mxu0 %v3048
        %v3217 = vpop.f32.mrf.mxu0
        %v3218 = vadd.f32 0.0, %v3217
        %v3219 = vpop.f32.mrf.mxu0
        %v3220 = vpop.f32.mrf.mxu0
        %v3221 = vadd.f32 0.0, %v3220
        %v3222 = vpop.f32.mrf.mxu0
        %3223 = vmatprep.mubr.bf16.mxu0 0
        %3224 = vmatmul.mubr.bf16.gmra.mxu0 %v3049
        %v3225 = vpop.f32.mrf.mxu0
        %v3226 = vadd.f32 0.0, %v3225
        %v3227 = vpop.f32.mrf.mxu0
        %v3228 = vpop.f32.mrf.mxu0
        %v3229 = vadd.f32 0.0, %v3228
        %v3230 = vpop.f32.mrf.mxu0
        %3231 = vmatprep.mubr.bf16.mxu0 0
        %3232 = vmatmul.mubr.bf16.gmra.mxu0 %v3050
        %v3233 = vpop.f32.mrf.mxu0
        %v3234 = vadd.f32 0.0, %v3233
        %v3235 = vpop.f32.mrf.mxu0
        %v3236 = vpop.f32.mrf.mxu0
        %v3237 = vadd.f32 0.0, %v3236
        %v3238 = vpop.f32.mrf.mxu0
        %3239 = vdwg.mxu0
        %v3256 = vunpack.c.l.b16 %v3079
        %v3257 = vunpack.c.l.b16 %v3080
        %v3258 = vunpack.c.l.b16 %v3081
        %v3259 = vunpack.c.l.b16 %v3082
        %v3260 = vunpack.c.l.b16 %v3083
        %v3261 = vunpack.c.l.b16 %v3084
        %v3262 = vunpack.c.l.b16 %v3085
        %v3263 = vunpack.c.l.b16 %v3086
        %v3264 = vunpack.c.l.b16 %v3087
        %v3265 = vunpack.c.l.b16 %v3088
        %v3266 = vunpack.c.l.b16 %v3089
        %v3267 = vunpack.c.l.b16 %v3090
        %v3268 = vunpack.c.l.b16 %v3091
        %v3269 = vunpack.c.l.b16 %v3092
        %v3270 = vunpack.c.l.b16 %v3093
        %v3271 = vunpack.c.l.b16 %v3094
        %v3272 = vpack.c.b16 %v3257, %v3256
        %v3273 = vpack.c.b16 %v3259, %v3258
        %v3274 = vpack.c.b16 %v3261, %v3260
        %v3275 = vpack.c.b16 %v3263, %v3262
        %v3276 = vpack.c.b16 %v3265, %v3264
        %v3277 = vpack.c.b16 %v3267, %v3266
        %v3278 = vpack.c.b16 %v3269, %v3268
        %v3279 = vpack.c.b16 %v3271, %v3270
        %3288 = vmatprep.subr.bf16.mxu0 0
        %3289 = vmatpush1.bf16.msra.mxu0 %v3279
        %3290 = vmatprep.subr.bf16.mxu0 0
        %3291 = vmatpush1.bf16.msra.mxu0 %v3278
        %3292 = vmatprep.subr.bf16.mxu0 0
        %3293 = vmatpush1.bf16.msra.mxu0 %v3277
        %3294 = vmatprep.subr.bf16.mxu0 0
        %3295 = vmatpush1.bf16.msra.mxu0 %v3276
        %3296 = vmatprep.subr.bf16.mxu0 0
        %3297 = vmatpush1.bf16.msra.mxu0 %v3275
        %3298 = vmatprep.subr.bf16.mxu0 0
        %3299 = vmatpush1.bf16.msra.mxu0 %v3274
        %3300 = vmatprep.subr.bf16.mxu0 0
        %3301 = vmatpush1.bf16.msra.mxu0 %v3273
        %3302 = vmatprep.subr.bf16.mxu0 0
        %3303 = vmatpush1.bf16.msra.mxu0 %v3272
        %3304 = vmatprep.subr.bf16.mxu0 0
        %3305 = vmatpush2.bf16.msra.mxu0 0
        %3306 = vmatprep.subr.bf16.mxu0 0
        %3307 = vmatpush2.bf16.msra.mxu0 0
        %3308 = vmatprep.subr.bf16.mxu0 0
        %3309 = vmatpush2.bf16.msra.mxu0 0
        %3310 = vmatprep.subr.bf16.mxu0 0
        %3311 = vmatpush2.bf16.msra.mxu0 0
        %3312 = vmatprep.subr.bf16.mxu0 0
        %3313 = vmatpush2.bf16.msra.mxu0 0
        %3314 = vmatprep.subr.bf16.mxu0 0
        %3315 = vmatpush2.bf16.msra.mxu0 0
        %3316 = vmatprep.subr.bf16.mxu0 0
        %3317 = vmatpush2.bf16.msra.mxu0 0
        %3318 = vmatprep.subr.bf16.mxu0 0
        %3319 = vmatpush2.bf16.msra.mxu0 0
        %3320 = vmatprep.mubr.bf16.mxu0 0
        %3321 = vmatmul.mubr.bf16.gmra.mxu0 %v3051
        %v3322 = vpop.f32.mrf.mxu0
        %v3323 = vadd.f32 0.0, %v3322
        %v3324 = vpop.f32.mrf.mxu0
        %v3325 = vpop.f32.mrf.mxu0
        %v3326 = vadd.f32 0.0, %v3325
        %v3327 = vpop.f32.mrf.mxu0
        %3328 = vmatprep.mubr.bf16.mxu0 0
        %3329 = vmatmul.mubr.bf16.gmra.mxu0 %v3052
        %v3330 = vpop.f32.mrf.mxu0
        %v3331 = vadd.f32 0.0, %v3330
        %v3332 = vpop.f32.mrf.mxu0
        %v3333 = vpop.f32.mrf.mxu0
        %v3334 = vadd.f32 0.0, %v3333
        %v3335 = vpop.f32.mrf.mxu0
        %3336 = vmatprep.mubr.bf16.mxu0 0
        %3337 = vmatmul.mubr.bf16.gmra.mxu0 %v3053
        %v3338 = vpop.f32.mrf.mxu0
        %v3339 = vadd.f32 0.0, %v3338
        %v3340 = vpop.f32.mrf.mxu0
        %v3341 = vpop.f32.mrf.mxu0
        %v3342 = vadd.f32 0.0, %v3341
        %v3343 = vpop.f32.mrf.mxu0
        %3344 = vmatprep.mubr.bf16.mxu0 0
        %3345 = vmatmul.mubr.bf16.gmra.mxu0 %v3054
        %v3346 = vpop.f32.mrf.mxu0
        %v3347 = vadd.f32 0.0, %v3346
        %v3348 = vpop.f32.mrf.mxu0
        %v3349 = vpop.f32.mrf.mxu0
        %v3350 = vadd.f32 0.0, %v3349
        %v3351 = vpop.f32.mrf.mxu0
        %3352 = vdwg.mxu0
        %v3369 = vunpack.c.l.b16 %v3095
        %v3370 = vunpack.c.l.b16 %v3096
        %v3371 = vunpack.c.l.b16 %v3097
        %v3372 = vunpack.c.l.b16 %v3098
        %v3373 = vunpack.c.l.b16 %v3099
        %v3374 = vunpack.c.l.b16 %v3100
        %v3375 = vunpack.c.l.b16 %v3101
        %v3376 = vunpack.c.l.b16 %v3102
        %v3377 = vunpack.c.l.b16 %v3103
        %v3378 = vunpack.c.l.b16 %v3104
        %v3379 = vunpack.c.l.b16 %v3105
        %v3380 = vunpack.c.l.b16 %v3106
        %v3381 = vunpack.c.l.b16 %v3107
        %v3382 = vunpack.c.l.b16 %v3108
        %v3383 = vunpack.c.l.b16 %v3109
        %v3384 = vunpack.c.l.b16 %v3110
        %v3385 = vpack.c.b16 %v3370, %v3369
        %v3386 = vpack.c.b16 %v3372, %v3371
        %v3387 = vpack.c.b16 %v3374, %v3373
        %v3388 = vpack.c.b16 %v3376, %v3375
        %v3389 = vpack.c.b16 %v3378, %v3377
        %v3390 = vpack.c.b16 %v3380, %v3379
        %v3391 = vpack.c.b16 %v3382, %v3381
        %v3392 = vpack.c.b16 %v3384, %v3383
        %3401 = vmatprep.subr.bf16.mxu0 0
        %3402 = vmatpush1.bf16.msra.mxu0 %v3392
        %3403 = vmatprep.subr.bf16.mxu0 0
        %3404 = vmatpush1.bf16.msra.mxu0 %v3391
        %3405 = vmatprep.subr.bf16.mxu0 0
        %3406 = vmatpush1.bf16.msra.mxu0 %v3390
        %3407 = vmatprep.subr.bf16.mxu0 0
        %3408 = vmatpush1.bf16.msra.mxu0 %v3389
        %3409 = vmatprep.subr.bf16.mxu0 0
        %3410 = vmatpush1.bf16.msra.mxu0 %v3388
        %3411 = vmatprep.subr.bf16.mxu0 0
        %3412 = vmatpush1.bf16.msra.mxu0 %v3387
        %3413 = vmatprep.subr.bf16.mxu0 0
        %3414 = vmatpush1.bf16.msra.mxu0 %v3386
        %3415 = vmatprep.subr.bf16.mxu0 0
        %3416 = vmatpush1.bf16.msra.mxu0 %v3385
        %3417 = vmatprep.subr.bf16.mxu0 0
        %3418 = vmatpush2.bf16.msra.mxu0 0
        %3419 = vmatprep.subr.bf16.mxu0 0
        %3420 = vmatpush2.bf16.msra.mxu0 0
        %3421 = vmatprep.subr.bf16.mxu0 0
        %3422 = vmatpush2.bf16.msra.mxu0 0
        %3423 = vmatprep.subr.bf16.mxu0 0
        %3424 = vmatpush2.bf16.msra.mxu0 0
        %3425 = vmatprep.subr.bf16.mxu0 0
        %3426 = vmatpush2.bf16.msra.mxu0 0
        %3427 = vmatprep.subr.bf16.mxu0 0
        %3428 = vmatpush2.bf16.msra.mxu0 0
        %3429 = vmatprep.subr.bf16.mxu0 0
        %3430 = vmatpush2.bf16.msra.mxu0 0
        %3431 = vmatprep.subr.bf16.mxu0 0
        %3432 = vmatpush2.bf16.msra.mxu0 0
        %3433 = vmatprep.mubr.bf16.mxu0 0
        %3434 = vmatmul.mubr.bf16.gmra.mxu0 %v3055
        %v3435 = vpop.f32.mrf.mxu0
        %v3436 = vadd.f32 0.0, %v3435
        %v3437 = vpop.f32.mrf.mxu0
        %v3438 = vpop.f32.mrf.mxu0
        %v3439 = vadd.f32 0.0, %v3438
        %v3440 = vpop.f32.mrf.mxu0
        %3441 = vmatprep.mubr.bf16.mxu0 0
        %3442 = vmatmul.mubr.bf16.gmra.mxu0 %v3056
        %v3443 = vpop.f32.mrf.mxu0
        %v3444 = vadd.f32 0.0, %v3443
        %v3445 = vpop.f32.mrf.mxu0
        %v3446 = vpop.f32.mrf.mxu0
        %v3447 = vadd.f32 0.0, %v3446
        %v3448 = vpop.f32.mrf.mxu0
        %3449 = vmatprep.mubr.bf16.mxu0 0
        %3450 = vmatmul.mubr.bf16.gmra.mxu0 %v3057
        %v3451 = vpop.f32.mrf.mxu0
        %v3452 = vadd.f32 0.0, %v3451
        %v3453 = vpop.f32.mrf.mxu0
        %v3454 = vpop.f32.mrf.mxu0
        %v3455 = vadd.f32 0.0, %v3454
        %v3456 = vpop.f32.mrf.mxu0
        %3457 = vmatprep.mubr.bf16.mxu0 0
        %3458 = vmatmul.mubr.bf16.gmra.mxu0 %v3058
        %v3459 = vpop.f32.mrf.mxu0
        %v3460 = vadd.f32 0.0, %v3459
        %v3461 = vpop.f32.mrf.mxu0
        %v3462 = vpop.f32.mrf.mxu0
        %v3463 = vadd.f32 0.0, %v3462
        %v3464 = vpop.f32.mrf.mxu0
        %3465 = vdwg.mxu0
        %v3482 = vunpack.c.l.b16 %v3111
        %v3483 = vunpack.c.l.b16 %v3112
        %v3484 = vunpack.c.l.b16 %v3113
        %v3485 = vunpack.c.l.b16 %v3114
        %v3486 = vunpack.c.l.b16 %v3115
        %v3487 = vunpack.c.l.b16 %v3116
        %v3488 = vunpack.c.l.b16 %v3117
        %v3489 = vunpack.c.l.b16 %v3118
        %v3490 = vunpack.c.l.b16 %v3119
        %v3491 = vunpack.c.l.b16 %v3120
        %v3492 = vunpack.c.l.b16 %v3121
        %v3493 = vunpack.c.l.b16 %v3122
        %v3494 = vunpack.c.l.b16 %v3123
        %v3495 = vunpack.c.l.b16 %v3124
        %v3496 = vunpack.c.l.b16 %v3125
        %v3497 = vunpack.c.l.b16 %v3126
        %v3498 = vpack.c.b16 %v3483, %v3482
        %v3499 = vpack.c.b16 %v3485, %v3484
        %v3500 = vpack.c.b16 %v3487, %v3486
        %v3501 = vpack.c.b16 %v3489, %v3488
        %v3502 = vpack.c.b16 %v3491, %v3490
        %v3503 = vpack.c.b16 %v3493, %v3492
        %v3504 = vpack.c.b16 %v3495, %v3494
        %v3505 = vpack.c.b16 %v3497, %v3496
        %3514 = vmatprep.subr.bf16.mxu0 0
        %3515 = vmatpush1.bf16.msra.mxu0 %v3505
        %3516 = vmatprep.subr.bf16.mxu0 0
        %3517 = vmatpush1.bf16.msra.mxu0 %v3504
        %3518 = vmatprep.subr.bf16.mxu0 0
        %3519 = vmatpush1.bf16.msra.mxu0 %v3503
        %3520 = vmatprep.subr.bf16.mxu0 0
        %3521 = vmatpush1.bf16.msra.mxu0 %v3502
        %3522 = vmatprep.subr.bf16.mxu0 0
        %3523 = vmatpush1.bf16.msra.mxu0 %v3501
        %3524 = vmatprep.subr.bf16.mxu0 0
        %3525 = vmatpush1.bf16.msra.mxu0 %v3500
        %3526 = vmatprep.subr.bf16.mxu0 0
        %3527 = vmatpush1.bf16.msra.mxu0 %v3499
        %3528 = vmatprep.subr.bf16.mxu0 0
        %3529 = vmatpush1.bf16.msra.mxu0 %v3498
        %3530 = vmatprep.subr.bf16.mxu0 0
        %3531 = vmatpush2.bf16.msra.mxu0 0
        %3532 = vmatprep.subr.bf16.mxu0 0
        %3533 = vmatpush2.bf16.msra.mxu0 0
        %3534 = vmatprep.subr.bf16.mxu0 0
        %3535 = vmatpush2.bf16.msra.mxu0 0
        %3536 = vmatprep.subr.bf16.mxu0 0
        %3537 = vmatpush2.bf16.msra.mxu0 0
        %3538 = vmatprep.subr.bf16.mxu0 0
        %3539 = vmatpush2.bf16.msra.mxu0 0
        %3540 = vmatprep.subr.bf16.mxu0 0
        %3541 = vmatpush2.bf16.msra.mxu0 0
        %3542 = vmatprep.subr.bf16.mxu0 0
        %3543 = vmatpush2.bf16.msra.mxu0 0
        %3544 = vmatprep.subr.bf16.mxu0 0
        %3545 = vmatpush2.bf16.msra.mxu0 0
        %3546 = vmatprep.mubr.bf16.mxu0 0
        %3547 = vmatmul.mubr.bf16.gmra.mxu0 %v3059
        %v3548 = vpop.f32.mrf.mxu0
        %v3549 = vadd.f32 0.0, %v3548
        %v3550 = vpop.f32.mrf.mxu0
        %v3551 = vpop.f32.mrf.mxu0
        %v3552 = vadd.f32 0.0, %v3551
        %v3553 = vpop.f32.mrf.mxu0
        %3554 = vmatprep.mubr.bf16.mxu0 0
        %3555 = vmatmul.mubr.bf16.gmra.mxu0 %v3060
        %v3556 = vpop.f32.mrf.mxu0
        %v3557 = vadd.f32 0.0, %v3556
        %v3558 = vpop.f32.mrf.mxu0
        %v3559 = vpop.f32.mrf.mxu0
        %v3560 = vadd.f32 0.0, %v3559
        %v3561 = vpop.f32.mrf.mxu0
        %3562 = vmatprep.mubr.bf16.mxu0 0
        %3563 = vmatmul.mubr.bf16.gmra.mxu0 %v3061
        %v3564 = vpop.f32.mrf.mxu0
        %v3565 = vadd.f32 0.0, %v3564
        %v3566 = vpop.f32.mrf.mxu0
        %v3567 = vpop.f32.mrf.mxu0
        %v3568 = vadd.f32 0.0, %v3567
        %v3569 = vpop.f32.mrf.mxu0
        %3570 = vmatprep.mubr.bf16.mxu0 0
        %3571 = vmatmul.mubr.bf16.gmra.mxu0 %v3062
        %v3572 = vpop.f32.mrf.mxu0
        %v3573 = vadd.f32 0.0, %v3572
        %v3574 = vpop.f32.mrf.mxu0
        %v3575 = vpop.f32.mrf.mxu0
        %v3576 = vadd.f32 0.0, %v3575
        %v3577 = vpop.f32.mrf.mxu0
        %3578 = vdwg.mxu0
        %3587 = vrot.lane.b32.xlu0 %v3323, 32
        %v3588 = vpop.permute.xlu0 %3587
        %3589 = vrot.lane.b32.xlu0 %v3326, 32
        %v3590 = vpop.permute.xlu0 %3589
        %3591 = vrot.lane.b32.xlu0 %v3331, 32
        %v3592 = vpop.permute.xlu0 %3591
        %3593 = vrot.lane.b32.xlu0 %v3334, 32
        %v3594 = vpop.permute.xlu0 %3593
        %3595 = vrot.lane.b32.xlu0 %v3339, 32
        %v3596 = vpop.permute.xlu0 %3595
        %3597 = vrot.lane.b32.xlu0 %v3342, 32
        %v3598 = vpop.permute.xlu0 %3597
        %3599 = vrot.lane.b32.xlu0 %v3347, 32
        %v3600 = vpop.permute.xlu0 %3599
        %3601 = vrot.lane.b32.xlu0 %v3350, 32
        %v3602 = vpop.permute.xlu0 %3601
        %3619 = vrot.lane.b32.xlu0 %v3436, 64
        %v3620 = vpop.permute.xlu0 %3619
        %3621 = vrot.lane.b32.xlu0 %v3439, 64
        %v3622 = vpop.permute.xlu0 %3621
        %3623 = vrot.lane.b32.xlu0 %v3444, 64
        %v3624 = vpop.permute.xlu0 %3623
        %3625 = vrot.lane.b32.xlu0 %v3447, 64
        %v3626 = vpop.permute.xlu0 %3625
        %3627 = vrot.lane.b32.xlu0 %v3452, 64
        %v3628 = vpop.permute.xlu0 %3627
        %3629 = vrot.lane.b32.xlu0 %v3455, 64
        %v3630 = vpop.permute.xlu0 %3629
        %3631 = vrot.lane.b32.xlu0 %v3460, 64
        %v3632 = vpop.permute.xlu0 %3631
        %3633 = vrot.lane.b32.xlu0 %v3463, 64
        %v3634 = vpop.permute.xlu0 %3633
        %3651 = vrot.lane.b32.xlu0 %v3549, 96
        %v3652 = vpop.permute.xlu0 %3651
        %3653 = vrot.lane.b32.xlu0 %v3552, 96
        %v3654 = vpop.permute.xlu0 %3653
        %3655 = vrot.lane.b32.xlu0 %v3557, 96
        %v3656 = vpop.permute.xlu0 %3655
        %3657 = vrot.lane.b32.xlu0 %v3560, 96
        %v3658 = vpop.permute.xlu0 %3657
        %3659 = vrot.lane.b32.xlu0 %v3565, 96
        %v3660 = vpop.permute.xlu0 %3659
        %3661 = vrot.lane.b32.xlu0 %v3568, 96
        %v3662 = vpop.permute.xlu0 %3661
        %3663 = vrot.lane.b32.xlu0 %v3573, 96
        %v3664 = vpop.permute.xlu0 %3663
        %3665 = vrot.lane.b32.xlu0 %v3576, 96
        %v3666 = vpop.permute.xlu0 %3665
        %v3675 = vsel %vm2234, %v3210, %v3588
        %v3676 = vsel %vm2234, %v3213, %v3590
        %v3677 = vsel %vm2234, %v3218, %v3592
        %v3678 = vsel %vm2234, %v3221, %v3594
        %v3679 = vsel %vm2234, %v3226, %v3596
        %v3680 = vsel %vm2234, %v3229, %v3598
        %v3681 = vsel %vm2234, %v3234, %v3600
        %v3682 = vsel %vm2234, %v3237, %v3602
        %vm3683 = vcmask 523264
        %v3684 = vsel %vm3683, %v3675, %v3620
        %v3685 = vsel %vm3683, %v3676, %v3622
        %v3686 = vsel %vm3683, %v3677, %v3624
        %v3687 = vsel %vm3683, %v3678, %v3626
        %v3688 = vsel %vm3683, %v3679, %v3628
        %v3689 = vsel %vm3683, %v3680, %v3630
        %v3690 = vsel %vm3683, %v3681, %v3632
        %v3691 = vsel %vm3683, %v3682, %v3634
        %vm3692 = vcmask 785408
        %v3693 = vsel %vm3692, %v3684, %v3652
        %v3694 = vsel %vm3692, %v3685, %v3654
        %v3695 = vsel %vm3692, %v3686, %v3656
        %v3696 = vsel %vm3692, %v3687, %v3658
        %v3697 = vsel %vm3692, %v3688, %v3660
        %v3698 = vsel %vm3692, %v3689, %v3662
        %v3699 = vsel %vm3692, %v3690, %v3664
        %v3700 = vsel %vm3692, %v3691, %v3666
        %v3701 = vpack.c.bf16 %v3694, %v3693
        %v3702 = vpack.c.bf16 %v3696, %v3695
        %v3703 = vpack.c.bf16 %v3698, %v3697
        %v3704 = vpack.c.bf16 %v3700, %v3699
        %v3705 = vld [vmem:[#allocation13] sm:$0xf]
        %v3706 = vld [vmem:[#allocation13 + $0x4] sm:$0xf]
        %v3707 = vld [vmem:[#allocation13 + $0x8] sm:$0xf]
        %v3708 = vld [vmem:[#allocation13 + $0xc] sm:$0xf]
        %v3709 = vld [vmem:[#allocation13 + $0x10] sm:$0xf]
        %v3710 = vld [vmem:[#allocation13 + $0x14] sm:$0xf]
        %v3711 = vld [vmem:[#allocation13 + $0x18] sm:$0xf]
        %v3712 = vld [vmem:[#allocation13 + $0x1c] sm:$0xf]
        %v3713 = vld [vmem:[#allocation13 + $0x20] sm:$0xf]
        %v3714 = vld [vmem:[#allocation13 + $0x24] sm:$0xf]
        %v3715 = vld [vmem:[#allocation13 + $0x28] sm:$0xf]
        %v3716 = vld [vmem:[#allocation13 + $0x2c] sm:$0xf]
        %v3717 = vld [vmem:[#allocation13 + $0x30] sm:$0xf]
        %v3718 = vld [vmem:[#allocation13 + $0x34] sm:$0xf]
        %v3719 = vld [vmem:[#allocation13 + $0x38] sm:$0xf]
        %v3720 = vld [vmem:[#allocation13 + $0x3c] sm:$0xf]
        %v3721 = vld [vmem:[%s10] sm:$0x1]
        %v3723 = vlaneseq
        %v3724 = vshrl.u32 %v3723, 7
        %v3725 = vsub.s32 0, %v3724
        %v3726 = vrot.slane %v3721, %v3725
        %v3744 = vunpack.c.l.b16 %v3705
        %v3745 = vunpack.c.l.b16 %v3706
        %v3746 = vunpack.c.l.b16 %v3707
        %v3747 = vunpack.c.l.b16 %v3708
        %v3748 = vunpack.c.l.b16 %v3709
        %v3749 = vunpack.c.l.b16 %v3710
        %v3750 = vunpack.c.l.b16 %v3711
        %v3751 = vunpack.c.l.b16 %v3712
        %v3752 = vunpack.c.l.b16 %v3713
        %v3753 = vunpack.c.l.b16 %v3714
        %v3754 = vunpack.c.l.b16 %v3715
        %v3755 = vunpack.c.l.b16 %v3716
        %v3756 = vunpack.c.l.b16 %v3717
        %v3757 = vunpack.c.l.b16 %v3718
        %v3758 = vunpack.c.l.b16 %v3719
        %v3759 = vunpack.c.l.b16 %v3720
        %v3760 = vpack.c.b16 %v3745, %v3744
        %v3761 = vpack.c.b16 %v3747, %v3746
        %v3762 = vpack.c.b16 %v3749, %v3748
        %v3763 = vpack.c.b16 %v3751, %v3750
        %v3764 = vpack.c.b16 %v3753, %v3752
        %v3765 = vpack.c.b16 %v3755, %v3754
        %v3766 = vpack.c.b16 %v3757, %v3756
        %v3767 = vpack.c.b16 %v3759, %v3758
        %3776 = vmatprep.subr.bf16.mxu0 0
        %3777 = vmatpush1.bf16.msra.mxu0 %v3767
        %3778 = vmatprep.subr.bf16.mxu0 0
        %3779 = vmatpush1.bf16.msra.mxu0 %v3766
        %3780 = vmatprep.subr.bf16.mxu0 0
        %3781 = vmatpush1.bf16.msra.mxu0 %v3765
        %3782 = vmatprep.subr.bf16.mxu0 0
        %3783 = vmatpush1.bf16.msra.mxu0 %v3764
        %3784 = vmatprep.subr.bf16.mxu0 0
        %3785 = vmatpush1.bf16.msra.mxu0 %v3763
        %3786 = vmatprep.subr.bf16.mxu0 0
        %3787 = vmatpush1.bf16.msra.mxu0 %v3762
        %3788 = vmatprep.subr.bf16.mxu0 0
        %3789 = vmatpush1.bf16.msra.mxu0 %v3761
        %3790 = vmatprep.subr.bf16.mxu0 0
        %3791 = vmatpush1.bf16.msra.mxu0 %v3760
        %3792 = vmatprep.subr.bf16.mxu0 0
        %3793 = vmatpush2.bf16.msra.mxu0 0
        %3794 = vmatprep.subr.bf16.mxu0 0
        %3795 = vmatpush2.bf16.msra.mxu0 0
        %3796 = vmatprep.subr.bf16.mxu0 0
        %3797 = vmatpush2.bf16.msra.mxu0 0
        %3798 = vmatprep.subr.bf16.mxu0 0
        %3799 = vmatpush2.bf16.msra.mxu0 0
        %3800 = vmatprep.subr.bf16.mxu0 0
        %3801 = vmatpush2.bf16.msra.mxu0 0
        %3802 = vmatprep.subr.bf16.mxu0 0
        %3803 = vmatpush2.bf16.msra.mxu0 0
        %3804 = vmatprep.subr.bf16.mxu0 0
        %3805 = vmatpush2.bf16.msra.mxu0 0
        %3806 = vmatprep.subr.bf16.mxu0 0
        %3807 = vmatpush2.bf16.msra.mxu0 0
        %3808 = vmatprep.mubr.bf16.mxu0 0
        %3809 = vmatmul.mubr.bf16.gmra.mxu0 %v3701
        %v3810 = vpop.f32.mrf.mxu0
        %v3811 = vadd.f32 %v3726, %v3810
        %v3812 = vpop.f32.mrf.mxu0
        %v3813 = vpop.f32.mrf.mxu0
        %v3814 = vadd.f32 %v3726, %v3813
        %v3815 = vpop.f32.mrf.mxu0
        %3816 = vmatprep.mubr.bf16.mxu0 0
        %3817 = vmatmul.mubr.bf16.gmra.mxu0 %v3702
        %v3818 = vpop.f32.mrf.mxu0
        %v3819 = vadd.f32 %v3726, %v3818
        %v3820 = vpop.f32.mrf.mxu0
        %v3821 = vpop.f32.mrf.mxu0
        %v3822 = vadd.f32 %v3726, %v3821
        %v3823 = vpop.f32.mrf.mxu0
        %3824 = vmatprep.mubr.bf16.mxu0 0
        %3825 = vmatmul.mubr.bf16.gmra.mxu0 %v3703
        %v3826 = vpop.f32.mrf.mxu0
        %v3827 = vadd.f32 %v3726, %v3826
        %v3828 = vpop.f32.mrf.mxu0
        %v3829 = vpop.f32.mrf.mxu0
        %v3830 = vadd.f32 %v3726, %v3829
        %v3831 = vpop.f32.mrf.mxu0
        %3832 = vmatprep.mubr.bf16.mxu0 0
        %3833 = vmatmul.mubr.bf16.gmra.mxu0 %v3704
        %v3834 = vpop.f32.mrf.mxu0
        %v3835 = vadd.f32 %v3726, %v3834
        %v3836 = vpop.f32.mrf.mxu0
        %v3837 = vpop.f32.mrf.mxu0
        %v3838 = vadd.f32 %v3726, %v3837
        %v3839 = vpop.f32.mrf.mxu0
        %3840 = vdwg.mxu0
        %v3841 = vadd.f32 %v1823, %v3811
        %v3842 = vadd.f32 %v1824, %v3814
        %v3843 = vadd.f32 %v1825, %v3819
        %v3844 = vadd.f32 %v1826, %v3822
        %v3845 = vadd.f32 %v1827, %v3827
        %v3846 = vadd.f32 %v1828, %v3830
        %v3847 = vadd.f32 %v1829, %v3835
        %v3848 = vadd.f32 %v1830, %v3838
        %3849 = vadd.xlane.f32.xlu0 %v3841
        %v3850 = vpop.xlane.xlu0 %3849
        %3851 = vadd.xlane.f32.xlu0 %v3842
        %v3852 = vpop.xlane.xlu0 %3851
        %3853 = vadd.xlane.f32.xlu0 %v3843
        %v3854 = vpop.xlane.xlu0 %3853
        %3855 = vadd.xlane.f32.xlu0 %v3844
        %v3856 = vpop.xlane.xlu0 %3855
        %3857 = vadd.xlane.f32.xlu0 %v3845
        %v3858 = vpop.xlane.xlu0 %3857
        %3859 = vadd.xlane.f32.xlu0 %v3846
        %v3860 = vpop.xlane.xlu0 %3859
        %3861 = vadd.xlane.f32.xlu0 %v3847
        %v3862 = vpop.xlane.xlu0 %3861
        %3863 = vadd.xlane.f32.xlu0 %v3848
        %v3864 = vpop.xlane.xlu0 %3863
        %v3865 = vmul.f32 %v3850, %v1847
        %v3866 = vmul.f32 %v3852, %v1847
        %v3867 = vmul.f32 %v3854, %v1847
        %v3868 = vmul.f32 %v3856, %v1847
        %v3869 = vmul.f32 %v3858, %v1847
        %v3870 = vmul.f32 %v3860, %v1847
        %v3871 = vmul.f32 %v3862, %v1847
        %v3872 = vmul.f32 %v3864, %v1847
        %v3873 = vsub.f32 %v3841, %v3865
        %v3874 = vsub.f32 %v3842, %v3866
        %v3875 = vsub.f32 %v3843, %v3867
        %v3876 = vsub.f32 %v3844, %v3868
        %v3877 = vsub.f32 %v3845, %v3869
        %v3878 = vsub.f32 %v3846, %v3870
        %v3879 = vsub.f32 %v3847, %v3871
        %v3880 = vsub.f32 %v3848, %v3872
        %v3881 = vmul.f32 %v3873, %v3873
        %v3882 = vmul.f32 %v3874, %v3874
        %v3883 = vmul.f32 %v3875, %v3875
        %v3884 = vmul.f32 %v3876, %v3876
        %v3885 = vmul.f32 %v3877, %v3877
        %v3886 = vmul.f32 %v3878, %v3878
        %v3887 = vmul.f32 %v3879, %v3879
        %v3888 = vmul.f32 %v3880, %v3880
        %3889 = vadd.xlane.f32.xlu0 %v3881
        %v3890 = vpop.xlane.xlu0 %3889
        %3891 = vadd.xlane.f32.xlu0 %v3882
        %v3892 = vpop.xlane.xlu0 %3891
        %3893 = vadd.xlane.f32.xlu0 %v3883
        %v3894 = vpop.xlane.xlu0 %3893
        %3895 = vadd.xlane.f32.xlu0 %v3884
        %v3896 = vpop.xlane.xlu0 %3895
        %3897 = vadd.xlane.f32.xlu0 %v3885
        %v3898 = vpop.xlane.xlu0 %3897
        %3899 = vadd.xlane.f32.xlu0 %v3886
        %v3900 = vpop.xlane.xlu0 %3899
        %3901 = vadd.xlane.f32.xlu0 %v3887
        %v3902 = vpop.xlane.xlu0 %3901
        %3903 = vadd.xlane.f32.xlu0 %v3888
        %v3904 = vpop.xlane.xlu0 %3903
        %v3905 = vmul.f32 %v3890, %v1847
        %v3906 = vmul.f32 %v3892, %v1847
        %v3907 = vmul.f32 %v3894, %v1847
        %v3908 = vmul.f32 %v3896, %v1847
        %v3909 = vmul.f32 %v3898, %v1847
        %v3910 = vmul.f32 %v3900, %v1847
        %v3911 = vmul.f32 %v3902, %v1847
        %v3912 = vmul.f32 %v3904, %v1847
        %v3913 = vadd.f32 %v3905, 1e-05
        %v3914 = vadd.f32 %v3906, 1e-05
        %v3915 = vadd.f32 %v3907, 1e-05
        %v3916 = vadd.f32 %v3908, 1e-05
        %v3917 = vadd.f32 %v3909, 1e-05
        %v3918 = vadd.f32 %v3910, 1e-05
        %v3919 = vadd.f32 %v3911, 1e-05
        %v3920 = vadd.f32 %v3912, 1e-05
        %v3921 = vrsqrt.pop %v3913
        %v3922 = vrsqrt.pop %v3914
        %v3923 = vrsqrt.pop %v3915
        %v3924 = vrsqrt.pop %v3916
        %v3925 = vrsqrt.pop %v3917
        %v3926 = vrsqrt.pop %v3918
        %v3927 = vrsqrt.pop %v3919
        %v3928 = vrsqrt.pop %v3920
        %v3929 = vmul.f32 %v3873, %v3921
        %v3930 = vmul.f32 %v3874, %v3922
        %v3931 = vmul.f32 %v3875, %v3923
        %v3932 = vmul.f32 %v3876, %v3924
        %v3933 = vmul.f32 %v3877, %v3925
        %v3934 = vmul.f32 %v3878, %v3926
        %v3935 = vmul.f32 %v3879, %v3927
        %v3936 = vmul.f32 %v3880, %v3928
        %v3937 = vld [vmem:[%s11] sm:$0x1]
        %v3939 = vlaneseq
        %v3940 = vshrl.u32 %v3939, 7
        %v3941 = vsub.s32 0, %v3940
        %v3942 = vrot.slane %v3937, %v3941
        %v3944 = vmul.f32 %v3929, %v3942
        %v3945 = vmul.f32 %v3930, %v3942
        %v3946 = vmul.f32 %v3931, %v3942
        %v3947 = vmul.f32 %v3932, %v3942
        %v3948 = vmul.f32 %v3933, %v3942
        %v3949 = vmul.f32 %v3934, %v3942
        %v3950 = vmul.f32 %v3935, %v3942
        %v3951 = vmul.f32 %v3936, %v3942
        %v3952 = vld [vmem:[%s12] sm:$0x1]
        %v3954 = vlaneseq
        %v3955 = vshrl.u32 %v3954, 7
        %v3956 = vsub.s32 0, %v3955
        %v3957 = vrot.slane %v3952, %v3956
        %v3959 = vadd.f32 %v3944, %v3957
        %v3960 = vadd.f32 %v3945, %v3957
        %v3961 = vadd.f32 %v3946, %v3957
        %v3962 = vadd.f32 %v3947, %v3957
        %v3963 = vadd.f32 %v3948, %v3957
        %v3964 = vadd.f32 %v3949, %v3957
        %v3965 = vadd.f32 %v3950, %v3957
        %v3966 = vadd.f32 %v3951, %v3957
        %v3967 = vpack.c.bf16 %v3960, %v3959
        %v3968 = vpack.c.bf16 %v3962, %v3961
        %v3969 = vpack.c.bf16 %v3964, %v3963
        %v3970 = vpack.c.bf16 %v3966, %v3965
        %v3971 = vld [vmem:[#allocation15] sm:$0xff]
        %v3972 = vld [vmem:[#allocation15 + $0x8] sm:$0xff]
        %v3973 = vld [vmem:[#allocation15 + $0x10] sm:$0xff]
        %v3974 = vld [vmem:[#allocation15 + $0x18] sm:$0xff]
        %v3975 = vld [vmem:[#allocation15 + $0x20] sm:$0xff]
        %v3976 = vld [vmem:[#allocation15 + $0x28] sm:$0xff]
        %v3977 = vld [vmem:[#allocation15 + $0x30] sm:$0xff]
        %v3978 = vld [vmem:[#allocation15 + $0x38] sm:$0xff]
        %v3979 = vld [vmem:[#allocation15 + $0x40] sm:$0xff]
        %v3980 = vld [vmem:[#allocation15 + $0x48] sm:$0xff]
        %v3981 = vld [vmem:[#allocation15 + $0x50] sm:$0xff]
        %v3982 = vld [vmem:[#allocation15 + $0x58] sm:$0xff]
        %v3983 = vld [vmem:[#allocation15 + $0x60] sm:$0xff]
        %v3984 = vld [vmem:[#allocation15 + $0x68] sm:$0xff]
        %v3985 = vld [vmem:[#allocation15 + $0x70] sm:$0xff]
        %v3986 = vld [vmem:[#allocation15 + $0x78] sm:$0xff]
        %v3987 = vld [vmem:[%s14] sm:$0x3]
        %v3989 = vlaneseq
        %v3990 = vshrl.u32 %v3989, 7
        %v3991 = vsub.s32 0, %v3990
        %v3992 = vrot.slane %v3987, %v3991
        %v3993 = vlaneseq
        %v3994 = vshrl.u32 %v3993, 7
        %v3995 = vsub.s32 1, %v3994
        %v3996 = vrot.slane %v3987, %v3995
        %v4015 = vunpack.c.l.b16 %v3971
        %v4016 = vunpack.c.h.b16 %v3971
        %v4017 = vunpack.c.l.b16 %v3972
        %v4018 = vunpack.c.h.b16 %v3972
        %v4019 = vunpack.c.l.b16 %v3973
        %v4020 = vunpack.c.h.b16 %v3973
        %v4021 = vunpack.c.l.b16 %v3974
        %v4022 = vunpack.c.h.b16 %v3974
        %v4023 = vunpack.c.l.b16 %v3975
        %v4024 = vunpack.c.h.b16 %v3975
        %v4025 = vunpack.c.l.b16 %v3976
        %v4026 = vunpack.c.h.b16 %v3976
        %v4027 = vunpack.c.l.b16 %v3977
        %v4028 = vunpack.c.h.b16 %v3977
        %v4029 = vunpack.c.l.b16 %v3978
        %v4030 = vunpack.c.h.b16 %v3978
        %v4031 = vunpack.c.l.b16 %v3979
        %v4032 = vunpack.c.h.b16 %v3979
        %v4033 = vunpack.c.l.b16 %v3980
        %v4034 = vunpack.c.h.b16 %v3980
        %v4035 = vunpack.c.l.b16 %v3981
        %v4036 = vunpack.c.h.b16 %v3981
        %v4037 = vunpack.c.l.b16 %v3982
        %v4038 = vunpack.c.h.b16 %v3982
        %v4039 = vunpack.c.l.b16 %v3983
        %v4040 = vunpack.c.h.b16 %v3983
        %v4041 = vunpack.c.l.b16 %v3984
        %v4042 = vunpack.c.h.b16 %v3984
        %v4043 = vunpack.c.l.b16 %v3985
        %v4044 = vunpack.c.h.b16 %v3985
        %v4045 = vunpack.c.l.b16 %v3986
        %v4046 = vunpack.c.h.b16 %v3986
        %v4047 = vpack.c.b16 %v4017, %v4015
        %v4048 = vpack.c.b16 %v4018, %v4016
        %v4049 = vpack.c.b16 %v4021, %v4019
        %v4050 = vpack.c.b16 %v4022, %v4020
        %v4051 = vpack.c.b16 %v4025, %v4023
        %v4052 = vpack.c.b16 %v4026, %v4024
        %v4053 = vpack.c.b16 %v4029, %v4027
        %v4054 = vpack.c.b16 %v4030, %v4028
        %v4055 = vpack.c.b16 %v4033, %v4031
        %v4056 = vpack.c.b16 %v4034, %v4032
        %v4057 = vpack.c.b16 %v4037, %v4035
        %v4058 = vpack.c.b16 %v4038, %v4036
        %v4059 = vpack.c.b16 %v4041, %v4039
        %v4060 = vpack.c.b16 %v4042, %v4040
        %v4061 = vpack.c.b16 %v4045, %v4043
        %v4062 = vpack.c.b16 %v4046, %v4044
        %4079 = vmatprep.subr.bf16.mxu0 %v4062
        %4080 = vmatpush1.bf16.msra.mxu0 %v4061
        %4081 = vmatprep.subr.bf16.mxu0 %v4060
        %4082 = vmatpush1.bf16.msra.mxu0 %v4059
        %4083 = vmatprep.subr.bf16.mxu0 %v4058
        %4084 = vmatpush1.bf16.msra.mxu0 %v4057
        %4085 = vmatprep.subr.bf16.mxu0 %v4056
        %4086 = vmatpush1.bf16.msra.mxu0 %v4055
        %4087 = vmatprep.subr.bf16.mxu0 %v4054
        %4088 = vmatpush1.bf16.msra.mxu0 %v4053
        %4089 = vmatprep.subr.bf16.mxu0 %v4052
        %4090 = vmatpush1.bf16.msra.mxu0 %v4051
        %4091 = vmatprep.subr.bf16.mxu0 %v4050
        %4092 = vmatpush1.bf16.msra.mxu0 %v4049
        %4093 = vmatprep.subr.bf16.mxu0 %v4048
        %4094 = vmatpush1.bf16.msra.mxu0 %v4047
        %4095 = vmatprep.subr.bf16.mxu0 0
        %4096 = vmatpush2.bf16.msra.mxu0 0
        %4097 = vmatprep.subr.bf16.mxu0 0
        %4098 = vmatpush2.bf16.msra.mxu0 0
        %4099 = vmatprep.subr.bf16.mxu0 0
        %4100 = vmatpush2.bf16.msra.mxu0 0
        %4101 = vmatprep.subr.bf16.mxu0 0
        %4102 = vmatpush2.bf16.msra.mxu0 0
        %4103 = vmatprep.subr.bf16.mxu0 0
        %4104 = vmatpush2.bf16.msra.mxu0 0
        %4105 = vmatprep.subr.bf16.mxu0 0
        %4106 = vmatpush2.bf16.msra.mxu0 0
        %4107 = vmatprep.subr.bf16.mxu0 0
        %4108 = vmatpush2.bf16.msra.mxu0 0
        %4109 = vmatprep.subr.bf16.mxu0 0
        %4110 = vmatpush2.bf16.msra.mxu0 0
        %4111 = vmatprep.mubr.bf16.mxu0 0
        %4112 = vmatmul.mubr.bf16.gmra.mxu0 %v3967
        %v4113 = vpop.f32.mrf.mxu0
        %v4114 = vadd.f32 %v3992, %v4113
        %v4115 = vpop.f32.mrf.mxu0
        %v4116 = vadd.f32 %v3996, %v4115
        %v4117 = vpop.f32.mrf.mxu0
        %v4118 = vadd.f32 %v3992, %v4117
        %v4119 = vpop.f32.mrf.mxu0
        %v4120 = vadd.f32 %v3996, %v4119
        %4121 = vmatprep.mubr.bf16.mxu0 0
        %4122 = vmatmul.mubr.bf16.gmra.mxu0 %v3968
        %v4123 = vpop.f32.mrf.mxu0
        %v4124 = vadd.f32 %v3992, %v4123
        %v4125 = vpop.f32.mrf.mxu0
        %v4126 = vadd.f32 %v3996, %v4125
        %v4127 = vpop.f32.mrf.mxu0
        %v4128 = vadd.f32 %v3992, %v4127
        %v4129 = vpop.f32.mrf.mxu0
        %v4130 = vadd.f32 %v3996, %v4129
        %4131 = vmatprep.mubr.bf16.mxu0 0
        %4132 = vmatmul.mubr.bf16.gmra.mxu0 %v3969
        %v4133 = vpop.f32.mrf.mxu0
        %v4134 = vadd.f32 %v3992, %v4133
        %v4135 = vpop.f32.mrf.mxu0
        %v4136 = vadd.f32 %v3996, %v4135
        %v4137 = vpop.f32.mrf.mxu0
        %v4138 = vadd.f32 %v3992, %v4137
        %v4139 = vpop.f32.mrf.mxu0
        %v4140 = vadd.f32 %v3996, %v4139
        %4141 = vmatprep.mubr.bf16.mxu0 0
        %4142 = vmatmul.mubr.bf16.gmra.mxu0 %v3970
        %v4143 = vpop.f32.mrf.mxu0
        %v4144 = vadd.f32 %v3992, %v4143
        %v4145 = vpop.f32.mrf.mxu0
        %v4146 = vadd.f32 %v3996, %v4145
        %v4147 = vpop.f32.mrf.mxu0
        %v4148 = vadd.f32 %v3992, %v4147
        %v4149 = vpop.f32.mrf.mxu0
        %v4150 = vadd.f32 %v3996, %v4149
        %4151 = vdwg.mxu0
        %v4152 = vmul.f32 %v4114, %v4114
        %v4153 = vmul.f32 %v4116, %v4116
        %v4154 = vmul.f32 %v4118, %v4118
        %v4155 = vmul.f32 %v4120, %v4120
        %v4156 = vmul.f32 %v4124, %v4124
        %v4157 = vmul.f32 %v4126, %v4126
        %v4158 = vmul.f32 %v4128, %v4128
        %v4159 = vmul.f32 %v4130, %v4130
        %v4160 = vmul.f32 %v4134, %v4134
        %v4161 = vmul.f32 %v4136, %v4136
        %v4162 = vmul.f32 %v4138, %v4138
        %v4163 = vmul.f32 %v4140, %v4140
        %v4164 = vmul.f32 %v4144, %v4144
        %v4165 = vmul.f32 %v4146, %v4146
        %v4166 = vmul.f32 %v4148, %v4148
        %v4167 = vmul.f32 %v4150, %v4150
        %v4168 = vmul.f32 %v4114, %v4152
        %v4169 = vmul.f32 %v4116, %v4153
        %v4170 = vmul.f32 %v4118, %v4154
        %v4171 = vmul.f32 %v4120, %v4155
        %v4172 = vmul.f32 %v4124, %v4156
        %v4173 = vmul.f32 %v4126, %v4157
        %v4174 = vmul.f32 %v4128, %v4158
        %v4175 = vmul.f32 %v4130, %v4159
        %v4176 = vmul.f32 %v4134, %v4160
        %v4177 = vmul.f32 %v4136, %v4161
        %v4178 = vmul.f32 %v4138, %v4162
        %v4179 = vmul.f32 %v4140, %v4163
        %v4180 = vmul.f32 %v4144, %v4164
        %v4181 = vmul.f32 %v4146, %v4165
        %v4182 = vmul.f32 %v4148, %v4166
        %v4183 = vmul.f32 %v4150, %v4167
        %v4184 = vmul.f32 %v4168, 0.044715
        %v4185 = vmul.f32 %v4169, 0.044715
        %v4186 = vmul.f32 %v4170, 0.044715
        %v4187 = vmul.f32 %v4171, 0.044715
        %v4188 = vmul.f32 %v4172, 0.044715
        %v4189 = vmul.f32 %v4173, 0.044715
        %v4190 = vmul.f32 %v4174, 0.044715
        %v4191 = vmul.f32 %v4175, 0.044715
        %v4192 = vmul.f32 %v4176, 0.044715
        %v4193 = vmul.f32 %v4177, 0.044715
        %v4194 = vmul.f32 %v4178, 0.044715
        %v4195 = vmul.f32 %v4179, 0.044715
        %v4196 = vmul.f32 %v4180, 0.044715
        %v4197 = vmul.f32 %v4181, 0.044715
        %v4198 = vmul.f32 %v4182, 0.044715
        %v4199 = vmul.f32 %v4183, 0.044715
        %v4200 = vadd.f32 %v4114, %v4184
        %v4201 = vadd.f32 %v4116, %v4185
        %v4202 = vadd.f32 %v4118, %v4186
        %v4203 = vadd.f32 %v4120, %v4187
        %v4204 = vadd.f32 %v4124, %v4188
        %v4205 = vadd.f32 %v4126, %v4189
        %v4206 = vadd.f32 %v4128, %v4190
        %v4207 = vadd.f32 %v4130, %v4191
        %v4208 = vadd.f32 %v4134, %v4192
        %v4209 = vadd.f32 %v4136, %v4193
        %v4210 = vadd.f32 %v4138, %v4194
        %v4211 = vadd.f32 %v4140, %v4195
        %v4212 = vadd.f32 %v4144, %v4196
        %v4213 = vadd.f32 %v4146, %v4197
        %v4214 = vadd.f32 %v4148, %v4198
        %v4215 = vadd.f32 %v4150, %v4199
        %v4216 = vmul.f32 %v4200, 0.7978846
        %v4217 = vmul.f32 %v4201, 0.7978846
        %v4218 = vmul.f32 %v4202, 0.7978846
        %v4219 = vmul.f32 %v4203, 0.7978846
        %v4220 = vmul.f32 %v4204, 0.7978846
        %v4221 = vmul.f32 %v4205, 0.7978846
        %v4222 = vmul.f32 %v4206, 0.7978846
        %v4223 = vmul.f32 %v4207, 0.7978846
        %v4224 = vmul.f32 %v4208, 0.7978846
        %v4225 = vmul.f32 %v4209, 0.7978846
        %v4226 = vmul.f32 %v4210, 0.7978846
        %v4227 = vmul.f32 %v4211, 0.7978846
        %v4228 = vmul.f32 %v4212, 0.7978846
        %v4229 = vmul.f32 %v4213, 0.7978846
        %v4230 = vmul.f32 %v4214, 0.7978846
        %v4231 = vmul.f32 %v4215, 0.7978846
        %v4232 = vtanh.pop %v4216
        %v4233 = vtanh.pop %v4217
        %v4234 = vtanh.pop %v4218
        %v4235 = vtanh.pop %v4219
        %v4236 = vtanh.pop %v4220
        %v4237 = vtanh.pop %v4221
        %v4238 = vtanh.pop %v4222
        %v4239 = vtanh.pop %v4223
        %v4240 = vtanh.pop %v4224
        %v4241 = vtanh.pop %v4225
        %v4242 = vtanh.pop %v4226
        %v4243 = vtanh.pop %v4227
        %v4244 = vtanh.pop %v4228
        %v4245 = vtanh.pop %v4229
        %v4246 = vtanh.pop %v4230
        %v4247 = vtanh.pop %v4231
        %v4248 = vadd.f32 %v4232, 1.0
        %v4249 = vadd.f32 %v4233, 1.0
        %v4250 = vadd.f32 %v4234, 1.0
        %v4251 = vadd.f32 %v4235, 1.0
        %v4252 = vadd.f32 %v4236, 1.0
        %v4253 = vadd.f32 %v4237, 1.0
        %v4254 = vadd.f32 %v4238, 1.0
        %v4255 = vadd.f32 %v4239, 1.0
        %v4256 = vadd.f32 %v4240, 1.0
        %v4257 = vadd.f32 %v4241, 1.0
        %v4258 = vadd.f32 %v4242, 1.0
        %v4259 = vadd.f32 %v4243, 1.0
        %v4260 = vadd.f32 %v4244, 1.0
        %v4261 = vadd.f32 %v4245, 1.0
        %v4262 = vadd.f32 %v4246, 1.0
        %v4263 = vadd.f32 %v4247, 1.0
        %v4264 = vmul.f32 %v4248, 0.5
        %v4265 = vmul.f32 %v4249, 0.5
        %v4266 = vmul.f32 %v4250, 0.5
        %v4267 = vmul.f32 %v4251, 0.5
        %v4268 = vmul.f32 %v4252, 0.5
        %v4269 = vmul.f32 %v4253, 0.5
        %v4270 = vmul.f32 %v4254, 0.5
        %v4271 = vmul.f32 %v4255, 0.5
        %v4272 = vmul.f32 %v4256, 0.5
        %v4273 = vmul.f32 %v4257, 0.5
        %v4274 = vmul.f32 %v4258, 0.5
        %v4275 = vmul.f32 %v4259, 0.5
        %v4276 = vmul.f32 %v4260, 0.5
        %v4277 = vmul.f32 %v4261, 0.5
        %v4278 = vmul.f32 %v4262, 0.5
        %v4279 = vmul.f32 %v4263, 0.5
        %v4280 = vmul.f32 %v4114, %v4264
        %v4281 = vmul.f32 %v4116, %v4265
        %v4282 = vmul.f32 %v4118, %v4266
        %v4283 = vmul.f32 %v4120, %v4267
        %v4284 = vmul.f32 %v4124, %v4268
        %v4285 = vmul.f32 %v4126, %v4269
        %v4286 = vmul.f32 %v4128, %v4270
        %v4287 = vmul.f32 %v4130, %v4271
        %v4288 = vmul.f32 %v4134, %v4272
        %v4289 = vmul.f32 %v4136, %v4273
        %v4290 = vmul.f32 %v4138, %v4274
        %v4291 = vmul.f32 %v4140, %v4275
        %v4292 = vmul.f32 %v4144, %v4276
        %v4293 = vmul.f32 %v4146, %v4277
        %v4294 = vmul.f32 %v4148, %v4278
        %v4295 = vmul.f32 %v4150, %v4279
        %v4296 = vpack.c.bf16 %v4282, %v4280
        %v4297 = vpack.c.bf16 %v4283, %v4281
        %v4298 = vpack.c.bf16 %v4286, %v4284
        %v4299 = vpack.c.bf16 %v4287, %v4285
        %v4300 = vpack.c.bf16 %v4290, %v4288
        %v4301 = vpack.c.bf16 %v4291, %v4289
        %v4302 = vpack.c.bf16 %v4294, %v4292
        %v4303 = vpack.c.bf16 %v4295, %v4293
        %v4304 = vld [vmem:[#allocation16] sm:$0xf]
        %v4305 = vld [vmem:[#allocation16 + $0x4] sm:$0xf]
        %v4306 = vld [vmem:[#allocation16 + $0x8] sm:$0xf]
        %v4307 = vld [vmem:[#allocation16 + $0xc] sm:$0xf]
        %v4308 = vld [vmem:[#allocation16 + $0x10] sm:$0xf]
        %v4309 = vld [vmem:[#allocation16 + $0x14] sm:$0xf]
        %v4310 = vld [vmem:[#allocation16 + $0x18] sm:$0xf]
        %v4311 = vld [vmem:[#allocation16 + $0x1c] sm:$0xf]
        %v4312 = vld [vmem:[#allocation16 + $0x20] sm:$0xf]
        %v4313 = vld [vmem:[#allocation16 + $0x24] sm:$0xf]
        %v4314 = vld [vmem:[#allocation16 + $0x28] sm:$0xf]
        %v4315 = vld [vmem:[#allocation16 + $0x2c] sm:$0xf]
        %v4316 = vld [vmem:[#allocation16 + $0x30] sm:$0xf]
        %v4317 = vld [vmem:[#allocation16 + $0x34] sm:$0xf]
        %v4318 = vld [vmem:[#allocation16 + $0x38] sm:$0xf]
        %v4319 = vld [vmem:[#allocation16 + $0x3c] sm:$0xf]
        %v4320 = vld [vmem:[#allocation16 + $0x40] sm:$0xf]
        %v4321 = vld [vmem:[#allocation16 + $0x44] sm:$0xf]
        %v4322 = vld [vmem:[#allocation16 + $0x48] sm:$0xf]
        %v4323 = vld [vmem:[#allocation16 + $0x4c] sm:$0xf]
        %v4324 = vld [vmem:[#allocation16 + $0x50] sm:$0xf]
        %v4325 = vld [vmem:[#allocation16 + $0x54] sm:$0xf]
        %v4326 = vld [vmem:[#allocation16 + $0x58] sm:$0xf]
        %v4327 = vld [vmem:[#allocation16 + $0x5c] sm:$0xf]
        %v4328 = vld [vmem:[#allocation16 + $0x60] sm:$0xf]
        %v4329 = vld [vmem:[#allocation16 + $0x64] sm:$0xf]
        %v4330 = vld [vmem:[#allocation16 + $0x68] sm:$0xf]
        %v4331 = vld [vmem:[#allocation16 + $0x6c] sm:$0xf]
        %v4332 = vld [vmem:[#allocation16 + $0x70] sm:$0xf]
        %v4333 = vld [vmem:[#allocation16 + $0x74] sm:$0xf]
        %v4334 = vld [vmem:[#allocation16 + $0x78] sm:$0xf]
        %v4335 = vld [vmem:[#allocation16 + $0x7c] sm:$0xf]
        %v4336 = vld [vmem:[%s16] sm:$0x1]
        %v4338 = vlaneseq
        %v4339 = vshrl.u32 %v4338, 7
        %v4340 = vsub.s32 0, %v4339
        %v4341 = vrot.slane %v4336, %v4340
        %v4375 = vunpack.c.l.b16 %v4304
        %v4376 = vunpack.c.l.b16 %v4305
        %v4377 = vunpack.c.l.b16 %v4306
        %v4378 = vunpack.c.l.b16 %v4307
        %v4379 = vunpack.c.l.b16 %v4308
        %v4380 = vunpack.c.l.b16 %v4309
        %v4381 = vunpack.c.l.b16 %v4310
        %v4382 = vunpack.c.l.b16 %v4311
        %v4383 = vunpack.c.l.b16 %v4312
        %v4384 = vunpack.c.l.b16 %v4313
        %v4385 = vunpack.c.l.b16 %v4314
        %v4386 = vunpack.c.l.b16 %v4315
        %v4387 = vunpack.c.l.b16 %v4316
        %v4388 = vunpack.c.l.b16 %v4317
        %v4389 = vunpack.c.l.b16 %v4318
        %v4390 = vunpack.c.l.b16 %v4319
        %v4391 = vunpack.c.l.b16 %v4320
        %v4392 = vunpack.c.l.b16 %v4321
        %v4393 = vunpack.c.l.b16 %v4322
        %v4394 = vunpack.c.l.b16 %v4323
        %v4395 = vunpack.c.l.b16 %v4324
        %v4396 = vunpack.c.l.b16 %v4325
        %v4397 = vunpack.c.l.b16 %v4326
        %v4398 = vunpack.c.l.b16 %v4327
        %v4399 = vunpack.c.l.b16 %v4328
        %v4400 = vunpack.c.l.b16 %v4329
        %v4401 = vunpack.c.l.b16 %v4330
        %v4402 = vunpack.c.l.b16 %v4331
        %v4403 = vunpack.c.l.b16 %v4332
        %v4404 = vunpack.c.l.b16 %v4333
        %v4405 = vunpack.c.l.b16 %v4334
        %v4406 = vunpack.c.l.b16 %v4335
        %v4407 = vpack.c.b16 %v4376, %v4375
        %v4408 = vpack.c.b16 %v4378, %v4377
        %v4409 = vpack.c.b16 %v4380, %v4379
        %v4410 = vpack.c.b16 %v4382, %v4381
        %v4411 = vpack.c.b16 %v4384, %v4383
        %v4412 = vpack.c.b16 %v4386, %v4385
        %v4413 = vpack.c.b16 %v4388, %v4387
        %v4414 = vpack.c.b16 %v4390, %v4389
        %v4415 = vpack.c.b16 %v4392, %v4391
        %v4416 = vpack.c.b16 %v4394, %v4393
        %v4417 = vpack.c.b16 %v4396, %v4395
        %v4418 = vpack.c.b16 %v4398, %v4397
        %v4419 = vpack.c.b16 %v4400, %v4399
        %v4420 = vpack.c.b16 %v4402, %v4401
        %v4421 = vpack.c.b16 %v4404, %v4403
        %v4422 = vpack.c.b16 %v4406, %v4405
        %4439 = vmatprep.subr.bf16.mxu0 0
        %4440 = vmatpush1.bf16.msra.mxu0 %v4414
        %4441 = vmatprep.subr.bf16.mxu0 0
        %4442 = vmatpush1.bf16.msra.mxu0 %v4413
        %4443 = vmatprep.subr.bf16.mxu0 0
        %4444 = vmatpush1.bf16.msra.mxu0 %v4412
        %4445 = vmatprep.subr.bf16.mxu0 0
        %4446 = vmatpush1.bf16.msra.mxu0 %v4411
        %4447 = vmatprep.subr.bf16.mxu0 0
        %4448 = vmatpush1.bf16.msra.mxu0 %v4410
        %4449 = vmatprep.subr.bf16.mxu0 0
        %4450 = vmatpush1.bf16.msra.mxu0 %v4409
        %4451 = vmatprep.subr.bf16.mxu0 0
        %4452 = vmatpush1.bf16.msra.mxu0 %v4408
        %4453 = vmatprep.subr.bf16.mxu0 0
        %4454 = vmatpush1.bf16.msra.mxu0 %v4407
        %4455 = vmatprep.subr.bf16.mxu0 0
        %4456 = vmatpush2.bf16.msra.mxu0 %v4422
        %4457 = vmatprep.subr.bf16.mxu0 0
        %4458 = vmatpush2.bf16.msra.mxu0 %v4421
        %4459 = vmatprep.subr.bf16.mxu0 0
        %4460 = vmatpush2.bf16.msra.mxu0 %v4420
        %4461 = vmatprep.subr.bf16.mxu0 0
        %4462 = vmatpush2.bf16.msra.mxu0 %v4419
        %4463 = vmatprep.subr.bf16.mxu0 0
        %4464 = vmatpush2.bf16.msra.mxu0 %v4418
        %4465 = vmatprep.subr.bf16.mxu0 0
        %4466 = vmatpush2.bf16.msra.mxu0 %v4417
        %4467 = vmatprep.subr.bf16.mxu0 0
        %4468 = vmatpush2.bf16.msra.mxu0 %v4416
        %4469 = vmatprep.subr.bf16.mxu0 0
        %4470 = vmatpush2.bf16.msra.mxu0 %v4415
        %4471 = vmatprep.mubr.bf16.mxu0 %v4297
        %4472 = vmatmul.mubr.bf16.gmra.mxu0 %v4296
        %v4473 = vpop.f32.mrf.mxu0
        %v4474 = vadd.f32 %v4341, %v4473
        %v4475 = vpop.f32.mrf.mxu0
        %v4476 = vpop.f32.mrf.mxu0
        %v4477 = vadd.f32 %v4341, %v4476
        %v4478 = vpop.f32.mrf.mxu0
        %4479 = vmatprep.mubr.bf16.mxu0 %v4299
        %4480 = vmatmul.mubr.bf16.gmra.mxu0 %v4298
        %v4481 = vpop.f32.mrf.mxu0
        %v4482 = vadd.f32 %v4341, %v4481
        %v4483 = vpop.f32.mrf.mxu0
        %v4484 = vpop.f32.mrf.mxu0
        %v4485 = vadd.f32 %v4341, %v4484
        %v4486 = vpop.f32.mrf.mxu0
        %4487 = vmatprep.mubr.bf16.mxu0 %v4301
        %4488 = vmatmul.mubr.bf16.gmra.mxu0 %v4300
        %v4489 = vpop.f32.mrf.mxu0
        %v4490 = vadd.f32 %v4341, %v4489
        %v4491 = vpop.f32.mrf.mxu0
        %v4492 = vpop.f32.mrf.mxu0
        %v4493 = vadd.f32 %v4341, %v4492
        %v4494 = vpop.f32.mrf.mxu0
        %4495 = vmatprep.mubr.bf16.mxu0 %v4303
        %4496 = vmatmul.mubr.bf16.gmra.mxu0 %v4302
        %v4497 = vpop.f32.mrf.mxu0
        %v4498 = vadd.f32 %v4341, %v4497
        %v4499 = vpop.f32.mrf.mxu0
        %v4500 = vpop.f32.mrf.mxu0
        %v4501 = vadd.f32 %v4341, %v4500
        %v4502 = vpop.f32.mrf.mxu0
        %4503 = vdwg.mxu0
        %v4504 = vadd.f32 %v3841, %v4474
        %v4505 = vadd.f32 %v3842, %v4477
        %v4506 = vadd.f32 %v3843, %v4482
        %v4507 = vadd.f32 %v3844, %v4485
        %v4508 = vadd.f32 %v3845, %v4490
        %v4509 = vadd.f32 %v3846, %v4493
        %v4510 = vadd.f32 %v3847, %v4498
        %v4511 = vadd.f32 %v3848, %v4501
        %4512 = vst [vmem:[%s680] sm:$0xff] %v4504
        %4513 = vst [vmem:[%s680 + $0x8] sm:$0xff] %v4505
        %4514 = vst [vmem:[%s680 + $0x10] sm:$0xff] %v4506
        %4515 = vst [vmem:[%s680 + $0x18] sm:$0xff] %v4507
        %4516 = vst [vmem:[%s680 + $0x20] sm:$0xff] %v4508
        %4517 = vst [vmem:[%s680 + $0x28] sm:$0xff] %v4509
        %4518 = vst [vmem:[%s680 + $0x30] sm:$0xff] %v4510
        %4519 = vst [vmem:[%s680 + $0x38] sm:$0xff] %v4511
        %s4520 = sand.u32 %s422, 1
        %s4521 = scalar_lea.sflag [#allocation6], %s4520
        %s4522 = sand.u32 %s422, 1
        %s4523 = smul.addr %s4522, 64
        %s4524 = scalar_lea.vmem [#allocation18], %s4523
        // Predicated region
        $region125: #{tpu_custom_call.1} parent=87 // pred_check
          %p4525 = pneg %p432
        $region126: #{tpu_custom_call.1} parent=87 // pred_check_branch
          %4527 = sbr.rel (%p4525) target = $region128
        $region127: #{tpu_custom_call.1} parent=87 // pred_region
          %s4528 = smul.u32 8, %s43
          %s4530 = ssub.s32 1024, 1024
          %4531 = vsyncadd %s4521, %s4530
          %s4532 = smul.addr %s42, 16
          %s4533 = sadd.s32 %s4528, %s4532
          %s4534 = smul.addr %s4533, 128
          %s4535 = scalar_lea.hbm %s17, %s4534
          %s4536 = sshll.u32 %s4524, 4
          %s4537 = int_to_ptr.vmem [resolvable:$true] %s4536
          %4542 = dma.vmem_to_hbm [thread:$0]  %s4537, 1024, %s4535, %s4521, 128, 128, 8
        $region128: #{tpu_custom_call.1} parent=87 // pred_fallthru
          _
      $region88: #{tpu_custom_call.1} parent=5 // pred_fallthru
        _
      %p4543 = scmp.le.s32.totalorder 2, %s33
      // Predicated region
      $region129: #{tpu_custom_call.1} parent=5 // pred_check
        %p4544 = pneg %p4543
      $region130: #{tpu_custom_call.1} parent=5 // pred_check_branch
        %4546 = sbr.rel (%p4544) target = $region132
      $region131: #{tpu_custom_call.1} parent=5 // pred_region
        %s4547 = ssub.s32 %s33, 2
        // Predicated region
        $region133: #{tpu_custom_call.1} parent=131 // pred_check
          %p4548 = pneg %p438
        $region134: #{tpu_custom_call.1} parent=131 // pred_check_branch
          %4550 = sbr.rel (%p4548) target = $region136
        $region135: #{tpu_custom_call.1} parent=131 // pred_region
          %s4551 = sand.u32 %s423, 1
          %s4552 = scalar_lea.sflag [#allocation6], %s4551
          %s4553 = sand.u32 %s423, 1
          %s4554 = smul.addr %s4553, 64
          %s4555 = scalar_lea.vmem [#allocation18], %s4554
          %4556 = dma.done %s4552, 1024
        $region136: #{tpu_custom_call.1} parent=131 // pred_fallthru
          _
      $region132: #{tpu_custom_call.1} parent=5 // pred_fallthru
        _
    $region6: #{tpu_custom_call.1} parent=1 // loop_footer
      %s37 = sadd.s32 1, %s33
    $region7: #{tpu_custom_call.1} parent=1 // loop_footer_branch
      %32 = sbr.rel target = $region3
    $region8: #{tpu_custom_call.1} parent=1 // loop_exit
      _
    %4557 = vsyncpa [#allocation5], 1
    %s4558 = scalar_lea.sflag [#allocation5], 1
    %4559 = vsyncpa %s4558, 1
    %4560 = vsyncpa [#allocation8], 1
    %4561 = vsyncpa [#allocation11], 1
    %4562 = vsyncpa [#allocation14], 1
    %4563 = vsyncpa [#allocation17], 1
    %4564 = vsyncpa [#allocation6], 1
    %s4565 = scalar_lea.sflag [#allocation6], 1
    %4566 = vsyncpa %s4565, 1

</llo_original>
